<compile_context>
chip_gen: v7x
topology: tpu7x:2x2x1
jax: 0.10.0
libtpu: 0.0.40
codegen_flags: <defaults>
</compile_context>

<pallas_src>
import jax
import jax.numpy as jnp
from jax.experimental import pallas as pl
from jax.experimental.pallas import tpu as pltpu  # noqa: F401  (TPU backend)

# ---------------- model configuration (small, synthetic) ----------------
B, S, H = 2, 8, 32          # batch, sequence, hidden_size
NUM_HEADS = 4
HEAD_DIM = H // NUM_HEADS
FFN = 64
NUM_LAYERS = 2
VOCAB = 100
TYPE_VOCAB = 2
MAX_POS = 16
LN_EPS = 1e-12

# packed per-layer vector table: NVEC rows x VW lanes
NVEC = 8
VW = 3 * H                  # 96 >= FFN
assert VW >= FFN
_B_QKV, _B_O, _LN1_G, _LN1_B, _B_1, _B_2, _LN2_G, _LN2_B = range(NVEC)

# packed auxiliary table: one lane-dense (8,128) tile
#   rows [0:B)   lanes [0:S) : attention_mask
#   rows [B:2B)  lanes [0:S) : global_attention_mask
#   row  2B      lanes [0:H) : embedding-LN gamma
#   row  2B+1    lanes [0:H) : embedding-LN beta
AUX_ROWS, AUX_LANES = 8, 128
_ROW_MASK, _ROW_GMASK, _ROW_ELN_G, _ROW_ELN_B = 0, B, 2 * B, 2 * B + 1

# TODO(synk): AutoModel.from_pretrained checkpoint loading, the tokenizer and
# the Dataset/DataLoader machinery of predict_embeddings have no Pallas
# equivalent; weights are synthesized deterministically instead.
# TODO(synk): global_attention_mask only affects pooling here (no longformer
# global-attention path inside this synthetic encoder).


def _layer_norm(x, gamma, beta):
    mean = jnp.mean(x, axis=-1, keepdims=True)
    var = jnp.mean(jnp.square(x - mean), axis=-1, keepdims=True)
    return (x - mean) * jax.lax.rsqrt(var + LN_EPS) * gamma + beta


# ---------------- fused Pallas kernel (single invocation, no grid) ----------------
def make_fused_forward_kernel(pooler_type):
    # pooler_type in {'cls', 'sum', 'mean', 'local_mean'} (static)
    scale = 1.0 / (HEAD_DIM ** 0.5)

    def kernel(emb_ref, aux_ref, wqkv_ref, wo_ref, w1_ref, w2_ref, vecs_ref,
               hid_ref, pool_ref):
        # ---- unpack lane-dense aux table ----
        aux = aux_ref[...]                                   # (8, 128) f32
        mask = aux[_ROW_MASK:_ROW_MASK + B, 0:S]             # (B, S)
        gmask = aux[_ROW_GMASK:_ROW_GMASK + B, 0:S]          # (B, S)
        eln_g = aux[_ROW_ELN_G, 0:H]                         # (H,)
        eln_b = aux[_ROW_ELN_B, 0:H]

        # additive attention bias, computed ONCE and pre-broadcast over the
        # merged (head*batch) einsum batch axis
        bias = ((1.0 - mask) * (-1e9))[:, None, :]           # (B, 1, S)
        bias_bh = jnp.concatenate([bias] * NUM_HEADS, axis=0)  # (NH*B, 1, S)

        # ---- embedding layer norm; activation carried as (B*S, H) f32 ----
        x = _layer_norm(emb_ref[...].reshape(B * S, H), eln_g, eln_b)

        # ---- encoder layers, fully unrolled inside one invocation ----
        for l in range(NUM_LAYERS):
            vecs = vecs_ref[l]                               # (NVEC, VW) f32

            # fused QKV projection (bf16 matmul, f32 accumulation)
            qkv = jnp.dot(x.astype(jnp.bfloat16), wqkv_ref[l],
                          preferred_element_type=jnp.float32) + vecs[_B_QKV]

            # split heads onto a merged (head*batch) leading axis so attention
            # becomes two batched contractions + one softmax stream
            def heads(off, _qkv=qkv):
                return jnp.concatenate(
                    [_qkv[:, off + h * HEAD_DIM: off + (h + 1) * HEAD_DIM]
                     .reshape(B, S, HEAD_DIM) for h in range(NUM_HEADS)],
                    axis=0).astype(jnp.bfloat16)             # (NH*B, S, HD)

            q_bh, k_bh, v_bh = heads(0), heads(H), heads(2 * H)

            sc = jnp.einsum('bqd,bkd->bqk', q_bh, k_bh,
                            preferred_element_type=jnp.float32) * scale + bias_bh
            sc = sc - jnp.max(sc, axis=-1, keepdims=True)
            p = jnp.exp(sc)
            p = p * pl.reciprocal(jnp.sum(p, axis=-1, keepdims=True),
                                  approx=True)
            ctx_bh = jnp.einsum('bqk,bkd->bqd', p.astype(jnp.bfloat16), v_bh,
                                preferred_element_type=jnp.float32)  # (NH*B,S,HD)

            # regroup heads back onto the hidden/lane axis
            ctx = jnp.concatenate(
                [ctx_bh[h * B:(h + 1) * B] for h in range(NUM_HEADS)],
                axis=-1).reshape(B * S, H)                   # (B*S, H) f32

            attn = jnp.dot(ctx.astype(jnp.bfloat16), wo_ref[l],
                           preferred_element_type=jnp.float32) + vecs[_B_O, :H]
            x1 = _layer_norm(x + attn, vecs[_LN1_G, :H], vecs[_LN1_B, :H])

            # ---- FFN ----
            h1 = jnp.dot(x1.astype(jnp.bfloat16), w1_ref[l],
                         preferred_element_type=jnp.float32) + vecs[_B_1, :FFN]
            h1 = jax.nn.gelu(h1, approximate=True)
            ffn = jnp.dot(h1.astype(jnp.bfloat16), w2_ref[l],
                          preferred_element_type=jnp.float32) + vecs[_B_2, :H]
            x = _layer_norm(x1 + ffn, vecs[_LN2_G, :H], vecs[_LN2_B, :H])

        # ---- outputs: last hidden state + pooled embedding (written once) ----
        x3 = x.reshape(B, S, H)
        hid_ref[...] = x3
        if pooler_type == 'cls':
            pool_ref[...] = x3[:, 0, :]
        else:
            m = mask
            if pooler_type == 'local_mean':
                m = m * (1.0 - gmask)
            summed = jnp.sum(x3 * m[:, :, None], axis=1)     # (B, H)
            if pooler_type == 'sum':
                pool_ref[...] = summed
            else:
                counts = jnp.maximum(jnp.sum(m, axis=1)[:, None], 1e-9)
                pool_ref[...] = summed / counts
    return kernel


# ---------------- parameter packing (wrapper-side, plain JAX) ----------------
def pack_params(params):
    def padv(vec):
        vec = vec.reshape(-1)
        return jnp.pad(vec, (0, VW - vec.shape[0]))

    w_qkv, wo, w1, w2, vecs = [], [], [], [], []
    for p in params['layers']:
        w_qkv.append(jnp.concatenate([p['wq'], p['wk'], p['wv']], axis=1))
        wo.append(p['wo'])
        w1.append(p['w1'])
        w2.append(p['w2'])
        vecs.append(jnp.stack([
            padv(jnp.concatenate([p['bq'].reshape(-1), p['bk'].reshape(-1),
                                  p['bv'].reshape(-1)])),
            padv(p['bo']), padv(p['ln1_g']), padv(p['ln1_b']),
            padv(p['b1']), padv(p['b2']), padv(p['ln2_g']), padv(p['ln2_b']),
        ]))
    return {
        'w_qkv': jnp.stack(w_qkv).astype(jnp.bfloat16),      # (L, H, 3H)
        'wo': jnp.stack(wo).astype(jnp.bfloat16),            # (L, H, H)
        'w1': jnp.stack(w1).astype(jnp.bfloat16),            # (L, H, FFN)
        'w2': jnp.stack(w2).astype(jnp.bfloat16),            # (L, FFN, H)
        'vecs': jnp.stack(vecs),                             # (L, NVEC, VW) f32
    }


# ---------------- forward wrapper: ONE fused pallas_call ----------------
def transformer_embedder_forward(params, input_ids, attention_mask=None,
                                 token_type_ids=None, position_ids=None,
                                 global_attention_mask=None,
                                 pooler_type='mean'):
    b, s = input_ids.shape
    if attention_mask is None:
        attention_mask = jnp.ones((b, s), jnp.int32)
    if token_type_ids is None:
        token_type_ids = jnp.zeros((b, s), jnp.int32)
    if position_ids is None:
        position_ids = jnp.broadcast_to(jnp.arange(s)[None, :], (b, s))
    if global_attention_mask is None:
        global_attention_mask = jnp.zeros((b, s), jnp.float32)

    # TODO(synk): embedding-table gathers stay in plain JAX (dynamic row gather
    # of tiny tables); everything downstream is one fused pallas_call.
    emb = (params['word_emb'][input_ids]
           + params['pos_emb'][position_ids]
           + params['type_emb'][token_type_ids]).astype(jnp.float32)

    packed = pack_params(params)

    aux = jnp.zeros((AUX_ROWS, AUX_LANES), jnp.float32)
    aux = aux.at[_ROW_MASK:_ROW_MASK + B, 0:S].set(
        attention_mask.astype(jnp.float32))
    aux = aux.at[_ROW_GMASK:_ROW_GMASK + B, 0:S].set(
        global_attention_mask.astype(jnp.float32))
    aux = aux.at[_ROW_ELN_G, 0:H].set(params['emb_ln_g'].reshape(-1))
    aux = aux.at[_ROW_ELN_B, 0:H].set(params['emb_ln_b'].reshape(-1))

    hidden, pooled = pl.pallas_call(
        make_fused_forward_kernel(pooler_type),
        out_shape=(jax.ShapeDtypeStruct((B, S, H), jnp.float32),
                   jax.ShapeDtypeStruct((B, H), jnp.float32)),
    )(emb, aux, packed['w_qkv'], packed['wo'], packed['w1'], packed['w2'],
      packed['vecs'])

    return {'last_hidden_state': hidden, 'embedding': pooled}


# ---------------- deterministic parameter init ----------------
def init_params(key):
    keys = iter(jax.random.split(key, 8 + NUM_LAYERS * 8))

    def w(shape):
        return jax.random.normal(next(keys), shape, jnp.float32) * 0.02

    params = {
        'word_emb': w((VOCAB, H)),
        'pos_emb': w((MAX_POS, H)),
        'type_emb': w((TYPE_VOCAB, H)),
        'emb_ln_g': jnp.ones((1, H), jnp.float32),
        'emb_ln_b': jnp.zeros((1, H), jnp.float32),
        'layers': [],
    }
    for _ in range(NUM_LAYERS):
        params['layers'].append({
            'wq': w((H, H)), 'bq': jnp.zeros((1, H), jnp.float32),
            'wk': w((H, H)), 'bk': jnp.zeros((1, H), jnp.float32),
            'wv': w((H, H)), 'bv': jnp.zeros((1, H), jnp.float32),
            'wo': w((H, H)), 'bo': jnp.zeros((1, H), jnp.float32),
            'ln1_g': jnp.ones((1, H), jnp.float32),
            'ln1_b': jnp.zeros((1, H), jnp.float32),
            'w1': w((H, FFN)), 'b1': jnp.zeros((1, FFN), jnp.float32),
            'w2': w((FFN, H)), 'b2': jnp.zeros((1, H), jnp.float32),
            'ln2_g': jnp.ones((1, H), jnp.float32),
            'ln2_b': jnp.zeros((1, H), jnp.float32),
        })
    return params


# ---------------- pure-JAX f32 reference (sanity check) ----------------
def reference_forward(params, input_ids, attention_mask, token_type_ids,
                      position_ids, pooler_type='mean'):
    mask = attention_mask.astype(jnp.float32)
    x = (params['word_emb'][input_ids] + params['pos_emb'][position_ids]
         + params['type_emb'][token_type_ids]).astype(jnp.float32)
    x = _layer_norm(x, params['emb_ln_g'][0], params['emb_ln_b'][0])
    bias = (1.0 - mask) * (-1e9)
    for p in params['layers']:
        x2 = x.reshape(-1, H)
        q = (x2 @ p['wq'] + p['bq']).reshape(x.shape)
        k = (x2 @ p['wk'] + p['bk']).reshape(x.shape)
        v = (x2 @ p['wv'] + p['bv']).reshape(x.shape)
        ctx = []
        for h in range(NUM_HEADS):
            lo, hi = h * HEAD_DIM, (h + 1) * HEAD_DIM
            sc = jnp.einsum('bqd,bkd->bqk', q[:, :, lo:hi], k[:, :, lo:hi])
            sc = sc / (HEAD_DIM ** 0.5) + bias[:, None, :]
            p_attn = jax.nn.softmax(sc, axis=-1)
            ctx.append(jnp.einsum('bqk,bkd->bqd', p_attn, v[:, :, lo:hi]))
        ctx = jnp.concatenate(ctx, axis=-1)
        attn_out = (ctx.reshape(-1, H) @ p['wo'] + p['bo']).reshape(x.shape)
        x1 = _layer_norm(x + attn_out, p['ln1_g'][0], p['ln1_b'][0])
        h1 = jax.nn.gelu(x1.reshape(-1, H) @ p['w1'] + p['b1'], approximate=True)
        ffn = (h1 @ p['w2'] + p['b2']).reshape(x.shape)
        x = _layer_norm(x1 + ffn, p['ln2_g'][0], p['ln2_b'][0])
    summed = jnp.sum(x * mask[:, :, None], axis=1)
    pooled = summed / jnp.maximum(jnp.sum(mask, axis=1)[:, None], 1e-9)
    return {'last_hidden_state': x, 'embedding': pooled}


if __name__ == "__main__":
    key = jax.random.PRNGKey(0)
    k_param, k_ids = jax.random.split(key)
    params = init_params(k_param)

    input_ids = jax.random.randint(k_ids, (B, S), 0, VOCAB, dtype=jnp.int32)
    attention_mask = jnp.array([[1] * S, [1, 1, 1, 1, 1, 1, 0, 0]], dtype=jnp.int32)
    token_type_ids = jnp.zeros((B, S), jnp.int32)
    position_ids = jnp.broadcast_to(jnp.arange(S)[None, :], (B, S))

    out = transformer_embedder_forward(params, input_ids, attention_mask,
                                       token_type_ids, position_ids,
                                       pooler_type='mean')
    jax.block_until_ready(out)

    ref = reference_forward(params, input_ids, attention_mask,
                            token_type_ids, position_ids, pooler_type='mean')

    assert out['last_hidden_state'].shape == (B, S, H)
    assert out['embedding'].shape == (B, H)
    assert bool(jnp.all(jnp.isfinite(out['last_hidden_state'])))
    assert bool(jnp.all(jnp.isfinite(out['embedding'])))
    # bf16-matmul kernel vs. f32 reference
    assert jnp.allclose(out['last_hidden_state'], ref['last_hidden_state'],
                        rtol=5e-2, atol=5e-2)
    assert jnp.allclose(out['embedding'], ref['embedding'],
                        rtol=5e-2, atol=5e-2)

    # exercise the other poolers against the kernel's own hidden state
    hs = out['last_hidden_state']
    mask_f = attention_mask.astype(jnp.float32)
    gmask = jnp.zeros((B, S), jnp.float32).at[:, 0].set(1.0)

    out_cls = transformer_embedder_forward(params, input_ids, attention_mask,
                                           token_type_ids, position_ids,
                                           pooler_type='cls')
    assert jnp.allclose(out_cls['embedding'], hs[:, 0, :], rtol=1e-4, atol=1e-4)

    out_sum = transformer_embedder_forward(params, input_ids, attention_mask,
                                           token_type_ids, position_ids,
                                           pooler_type='sum')
    ref_sum = jnp.sum(hs * mask_f[:, :, None], axis=1)
    assert jnp.allclose(out_sum['embedding'], ref_sum, rtol=1e-3, atol=1e-3)

    out_lm = transformer_embedder_forward(params, input_ids, attention_mask,
                                          token_type_ids, position_ids,
                                          global_attention_mask=gmask,
                                          pooler_type='local_mean')
    m = mask_f * (1.0 - gmask)
    ref_lm = jnp.sum(hs * m[:, :, None], axis=1) / jnp.maximum(
        jnp.sum(m, axis=1)[:, None], 1e-9)
    assert jnp.allclose(out_lm['embedding'], ref_lm, rtol=1e-2, atol=1e-2)

    print("KERNEL_OK")
</pallas_src>

<mosaic_0001>
module attributes {stable_mosaic.version = 11 : i64} {
  func.func @kernel(%arg0: memref<2x8x32xf32, #tpu.memory_space<vmem>>, %arg1: memref<8x128xf32, #tpu.memory_space<vmem>>, %arg2: memref<2x32x96xbf16, #tpu.memory_space<vmem>>, %arg3: memref<2x32x32xbf16, #tpu.memory_space<vmem>>, %arg4: memref<2x32x64xbf16, #tpu.memory_space<vmem>>, %arg5: memref<2x64x32xbf16, #tpu.memory_space<vmem>>, %arg6: memref<2x8x96xf32, #tpu.memory_space<vmem>>, %arg7: memref<2x8x32xf32, #tpu.memory_space<vmem>>, %arg8: memref<2x32xf32, #tpu.memory_space<vmem>>) attributes {dimension_semantics = [], scalar_prefetch = 0 : i64, scratch_operands = 0 : i64, tpu.core_type = #tpu.core_type<tc>} {
    %c0 = arith.constant 0 : index
    %c0_0 = arith.constant 0 : index
    %0 = vector.load %arg1[%c0, %c0_0] : memref<8x128xf32, #tpu.memory_space<vmem>>, vector<8x128xf32>
    %1 = vector.extract_strided_slice %0 {offsets = [0, 0], sizes = [2, 8], strides = [1, 1]} : vector<8x128xf32> to vector<2x8xf32>
    %2 = vector.extract_strided_slice %0 {offsets = [4, 0], sizes = [1, 32], strides = [1, 1]} : vector<8x128xf32> to vector<1x32xf32>
    %3 = vector.shape_cast %2 : vector<1x32xf32> to vector<32xf32>
    %4 = vector.extract_strided_slice %0 {offsets = [5, 0], sizes = [1, 32], strides = [1, 1]} : vector<8x128xf32> to vector<1x32xf32>
    %5 = vector.shape_cast %4 : vector<1x32xf32> to vector<32xf32>
    %cst = arith.constant 1.000000e+00 : f32
    %6 = vector.broadcast %cst : f32 to vector<2x8xf32>
    %7 = arith.subf %6, %1 : vector<2x8xf32>
    %cst_1 = arith.constant -1.000000e+09 : f32
    %8 = vector.broadcast %cst_1 : f32 to vector<2x8xf32>
    %9 = arith.mulf %7, %8 : vector<2x8xf32>
    %10 = vector.shape_cast %9 : vector<2x8xf32> to vector<2x1x8xf32>
    %11 = tpu.concatenate %10, %10, %10, %10 in 0 : vector<2x1x8xf32>, vector<2x1x8xf32>, vector<2x1x8xf32>, vector<2x1x8xf32> -> vector<8x1x8xf32>
    %c0_2 = arith.constant 0 : index
    %c0_3 = arith.constant 0 : index
    %c0_4 = arith.constant 0 : index
    %12 = vector.load %arg0[%c0_2, %c0_3, %c0_4] : memref<2x8x32xf32, #tpu.memory_space<vmem>>, vector<2x8x32xf32>
    %13 = vector.shape_cast %12 : vector<2x8x32xf32> to vector<16x32xf32>
    %cst_5 = arith.constant dense<0.000000e+00> : vector<16xf32>
    %14 = vector.multi_reduction <add>, %13, %cst_5 [1] : vector<16x32xf32> to vector<16xf32>
    %15 = vector.shape_cast %14 : vector<16xf32> to vector<16x1xf32>
    %cst_6 = arith.constant 3.200000e+01 : f32
    %16 = vector.broadcast %cst_6 : f32 to vector<16x1xf32>
    %17 = arith.divf %15, %16 : vector<16x1xf32>
    %18 = vector.broadcast %17 : vector<16x1xf32> to vector<16x32xf32>
    %19 = arith.subf %13, %18 : vector<16x32xf32>
    %20 = arith.mulf %19, %19 : vector<16x32xf32>
    %cst_7 = arith.constant dense<0.000000e+00> : vector<16xf32>
    %21 = vector.multi_reduction <add>, %20, %cst_7 [1] : vector<16x32xf32> to vector<16xf32>
    %22 = vector.shape_cast %21 : vector<16xf32> to vector<16x1xf32>
    %cst_8 = arith.constant 3.200000e+01 : f32
    %23 = vector.broadcast %cst_8 : f32 to vector<16x1xf32>
    %24 = arith.divf %22, %23 : vector<16x1xf32>
    %25 = vector.broadcast %17 : vector<16x1xf32> to vector<16x32xf32>
    %26 = arith.subf %13, %25 : vector<16x32xf32>
    %cst_9 = arith.constant 9.99999996E-13 : f32
    %27 = vector.broadcast %cst_9 : f32 to vector<16x1xf32>
    %28 = arith.addf %24, %27 : vector<16x1xf32>
    %29 = math.rsqrt %28 : vector<16x1xf32>
    %30 = vector.broadcast %29 : vector<16x1xf32> to vector<16x32xf32>
    %31 = arith.mulf %26, %30 : vector<16x32xf32>
    %32 = vector.shape_cast %3 : vector<32xf32> to vector<1x32xf32>
    %33 = vector.broadcast %32 : vector<1x32xf32> to vector<16x32xf32>
    %34 = arith.mulf %31, %33 : vector<16x32xf32>
    %35 = vector.shape_cast %5 : vector<32xf32> to vector<1x32xf32>
    %36 = vector.broadcast %35 : vector<1x32xf32> to vector<16x32xf32>
    %37 = arith.addf %34, %36 : vector<16x32xf32>
    %c0_10 = arith.constant 0 : index
    %c0_11 = arith.constant 0 : index
    %c0_12 = arith.constant 0 : index
    %38 = vector.load %arg6[%c0_10, %c0_11, %c0_12] : memref<2x8x96xf32, #tpu.memory_space<vmem>>, vector<1x8x96xf32>
    %39 = vector.shape_cast %38 : vector<1x8x96xf32> to vector<8x96xf32>
    %40 = arith.truncf %37 : vector<16x32xf32> to vector<16x32xbf16>
    %c0_13 = arith.constant 0 : index
    %c0_14 = arith.constant 0 : index
    %c0_15 = arith.constant 0 : index
    %41 = vector.load %arg2[%c0_13, %c0_14, %c0_15] : memref<2x32x96xbf16, #tpu.memory_space<vmem>>, vector<1x32x96xbf16>
    %42 = vector.shape_cast %41 : vector<1x32x96xbf16> to vector<32x96xbf16>
    %cst_16 = arith.constant dense<0.000000e+00> : vector<16x96xf32>
    %43 = tpu.matmul %40, %42, %cst_16 {dimension_numbers = #tpu.dot_dimension_numbers<[1], [0], [0], [1], [0, 0, 1, 1], [], []>} : vector<16x32xbf16>, vector<32x96xbf16>, vector<16x96xf32> -> vector<16x96xf32>
    %44 = vector.extract_strided_slice %39 {offsets = [0, 0], sizes = [1, 96], strides = [1, 1]} : vector<8x96xf32> to vector<1x96xf32>
    %45 = vector.shape_cast %44 : vector<1x96xf32> to vector<96xf32>
    %46 = vector.shape_cast %45 : vector<96xf32> to vector<1x96xf32>
    %47 = vector.broadcast %46 : vector<1x96xf32> to vector<16x96xf32>
    %48 = arith.addf %43, %47 : vector<16x96xf32>
    %49 = vector.extract_strided_slice %48 {offsets = [0, 0], sizes = [16, 8], strides = [1, 1]} : vector<16x96xf32> to vector<16x8xf32>
    %50 = vector.shape_cast %49 : vector<16x8xf32> to vector<2x8x8xf32>
    %51 = vector.extract_strided_slice %48 {offsets = [0, 8], sizes = [16, 8], strides = [1, 1]} : vector<16x96xf32> to vector<16x8xf32>
    %52 = vector.shape_cast %51 : vector<16x8xf32> to vector<2x8x8xf32>
    %53 = vector.extract_strided_slice %48 {offsets = [0, 16], sizes = [16, 8], strides = [1, 1]} : vector<16x96xf32> to vector<16x8xf32>
    %54 = vector.shape_cast %53 : vector<16x8xf32> to vector<2x8x8xf32>
    %55 = vector.extract_strided_slice %48 {offsets = [0, 24], sizes = [16, 8], strides = [1, 1]} : vector<16x96xf32> to vector<16x8xf32>
    %56 = vector.shape_cast %55 : vector<16x8xf32> to vector<2x8x8xf32>
    %57 = tpu.concatenate %50, %52, %54, %56 in 0 : vector<2x8x8xf32>, vector<2x8x8xf32>, vector<2x8x8xf32>, vector<2x8x8xf32> -> vector<8x8x8xf32>
    %58 = arith.truncf %57 : vector<8x8x8xf32> to vector<8x8x8xbf16>
    %59 = vector.extract_strided_slice %48 {offsets = [0, 32], sizes = [16, 8], strides = [1, 1]} : vector<16x96xf32> to vector<16x8xf32>
    %60 = vector.shape_cast %59 : vector<16x8xf32> to vector<2x8x8xf32>
    %61 = vector.extract_strided_slice %48 {offsets = [0, 40], sizes = [16, 8], strides = [1, 1]} : vector<16x96xf32> to vector<16x8xf32>
    %62 = vector.shape_cast %61 : vector<16x8xf32> to vector<2x8x8xf32>
    %63 = vector.extract_strided_slice %48 {offsets = [0, 48], sizes = [16, 8], strides = [1, 1]} : vector<16x96xf32> to vector<16x8xf32>
    %64 = vector.shape_cast %63 : vector<16x8xf32> to vector<2x8x8xf32>
    %65 = vector.extract_strided_slice %48 {offsets = [0, 56], sizes = [16, 8], strides = [1, 1]} : vector<16x96xf32> to vector<16x8xf32>
    %66 = vector.shape_cast %65 : vector<16x8xf32> to vector<2x8x8xf32>
    %67 = tpu.concatenate %60, %62, %64, %66 in 0 : vector<2x8x8xf32>, vector<2x8x8xf32>, vector<2x8x8xf32>, vector<2x8x8xf32> -> vector<8x8x8xf32>
    %68 = arith.truncf %67 : vector<8x8x8xf32> to vector<8x8x8xbf16>
    %69 = vector.extract_strided_slice %48 {offsets = [0, 64], sizes = [16, 8], strides = [1, 1]} : vector<16x96xf32> to vector<16x8xf32>
    %70 = vector.shape_cast %69 : vector<16x8xf32> to vector<2x8x8xf32>
    %71 = vector.extract_strided_slice %48 {offsets = [0, 72], sizes = [16, 8], strides = [1, 1]} : vector<16x96xf32> to vector<16x8xf32>
    %72 = vector.shape_cast %71 : vector<16x8xf32> to vector<2x8x8xf32>
    %73 = vector.extract_strided_slice %48 {offsets = [0, 80], sizes = [16, 8], strides = [1, 1]} : vector<16x96xf32> to vector<16x8xf32>
    %74 = vector.shape_cast %73 : vector<16x8xf32> to vector<2x8x8xf32>
    %75 = vector.extract_strided_slice %48 {offsets = [0, 88], sizes = [16, 8], strides = [1, 1]} : vector<16x96xf32> to vector<16x8xf32>
    %76 = vector.shape_cast %75 : vector<16x8xf32> to vector<2x8x8xf32>
    %77 = tpu.concatenate %70, %72, %74, %76 in 0 : vector<2x8x8xf32>, vector<2x8x8xf32>, vector<2x8x8xf32>, vector<2x8x8xf32> -> vector<8x8x8xf32>
    %78 = arith.truncf %77 : vector<8x8x8xf32> to vector<8x8x8xbf16>
    "tpu.trace_start"() <{level = 10 : i32, message = "bqd,bkd->bqk"}> : () -> ()
    %cst_17 = arith.constant dense<0.000000e+00> : vector<8x8x8xf32>
    %79 = tpu.matmul %58, %68, %cst_17 {dimension_numbers = #tpu.dot_dimension_numbers<[2], [2], [1], [1], [0, 0, 0, 1, 1, 1], [0], [0]>} : vector<8x8x8xbf16>, vector<8x8x8xbf16>, vector<8x8x8xf32> -> vector<8x8x8xf32>
    "tpu.trace_stop"() : () -> ()
    %cst_18 = arith.constant 0.353553385 : f32
    %80 = vector.broadcast %cst_18 : f32 to vector<8x8x8xf32>
    %81 = arith.mulf %79, %80 : vector<8x8x8xf32>
    %82 = vector.broadcast %11 : vector<8x1x8xf32> to vector<8x8x8xf32>
    %83 = arith.addf %81, %82 : vector<8x8x8xf32>
    %cst_19 = arith.constant dense<0xFF800000> : vector<8x8xf32>
    %84 = vector.multi_reduction <maximumf>, %83, %cst_19 [2] : vector<8x8x8xf32> to vector<8x8xf32>
    %85 = vector.shape_cast %84 : vector<8x8xf32> to vector<8x8x1xf32>
    %86 = vector.broadcast %85 : vector<8x8x1xf32> to vector<8x8x8xf32>
    %87 = arith.subf %83, %86 : vector<8x8x8xf32>
    %88 = math.exp %87 : vector<8x8x8xf32>
    %cst_20 = arith.constant dense<0.000000e+00> : vector<8x8xf32>
    %89 = vector.multi_reduction <add>, %88, %cst_20 [2] : vector<8x8x8xf32> to vector<8x8xf32>
    %90 = vector.shape_cast %89 : vector<8x8xf32> to vector<8x8x1xf32>
    %91 = tpu.reciprocal %90 {approx = true} : vector<8x8x1xf32> -> vector<8x8x1xf32>
    %92 = vector.broadcast %91 : vector<8x8x1xf32> to vector<8x8x8xf32>
    %93 = arith.mulf %88, %92 : vector<8x8x8xf32>
    %94 = arith.truncf %93 : vector<8x8x8xf32> to vector<8x8x8xbf16>
    "tpu.trace_start"() <{level = 10 : i32, message = "bqk,bkd->bqd"}> : () -> ()
    %cst_21 = arith.constant dense<0.000000e+00> : vector<8x8x8xf32>
    %95 = tpu.matmul %94, %78, %cst_21 {dimension_numbers = #tpu.dot_dimension_numbers<[2], [1], [1], [2], [0, 0, 0, 1, 1, 2], [0], [0]>} : vector<8x8x8xbf16>, vector<8x8x8xbf16>, vector<8x8x8xf32> -> vector<8x8x8xf32>
    "tpu.trace_stop"() : () -> ()
    %96 = vector.extract_strided_slice %95 {offsets = [0, 0, 0], sizes = [2, 8, 8], strides = [1, 1, 1]} : vector<8x8x8xf32> to vector<2x8x8xf32>
    %97 = vector.extract_strided_slice %95 {offsets = [2, 0, 0], sizes = [2, 8, 8], strides = [1, 1, 1]} : vector<8x8x8xf32> to vector<2x8x8xf32>
    %98 = vector.extract_strided_slice %95 {offsets = [4, 0, 0], sizes = [2, 8, 8], strides = [1, 1, 1]} : vector<8x8x8xf32> to vector<2x8x8xf32>
    %99 = vector.extract_strided_slice %95 {offsets = [6, 0, 0], sizes = [2, 8, 8], strides = [1, 1, 1]} : vector<8x8x8xf32> to vector<2x8x8xf32>
    %100 = tpu.concatenate %96, %97, %98, %99 in 2 : vector<2x8x8xf32>, vector<2x8x8xf32>, vector<2x8x8xf32>, vector<2x8x8xf32> -> vector<2x8x32xf32>
    %101 = vector.shape_cast %100 : vector<2x8x32xf32> to vector<16x32xf32>
    %102 = arith.truncf %101 : vector<16x32xf32> to vector<16x32xbf16>
    %c0_22 = arith.constant 0 : index
    %c0_23 = arith.constant 0 : index
    %c0_24 = arith.constant 0 : index
    %103 = vector.load %arg3[%c0_22, %c0_23, %c0_24] : memref<2x32x32xbf16, #tpu.memory_space<vmem>>, vector<1x32x32xbf16>
    %104 = vector.shape_cast %103 : vector<1x32x32xbf16> to vector<32x32xbf16>
    %cst_25 = arith.constant dense<0.000000e+00> : vector<16x32xf32>
    %105 = tpu.matmul %102, %104, %cst_25 {dimension_numbers = #tpu.dot_dimension_numbers<[1], [0], [0], [1], [0, 0, 1, 1], [], []>} : vector<16x32xbf16>, vector<32x32xbf16>, vector<16x32xf32> -> vector<16x32xf32>
    %106 = vector.extract_strided_slice %39 {offsets = [1, 0], sizes = [1, 32], strides = [1, 1]} : vector<8x96xf32> to vector<1x32xf32>
    %107 = vector.shape_cast %106 : vector<1x32xf32> to vector<32xf32>
    %108 = vector.shape_cast %107 : vector<32xf32> to vector<1x32xf32>
    %109 = vector.broadcast %108 : vector<1x32xf32> to vector<16x32xf32>
    %110 = arith.addf %105, %109 : vector<16x32xf32>
    %111 = arith.addf %37, %110 : vector<16x32xf32>
    %112 = vector.extract_strided_slice %39 {offsets = [2, 0], sizes = [1, 32], strides = [1, 1]} : vector<8x96xf32> to vector<1x32xf32>
    %113 = vector.shape_cast %112 : vector<1x32xf32> to vector<32xf32>
    %114 = vector.extract_strided_slice %39 {offsets = [3, 0], sizes = [1, 32], strides = [1, 1]} : vector<8x96xf32> to vector<1x32xf32>
    %115 = vector.shape_cast %114 : vector<1x32xf32> to vector<32xf32>
    %cst_26 = arith.constant dense<0.000000e+00> : vector<16xf32>
    %116 = vector.multi_reduction <add>, %111, %cst_26 [1] : vector<16x32xf32> to vector<16xf32>
    %117 = vector.shape_cast %116 : vector<16xf32> to vector<16x1xf32>
    %cst_27 = arith.constant 3.200000e+01 : f32
    %118 = vector.broadcast %cst_27 : f32 to vector<16x1xf32>
    %119 = arith.divf %117, %118 : vector<16x1xf32>
    %120 = vector.broadcast %119 : vector<16x1xf32> to vector<16x32xf32>
    %121 = arith.subf %111, %120 : vector<16x32xf32>
    %122 = arith.mulf %121, %121 : vector<16x32xf32>
    %cst_28 = arith.constant dense<0.000000e+00> : vector<16xf32>
    %123 = vector.multi_reduction <add>, %122, %cst_28 [1] : vector<16x32xf32> to vector<16xf32>
    %124 = vector.shape_cast %123 : vector<16xf32> to vector<16x1xf32>
    %cst_29 = arith.constant 3.200000e+01 : f32
    %125 = vector.broadcast %cst_29 : f32 to vector<16x1xf32>
    %126 = arith.divf %124, %125 : vector<16x1xf32>
    %127 = vector.broadcast %119 : vector<16x1xf32> to vector<16x32xf32>
    %128 = arith.subf %111, %127 : vector<16x32xf32>
    %cst_30 = arith.constant 9.99999996E-13 : f32
    %129 = vector.broadcast %cst_30 : f32 to vector<16x1xf32>
    %130 = arith.addf %126, %129 : vector<16x1xf32>
    %131 = math.rsqrt %130 : vector<16x1xf32>
    %132 = vector.broadcast %131 : vector<16x1xf32> to vector<16x32xf32>
    %133 = arith.mulf %128, %132 : vector<16x32xf32>
    %134 = vector.shape_cast %113 : vector<32xf32> to vector<1x32xf32>
    %135 = vector.broadcast %134 : vector<1x32xf32> to vector<16x32xf32>
    %136 = arith.mulf %133, %135 : vector<16x32xf32>
    %137 = vector.shape_cast %115 : vector<32xf32> to vector<1x32xf32>
    %138 = vector.broadcast %137 : vector<1x32xf32> to vector<16x32xf32>
    %139 = arith.addf %136, %138 : vector<16x32xf32>
    %140 = arith.truncf %139 : vector<16x32xf32> to vector<16x32xbf16>
    %c0_31 = arith.constant 0 : index
    %c0_32 = arith.constant 0 : index
    %c0_33 = arith.constant 0 : index
    %141 = vector.load %arg4[%c0_31, %c0_32, %c0_33] : memref<2x32x64xbf16, #tpu.memory_space<vmem>>, vector<1x32x64xbf16>
    %142 = vector.shape_cast %141 : vector<1x32x64xbf16> to vector<32x64xbf16>
    %cst_34 = arith.constant dense<0.000000e+00> : vector<16x64xf32>
    %143 = tpu.matmul %140, %142, %cst_34 {dimension_numbers = #tpu.dot_dimension_numbers<[1], [0], [0], [1], [0, 0, 1, 1], [], []>} : vector<16x32xbf16>, vector<32x64xbf16>, vector<16x64xf32> -> vector<16x64xf32>
    %144 = vector.extract_strided_slice %39 {offsets = [4, 0], sizes = [1, 64], strides = [1, 1]} : vector<8x96xf32> to vector<1x64xf32>
    %145 = vector.shape_cast %144 : vector<1x64xf32> to vector<64xf32>
    %146 = vector.shape_cast %145 : vector<64xf32> to vector<1x64xf32>
    %147 = vector.broadcast %146 : vector<1x64xf32> to vector<16x64xf32>
    %148 = arith.addf %143, %147 : vector<16x64xf32>
    %149 = arith.mulf %148, %148 : vector<16x64xf32>
    %150 = arith.mulf %148, %149 : vector<16x64xf32>
    %cst_35 = arith.constant 4.471500e-02 : f32
    %151 = vector.broadcast %cst_35 : f32 to vector<16x64xf32>
    %152 = arith.mulf %151, %150 : vector<16x64xf32>
    %153 = arith.addf %148, %152 : vector<16x64xf32>
    %cst_36 = arith.constant 0.797884583 : f32
    %154 = vector.broadcast %cst_36 : f32 to vector<16x64xf32>
    %155 = arith.mulf %154, %153 : vector<16x64xf32>
    %156 = math.tanh %155 : vector<16x64xf32>
    %cst_37 = arith.constant 1.000000e+00 : f32
    %157 = vector.broadcast %cst_37 : f32 to vector<16x64xf32>
    %158 = arith.addf %157, %156 : vector<16x64xf32>
    %cst_38 = arith.constant 5.000000e-01 : f32
    %159 = vector.broadcast %cst_38 : f32 to vector<16x64xf32>
    %160 = arith.mulf %159, %158 : vector<16x64xf32>
    %161 = arith.mulf %148, %160 : vector<16x64xf32>
    %162 = arith.truncf %161 : vector<16x64xf32> to vector<16x64xbf16>
    %c0_39 = arith.constant 0 : index
    %c0_40 = arith.constant 0 : index
    %c0_41 = arith.constant 0 : index
    %163 = vector.load %arg5[%c0_39, %c0_40, %c0_41] : memref<2x64x32xbf16, #tpu.memory_space<vmem>>, vector<1x64x32xbf16>
    %164 = vector.shape_cast %163 : vector<1x64x32xbf16> to vector<64x32xbf16>
    %cst_42 = arith.constant dense<0.000000e+00> : vector<16x32xf32>
    %165 = tpu.matmul %162, %164, %cst_42 {dimension_numbers = #tpu.dot_dimension_numbers<[1], [0], [0], [1], [0, 0, 1, 1], [], []>} : vector<16x64xbf16>, vector<64x32xbf16>, vector<16x32xf32> -> vector<16x32xf32>
    %166 = vector.extract_strided_slice %39 {offsets = [5, 0], sizes = [1, 32], strides = [1, 1]} : vector<8x96xf32> to vector<1x32xf32>
    %167 = vector.shape_cast %166 : vector<1x32xf32> to vector<32xf32>
    %168 = vector.shape_cast %167 : vector<32xf32> to vector<1x32xf32>
    %169 = vector.broadcast %168 : vector<1x32xf32> to vector<16x32xf32>
    %170 = arith.addf %165, %169 : vector<16x32xf32>
    %171 = arith.addf %139, %170 : vector<16x32xf32>
    %172 = vector.extract_strided_slice %39 {offsets = [6, 0], sizes = [1, 32], strides = [1, 1]} : vector<8x96xf32> to vector<1x32xf32>
    %173 = vector.shape_cast %172 : vector<1x32xf32> to vector<32xf32>
    %174 = vector.extract_strided_slice %39 {offsets = [7, 0], sizes = [1, 32], strides = [1, 1]} : vector<8x96xf32> to vector<1x32xf32>
    %175 = vector.shape_cast %174 : vector<1x32xf32> to vector<32xf32>
    %cst_43 = arith.constant dense<0.000000e+00> : vector<16xf32>
    %176 = vector.multi_reduction <add>, %171, %cst_43 [1] : vector<16x32xf32> to vector<16xf32>
    %177 = vector.shape_cast %176 : vector<16xf32> to vector<16x1xf32>
    %cst_44 = arith.constant 3.200000e+01 : f32
    %178 = vector.broadcast %cst_44 : f32 to vector<16x1xf32>
    %179 = arith.divf %177, %178 : vector<16x1xf32>
    %180 = vector.broadcast %179 : vector<16x1xf32> to vector<16x32xf32>
    %181 = arith.subf %171, %180 : vector<16x32xf32>
    %182 = arith.mulf %181, %181 : vector<16x32xf32>
    %cst_45 = arith.constant dense<0.000000e+00> : vector<16xf32>
    %183 = vector.multi_reduction <add>, %182, %cst_45 [1] : vector<16x32xf32> to vector<16xf32>
    %184 = vector.shape_cast %183 : vector<16xf32> to vector<16x1xf32>
    %cst_46 = arith.constant 3.200000e+01 : f32
    %185 = vector.broadcast %cst_46 : f32 to vector<16x1xf32>
    %186 = arith.divf %184, %185 : vector<16x1xf32>
    %187 = vector.broadcast %179 : vector<16x1xf32> to vector<16x32xf32>
    %188 = arith.subf %171, %187 : vector<16x32xf32>
    %cst_47 = arith.constant 9.99999996E-13 : f32
    %189 = vector.broadcast %cst_47 : f32 to vector<16x1xf32>
    %190 = arith.addf %186, %189 : vector<16x1xf32>
    %191 = math.rsqrt %190 : vector<16x1xf32>
    %192 = vector.broadcast %191 : vector<16x1xf32> to vector<16x32xf32>
    %193 = arith.mulf %188, %192 : vector<16x32xf32>
    %194 = vector.shape_cast %173 : vector<32xf32> to vector<1x32xf32>
    %195 = vector.broadcast %194 : vector<1x32xf32> to vector<16x32xf32>
    %196 = arith.mulf %193, %195 : vector<16x32xf32>
    %197 = vector.shape_cast %175 : vector<32xf32> to vector<1x32xf32>
    %198 = vector.broadcast %197 : vector<1x32xf32> to vector<16x32xf32>
    %199 = arith.addf %196, %198 : vector<16x32xf32>
    %c1 = arith.constant 1 : index
    %c0_48 = arith.constant 0 : index
    %c0_49 = arith.constant 0 : index
    %200 = vector.load %arg6[%c1, %c0_48, %c0_49] : memref<2x8x96xf32, #tpu.memory_space<vmem>>, vector<1x8x96xf32>
    %201 = vector.shape_cast %200 : vector<1x8x96xf32> to vector<8x96xf32>
    %202 = arith.truncf %199 : vector<16x32xf32> to vector<16x32xbf16>
    %c1_50 = arith.constant 1 : index
    %c0_51 = arith.constant 0 : index
    %c0_52 = arith.constant 0 : index
    %203 = vector.load %arg2[%c1_50, %c0_51, %c0_52] : memref<2x32x96xbf16, #tpu.memory_space<vmem>>, vector<1x32x96xbf16>
    %204 = vector.shape_cast %203 : vector<1x32x96xbf16> to vector<32x96xbf16>
    %cst_53 = arith.constant dense<0.000000e+00> : vector<16x96xf32>
    %205 = tpu.matmul %202, %204, %cst_53 {dimension_numbers = #tpu.dot_dimension_numbers<[1], [0], [0], [1], [0, 0, 1, 1], [], []>} : vector<16x32xbf16>, vector<32x96xbf16>, vector<16x96xf32> -> vector<16x96xf32>
    %206 = vector.extract_strided_slice %201 {offsets = [0, 0], sizes = [1, 96], strides = [1, 1]} : vector<8x96xf32> to vector<1x96xf32>
    %207 = vector.shape_cast %206 : vector<1x96xf32> to vector<96xf32>
    %208 = vector.shape_cast %207 : vector<96xf32> to vector<1x96xf32>
    %209 = vector.broadcast %208 : vector<1x96xf32> to vector<16x96xf32>
    %210 = arith.addf %205, %209 : vector<16x96xf32>
    %211 = vector.extract_strided_slice %210 {offsets = [0, 0], sizes = [16, 8], strides = [1, 1]} : vector<16x96xf32> to vector<16x8xf32>
    %212 = vector.shape_cast %211 : vector<16x8xf32> to vector<2x8x8xf32>
    %213 = vector.extract_strided_slice %210 {offsets = [0, 8], sizes = [16, 8], strides = [1, 1]} : vector<16x96xf32> to vector<16x8xf32>
    %214 = vector.shape_cast %213 : vector<16x8xf32> to vector<2x8x8xf32>
    %215 = vector.extract_strided_slice %210 {offsets = [0, 16], sizes = [16, 8], strides = [1, 1]} : vector<16x96xf32> to vector<16x8xf32>
    %216 = vector.shape_cast %215 : vector<16x8xf32> to vector<2x8x8xf32>
    %217 = vector.extract_strided_slice %210 {offsets = [0, 24], sizes = [16, 8], strides = [1, 1]} : vector<16x96xf32> to vector<16x8xf32>
    %218 = vector.shape_cast %217 : vector<16x8xf32> to vector<2x8x8xf32>
    %219 = tpu.concatenate %212, %214, %216, %218 in 0 : vector<2x8x8xf32>, vector<2x8x8xf32>, vector<2x8x8xf32>, vector<2x8x8xf32> -> vector<8x8x8xf32>
    %220 = arith.truncf %219 : vector<8x8x8xf32> to vector<8x8x8xbf16>
    %221 = vector.extract_strided_slice %210 {offsets = [0, 32], sizes = [16, 8], strides = [1, 1]} : vector<16x96xf32> to vector<16x8xf32>
    %222 = vector.shape_cast %221 : vector<16x8xf32> to vector<2x8x8xf32>
    %223 = vector.extract_strided_slice %210 {offsets = [0, 40], sizes = [16, 8], strides = [1, 1]} : vector<16x96xf32> to vector<16x8xf32>
    %224 = vector.shape_cast %223 : vector<16x8xf32> to vector<2x8x8xf32>
    %225 = vector.extract_strided_slice %210 {offsets = [0, 48], sizes = [16, 8], strides = [1, 1]} : vector<16x96xf32> to vector<16x8xf32>
    %226 = vector.shape_cast %225 : vector<16x8xf32> to vector<2x8x8xf32>
    %227 = vector.extract_strided_slice %210 {offsets = [0, 56], sizes = [16, 8], strides = [1, 1]} : vector<16x96xf32> to vector<16x8xf32>
    %228 = vector.shape_cast %227 : vector<16x8xf32> to vector<2x8x8xf32>
    %229 = tpu.concatenate %222, %224, %226, %228 in 0 : vector<2x8x8xf32>, vector<2x8x8xf32>, vector<2x8x8xf32>, vector<2x8x8xf32> -> vector<8x8x8xf32>
    %230 = arith.truncf %229 : vector<8x8x8xf32> to vector<8x8x8xbf16>
    %231 = vector.extract_strided_slice %210 {offsets = [0, 64], sizes = [16, 8], strides = [1, 1]} : vector<16x96xf32> to vector<16x8xf32>
    %232 = vector.shape_cast %231 : vector<16x8xf32> to vector<2x8x8xf32>
    %233 = vector.extract_strided_slice %210 {offsets = [0, 72], sizes = [16, 8], strides = [1, 1]} : vector<16x96xf32> to vector<16x8xf32>
    %234 = vector.shape_cast %233 : vector<16x8xf32> to vector<2x8x8xf32>
    %235 = vector.extract_strided_slice %210 {offsets = [0, 80], sizes = [16, 8], strides = [1, 1]} : vector<16x96xf32> to vector<16x8xf32>
    %236 = vector.shape_cast %235 : vector<16x8xf32> to vector<2x8x8xf32>
    %237 = vector.extract_strided_slice %210 {offsets = [0, 88], sizes = [16, 8], strides = [1, 1]} : vector<16x96xf32> to vector<16x8xf32>
    %238 = vector.shape_cast %237 : vector<16x8xf32> to vector<2x8x8xf32>
    %239 = tpu.concatenate %232, %234, %236, %238 in 0 : vector<2x8x8xf32>, vector<2x8x8xf32>, vector<2x8x8xf32>, vector<2x8x8xf32> -> vector<8x8x8xf32>
    %240 = arith.truncf %239 : vector<8x8x8xf32> to vector<8x8x8xbf16>
    "tpu.trace_start"() <{level = 10 : i32, message = "bqd,bkd->bqk"}> : () -> ()
    %cst_54 = arith.constant dense<0.000000e+00> : vector<8x8x8xf32>
    %241 = tpu.matmul %220, %230, %cst_54 {dimension_numbers = #tpu.dot_dimension_numbers<[2], [2], [1], [1], [0, 0, 0, 1, 1, 1], [0], [0]>} : vector<8x8x8xbf16>, vector<8x8x8xbf16>, vector<8x8x8xf32> -> vector<8x8x8xf32>
    "tpu.trace_stop"() : () -> ()
    %cst_55 = arith.constant 0.353553385 : f32
    %242 = vector.broadcast %cst_55 : f32 to vector<8x8x8xf32>
    %243 = arith.mulf %241, %242 : vector<8x8x8xf32>
    %244 = vector.broadcast %11 : vector<8x1x8xf32> to vector<8x8x8xf32>
    %245 = arith.addf %243, %244 : vector<8x8x8xf32>
    %cst_56 = arith.constant dense<0xFF800000> : vector<8x8xf32>
    %246 = vector.multi_reduction <maximumf>, %245, %cst_56 [2] : vector<8x8x8xf32> to vector<8x8xf32>
    %247 = vector.shape_cast %246 : vector<8x8xf32> to vector<8x8x1xf32>
    %248 = vector.broadcast %247 : vector<8x8x1xf32> to vector<8x8x8xf32>
    %249 = arith.subf %245, %248 : vector<8x8x8xf32>
    %250 = math.exp %249 : vector<8x8x8xf32>
    %cst_57 = arith.constant dense<0.000000e+00> : vector<8x8xf32>
    %251 = vector.multi_reduction <add>, %250, %cst_57 [2] : vector<8x8x8xf32> to vector<8x8xf32>
    %252 = vector.shape_cast %251 : vector<8x8xf32> to vector<8x8x1xf32>
    %253 = tpu.reciprocal %252 {approx = true} : vector<8x8x1xf32> -> vector<8x8x1xf32>
    %254 = vector.broadcast %253 : vector<8x8x1xf32> to vector<8x8x8xf32>
    %255 = arith.mulf %250, %254 : vector<8x8x8xf32>
    %256 = arith.truncf %255 : vector<8x8x8xf32> to vector<8x8x8xbf16>
    "tpu.trace_start"() <{level = 10 : i32, message = "bqk,bkd->bqd"}> : () -> ()
    %cst_58 = arith.constant dense<0.000000e+00> : vector<8x8x8xf32>
    %257 = tpu.matmul %256, %240, %cst_58 {dimension_numbers = #tpu.dot_dimension_numbers<[2], [1], [1], [2], [0, 0, 0, 1, 1, 2], [0], [0]>} : vector<8x8x8xbf16>, vector<8x8x8xbf16>, vector<8x8x8xf32> -> vector<8x8x8xf32>
    "tpu.trace_stop"() : () -> ()
    %258 = vector.extract_strided_slice %257 {offsets = [0, 0, 0], sizes = [2, 8, 8], strides = [1, 1, 1]} : vector<8x8x8xf32> to vector<2x8x8xf32>
    %259 = vector.extract_strided_slice %257 {offsets = [2, 0, 0], sizes = [2, 8, 8], strides = [1, 1, 1]} : vector<8x8x8xf32> to vector<2x8x8xf32>
    %260 = vector.extract_strided_slice %257 {offsets = [4, 0, 0], sizes = [2, 8, 8], strides = [1, 1, 1]} : vector<8x8x8xf32> to vector<2x8x8xf32>
    %261 = vector.extract_strided_slice %257 {offsets = [6, 0, 0], sizes = [2, 8, 8], strides = [1, 1, 1]} : vector<8x8x8xf32> to vector<2x8x8xf32>
    %262 = tpu.concatenate %258, %259, %260, %261 in 2 : vector<2x8x8xf32>, vector<2x8x8xf32>, vector<2x8x8xf32>, vector<2x8x8xf32> -> vector<2x8x32xf32>
    %263 = vector.shape_cast %262 : vector<2x8x32xf32> to vector<16x32xf32>
    %264 = arith.truncf %263 : vector<16x32xf32> to vector<16x32xbf16>
    %c1_59 = arith.constant 1 : index
    %c0_60 = arith.constant 0 : index
    %c0_61 = arith.constant 0 : index
    %265 = vector.load %arg3[%c1_59, %c0_60, %c0_61] : memref<2x32x32xbf16, #tpu.memory_space<vmem>>, vector<1x32x32xbf16>
    %266 = vector.shape_cast %265 : vector<1x32x32xbf16> to vector<32x32xbf16>
    %cst_62 = arith.constant dense<0.000000e+00> : vector<16x32xf32>
    %267 = tpu.matmul %264, %266, %cst_62 {dimension_numbers = #tpu.dot_dimension_numbers<[1], [0], [0], [1], [0, 0, 1, 1], [], []>} : vector<16x32xbf16>, vector<32x32xbf16>, vector<16x32xf32> -> vector<16x32xf32>
    %268 = vector.extract_strided_slice %201 {offsets = [1, 0], sizes = [1, 32], strides = [1, 1]} : vector<8x96xf32> to vector<1x32xf32>
    %269 = vector.shape_cast %268 : vector<1x32xf32> to vector<32xf32>
    %270 = vector.shape_cast %269 : vector<32xf32> to vector<1x32xf32>
    %271 = vector.broadcast %270 : vector<1x32xf32> to vector<16x32xf32>
    %272 = arith.addf %267, %271 : vector<16x32xf32>
    %273 = arith.addf %199, %272 : vector<16x32xf32>
    %274 = vector.extract_strided_slice %201 {offsets = [2, 0], sizes = [1, 32], strides = [1, 1]} : vector<8x96xf32> to vector<1x32xf32>
    %275 = vector.shape_cast %274 : vector<1x32xf32> to vector<32xf32>
    %276 = vector.extract_strided_slice %201 {offsets = [3, 0], sizes = [1, 32], strides = [1, 1]} : vector<8x96xf32> to vector<1x32xf32>
    %277 = vector.shape_cast %276 : vector<1x32xf32> to vector<32xf32>
    %cst_63 = arith.constant dense<0.000000e+00> : vector<16xf32>
    %278 = vector.multi_reduction <add>, %273, %cst_63 [1] : vector<16x32xf32> to vector<16xf32>
    %279 = vector.shape_cast %278 : vector<16xf32> to vector<16x1xf32>
    %cst_64 = arith.constant 3.200000e+01 : f32
    %280 = vector.broadcast %cst_64 : f32 to vector<16x1xf32>
    %281 = arith.divf %279, %280 : vector<16x1xf32>
    %282 = vector.broadcast %281 : vector<16x1xf32> to vector<16x32xf32>
    %283 = arith.subf %273, %282 : vector<16x32xf32>
    %284 = arith.mulf %283, %283 : vector<16x32xf32>
    %cst_65 = arith.constant dense<0.000000e+00> : vector<16xf32>
    %285 = vector.multi_reduction <add>, %284, %cst_65 [1] : vector<16x32xf32> to vector<16xf32>
    %286 = vector.shape_cast %285 : vector<16xf32> to vector<16x1xf32>
    %cst_66 = arith.constant 3.200000e+01 : f32
    %287 = vector.broadcast %cst_66 : f32 to vector<16x1xf32>
    %288 = arith.divf %286, %287 : vector<16x1xf32>
    %289 = vector.broadcast %281 : vector<16x1xf32> to vector<16x32xf32>
    %290 = arith.subf %273, %289 : vector<16x32xf32>
    %cst_67 = arith.constant 9.99999996E-13 : f32
    %291 = vector.broadcast %cst_67 : f32 to vector<16x1xf32>
    %292 = arith.addf %288, %291 : vector<16x1xf32>
    %293 = math.rsqrt %292 : vector<16x1xf32>
    %294 = vector.broadcast %293 : vector<16x1xf32> to vector<16x32xf32>
    %295 = arith.mulf %290, %294 : vector<16x32xf32>
    %296 = vector.shape_cast %275 : vector<32xf32> to vector<1x32xf32>
    %297 = vector.broadcast %296 : vector<1x32xf32> to vector<16x32xf32>
    %298 = arith.mulf %295, %297 : vector<16x32xf32>
    %299 = vector.shape_cast %277 : vector<32xf32> to vector<1x32xf32>
    %300 = vector.broadcast %299 : vector<1x32xf32> to vector<16x32xf32>
    %301 = arith.addf %298, %300 : vector<16x32xf32>
    %302 = arith.truncf %301 : vector<16x32xf32> to vector<16x32xbf16>
    %c1_68 = arith.constant 1 : index
    %c0_69 = arith.constant 0 : index
    %c0_70 = arith.constant 0 : index
    %303 = vector.load %arg4[%c1_68, %c0_69, %c0_70] : memref<2x32x64xbf16, #tpu.memory_space<vmem>>, vector<1x32x64xbf16>
    %304 = vector.shape_cast %303 : vector<1x32x64xbf16> to vector<32x64xbf16>
    %cst_71 = arith.constant dense<0.000000e+00> : vector<16x64xf32>
    %305 = tpu.matmul %302, %304, %cst_71 {dimension_numbers = #tpu.dot_dimension_numbers<[1], [0], [0], [1], [0, 0, 1, 1], [], []>} : vector<16x32xbf16>, vector<32x64xbf16>, vector<16x64xf32> -> vector<16x64xf32>
    %306 = vector.extract_strided_slice %201 {offsets = [4, 0], sizes = [1, 64], strides = [1, 1]} : vector<8x96xf32> to vector<1x64xf32>
    %307 = vector.shape_cast %306 : vector<1x64xf32> to vector<64xf32>
    %308 = vector.shape_cast %307 : vector<64xf32> to vector<1x64xf32>
    %309 = vector.broadcast %308 : vector<1x64xf32> to vector<16x64xf32>
    %310 = arith.addf %305, %309 : vector<16x64xf32>
    %311 = arith.mulf %310, %310 : vector<16x64xf32>
    %312 = arith.mulf %310, %311 : vector<16x64xf32>
    %cst_72 = arith.constant 4.471500e-02 : f32
    %313 = vector.broadcast %cst_72 : f32 to vector<16x64xf32>
    %314 = arith.mulf %313, %312 : vector<16x64xf32>
    %315 = arith.addf %310, %314 : vector<16x64xf32>
    %cst_73 = arith.constant 0.797884583 : f32
    %316 = vector.broadcast %cst_73 : f32 to vector<16x64xf32>
    %317 = arith.mulf %316, %315 : vector<16x64xf32>
    %318 = math.tanh %317 : vector<16x64xf32>
    %cst_74 = arith.constant 1.000000e+00 : f32
    %319 = vector.broadcast %cst_74 : f32 to vector<16x64xf32>
    %320 = arith.addf %319, %318 : vector<16x64xf32>
    %cst_75 = arith.constant 5.000000e-01 : f32
    %321 = vector.broadcast %cst_75 : f32 to vector<16x64xf32>
    %322 = arith.mulf %321, %320 : vector<16x64xf32>
    %323 = arith.mulf %310, %322 : vector<16x64xf32>
    %324 = arith.truncf %323 : vector<16x64xf32> to vector<16x64xbf16>
    %c1_76 = arith.constant 1 : index
    %c0_77 = arith.constant 0 : index
    %c0_78 = arith.constant 0 : index
    %325 = vector.load %arg5[%c1_76, %c0_77, %c0_78] : memref<2x64x32xbf16, #tpu.memory_space<vmem>>, vector<1x64x32xbf16>
    %326 = vector.shape_cast %325 : vector<1x64x32xbf16> to vector<64x32xbf16>
    %cst_79 = arith.constant dense<0.000000e+00> : vector<16x32xf32>
    %327 = tpu.matmul %324, %326, %cst_79 {dimension_numbers = #tpu.dot_dimension_numbers<[1], [0], [0], [1], [0, 0, 1, 1], [], []>} : vector<16x64xbf16>, vector<64x32xbf16>, vector<16x32xf32> -> vector<16x32xf32>
    %328 = vector.extract_strided_slice %201 {offsets = [5, 0], sizes = [1, 32], strides = [1, 1]} : vector<8x96xf32> to vector<1x32xf32>
    %329 = vector.shape_cast %328 : vector<1x32xf32> to vector<32xf32>
    %330 = vector.shape_cast %329 : vector<32xf32> to vector<1x32xf32>
    %331 = vector.broadcast %330 : vector<1x32xf32> to vector<16x32xf32>
    %332 = arith.addf %327, %331 : vector<16x32xf32>
    %333 = arith.addf %301, %332 : vector<16x32xf32>
    %334 = vector.extract_strided_slice %201 {offsets = [6, 0], sizes = [1, 32], strides = [1, 1]} : vector<8x96xf32> to vector<1x32xf32>
    %335 = vector.shape_cast %334 : vector<1x32xf32> to vector<32xf32>
    %336 = vector.extract_strided_slice %201 {offsets = [7, 0], sizes = [1, 32], strides = [1, 1]} : vector<8x96xf32> to vector<1x32xf32>
    %337 = vector.shape_cast %336 : vector<1x32xf32> to vector<32xf32>
    %cst_80 = arith.constant dense<0.000000e+00> : vector<16xf32>
    %338 = vector.multi_reduction <add>, %333, %cst_80 [1] : vector<16x32xf32> to vector<16xf32>
    %339 = vector.shape_cast %338 : vector<16xf32> to vector<16x1xf32>
    %cst_81 = arith.constant 3.200000e+01 : f32
    %340 = vector.broadcast %cst_81 : f32 to vector<16x1xf32>
    %341 = arith.divf %339, %340 : vector<16x1xf32>
    %342 = vector.broadcast %341 : vector<16x1xf32> to vector<16x32xf32>
    %343 = arith.subf %333, %342 : vector<16x32xf32>
    %344 = arith.mulf %343, %343 : vector<16x32xf32>
    %cst_82 = arith.constant dense<0.000000e+00> : vector<16xf32>
    %345 = vector.multi_reduction <add>, %344, %cst_82 [1] : vector<16x32xf32> to vector<16xf32>
    %346 = vector.shape_cast %345 : vector<16xf32> to vector<16x1xf32>
    %cst_83 = arith.constant 3.200000e+01 : f32
    %347 = vector.broadcast %cst_83 : f32 to vector<16x1xf32>
    %348 = arith.divf %346, %347 : vector<16x1xf32>
    %349 = vector.broadcast %341 : vector<16x1xf32> to vector<16x32xf32>
    %350 = arith.subf %333, %349 : vector<16x32xf32>
    %cst_84 = arith.constant 9.99999996E-13 : f32
    %351 = vector.broadcast %cst_84 : f32 to vector<16x1xf32>
    %352 = arith.addf %348, %351 : vector<16x1xf32>
    %353 = math.rsqrt %352 : vector<16x1xf32>
    %354 = vector.broadcast %353 : vector<16x1xf32> to vector<16x32xf32>
    %355 = arith.mulf %350, %354 : vector<16x32xf32>
    %356 = vector.shape_cast %335 : vector<32xf32> to vector<1x32xf32>
    %357 = vector.broadcast %356 : vector<1x32xf32> to vector<16x32xf32>
    %358 = arith.mulf %355, %357 : vector<16x32xf32>
    %359 = vector.shape_cast %337 : vector<32xf32> to vector<1x32xf32>
    %360 = vector.broadcast %359 : vector<1x32xf32> to vector<16x32xf32>
    %361 = arith.addf %358, %360 : vector<16x32xf32>
    %362 = vector.shape_cast %361 : vector<16x32xf32> to vector<2x8x32xf32>
    %c0_85 = arith.constant 0 : index
    %c0_86 = arith.constant 0 : index
    %c0_87 = arith.constant 0 : index
    %363 = vector.load %arg7[%c0_85, %c0_86, %c0_87] : memref<2x8x32xf32, #tpu.memory_space<vmem>>, vector<2x8x32xf32>
    tpu.vector_store %arg7[%c0_85, %c0_86, %c0_87], %362 {strides = array<i32>} : memref<2x8x32xf32, #tpu.memory_space<vmem>>, vector<2x8x32xf32>,
    %364 = vector.shape_cast %1 : vector<2x8xf32> to vector<2x8x1xf32>
    %365 = vector.broadcast %364 : vector<2x8x1xf32> to vector<2x8x32xf32>
    %366 = arith.mulf %362, %365 : vector<2x8x32xf32>
    %cst_88 = arith.constant dense<0.000000e+00> : vector<2x32xf32>
    %367 = vector.multi_reduction <add>, %366, %cst_88 [1] : vector<2x8x32xf32> to vector<2x32xf32>
    %cst_89 = arith.constant dense<0.000000e+00> : vector<2xf32>
    %368 = vector.multi_reduction <add>, %1, %cst_89 [1] : vector<2x8xf32> to vector<2xf32>
    %369 = vector.shape_cast %368 : vector<2xf32> to vector<2x1xf32>
    %cst_90 = arith.constant 9.99999971E-10 : f32
    %370 = vector.broadcast %cst_90 : f32 to vector<2x1xf32>
    %371 = arith.maximumf %369, %370 : vector<2x1xf32>
    %372 = vector.broadcast %371 : vector<2x1xf32> to vector<2x32xf32>
    %373 = arith.divf %367, %372 : vector<2x32xf32>
    %c0_91 = arith.constant 0 : index
    %c0_92 = arith.constant 0 : index
    %374 = vector.load %arg8[%c0_91, %c0_92] : memref<2x32xf32, #tpu.memory_space<vmem>>, vector<2x32xf32>
    tpu.vector_store %arg8[%c0_91, %c0_92], %373 {strides = array<i32>} : memref<2x32xf32, #tpu.memory_space<vmem>>, vector<2x32xf32>,
    return
  }
}

</mosaic_0001>

<llo_original>
// kernel: tpu_custom_call.1
$region0: #{tpu_custom_call.1}
  #allocation0 [shape = 'u32[]', space=smem, size = 0x4, offset = 0x4, fixed_abs, tag = 'smem constant byte address 0x4 - core index']
  #allocation1 [shape = 'u32[144,128]{1,0:T(1,128)}', space=vmem, size = 0x12000, scoped, tag = 'internal scratch']
  %s0 = inlined_call_operand.hbm [shape: f32[2,8,32], index: 0, kind: input, shape index: {}]
  %s1 = inlined_call_operand.hbm [shape: f32[8,128], index: 1, kind: input, shape index: {}]
  %s2 = inlined_call_operand.vmem [shape: bf16[2,32,96], index: 2, kind: input, shape index: {}]
  %s3 = inlined_call_operand.vmem [shape: bf16[2,32,32], index: 3, kind: input, shape index: {}]
  %s4 = inlined_call_operand.vmem [shape: bf16[2,32,64], index: 4, kind: input, shape index: {}]
  %s5 = inlined_call_operand.vmem [shape: bf16[2,64,32], index: 5, kind: input, shape index: {}]
  %s6 = inlined_call_operand.vmem [shape: f32[2,8,96], index: 6, kind: input, shape index: {}]
  %s7 = inlined_call_operand.hbm [shape: f32[2,8,32], index: 7, kind: output, shape index: {0}]
  %s8 = inlined_call_operand.hbm [shape: f32[2,32], index: 8, kind: output, shape index: {1}]
  %9 = xla_tuple %s7, %s8
  %s10 = sld [smem:[#allocation0]]
  $region54: #{tpu_custom_call.1} parent=0
    _
  %s12 = ssub.s32 1, %s10
  %s13 = scalar_select 0, %s12, %s10
  $region1: #{tpu_custom_call.1} parent=0
    #allocation2 [shape = 'u8[8192]{0}', space=vmem, size = 0x2000, scoped, tag = 'input window, operand 0, single buffered']
    #allocation3 [shape = 's32[1]{0}', space=sflag, size = 0x4, scoped, tag = 'scoped memory for tpu_custom_call.1']
    #allocation4 [shape = 's32[1]{0}', space=sflag, size = 0x4, scoped, tag = 'scoped memory for tpu_custom_call.1']
    #allocation5 [shape = 'u8[4096]{0}', space=vmem, size = 0x1000, scoped, tag = 'input window, operand 1, single buffered']
    #allocation6 [shape = 's32[1]{0}', space=sflag, size = 0x4, scoped, tag = 'scoped memory for tpu_custom_call.1']
    #allocation7 [shape = 'u8[8192]{0}', space=vmem, size = 0x2000, scoped, tag = 'output window, operand 0, single buffered']
    #allocation8 [shape = 'u8[1024]{0}', space=vmem, size = 0x400, scoped, tag = 'output window, operand 1, single buffered']
    #allocation9 [shape = 's32[1]{0}', space=sflag, size = 0x4, scoped, tag = 'scoped memory for tpu_custom_call.1']
    %14 = vsyncpa [#allocation3], 0
    %15 = vsyncpa [#allocation6], 0
    %16 = vsyncpa [#allocation4], 0
    %17 = vsyncpa [#allocation9], 0
    // Predicated region
    $region2: #{tpu_custom_call.1} parent=1 // pred_check
      _
    $region3: #{tpu_custom_call.1} parent=1 // pred_check_branch
      %19 = sbr.rel (0) target = $region5
    $region4: #{tpu_custom_call.1} parent=1 // pred_region
      %s21 = ssub.s32 256, 256
      %22 = vsyncadd [#allocation3], %s21
      %s23 = sshll.u32 [#allocation2], 4
      %s24 = int_to_ptr.vmem [resolvable:$true] %s23
      %29 = dma.hbm_to_vmem [thread:$0]  %s0, 256, %s24, [#allocation3], 128, 128, 8
    $region5: #{tpu_custom_call.1} parent=1 // pred_fallthru
      _
    // Predicated region
    $region6: #{tpu_custom_call.1} parent=1 // pred_check
      _
    $region7: #{tpu_custom_call.1} parent=1 // pred_check_branch
      %31 = sbr.rel (0) target = $region9
    $region8: #{tpu_custom_call.1} parent=1 // pred_region
      %s33 = ssub.s32 128, 128
      %34 = vsyncadd [#allocation6], %s33
      %s36 = sshll.u32 [#allocation5], 4
      %s37 = int_to_ptr.vmem [resolvable:$true] %s36
      %39 = dma.hbm_to_vmem [thread:$0]  %s1, 128, %s37, [#allocation6]
    $region9: #{tpu_custom_call.1} parent=1 // pred_fallthru
      _
    // Predicated region
    $region10: #{tpu_custom_call.1} parent=1 // pred_check
      _
    $region11: #{tpu_custom_call.1} parent=1 // pred_check_branch
      %41 = sbr.rel (0) target = $region13
    $region12: #{tpu_custom_call.1} parent=1 // pred_region
      _
    $region13: #{tpu_custom_call.1} parent=1 // pred_fallthru
      _
    // Predicated region
    $region14: #{tpu_custom_call.1} parent=1 // pred_check
      _
    $region15: #{tpu_custom_call.1} parent=1 // pred_check_branch
      %43 = sbr.rel (0) target = $region17
    $region16: #{tpu_custom_call.1} parent=1 // pred_region
      _
    $region17: #{tpu_custom_call.1} parent=1 // pred_fallthru
      _
    // Predicated region
    $region18: #{tpu_custom_call.1} parent=1 // pred_check
      _
    $region19: #{tpu_custom_call.1} parent=1 // pred_check_branch
      %45 = sbr.rel (0) target = $region21
    $region20: #{tpu_custom_call.1} parent=1 // pred_region
      _
    $region21: #{tpu_custom_call.1} parent=1 // pred_fallthru
      _
    // Predicated region
    $region22: #{tpu_custom_call.1} parent=1 // pred_check
      _
    $region23: #{tpu_custom_call.1} parent=1 // pred_check_branch
      %47 = sbr.rel (0) target = $region25
    $region24: #{tpu_custom_call.1} parent=1 // pred_region
      _
    $region25: #{tpu_custom_call.1} parent=1 // pred_fallthru
      _
    // Predicated region
    $region26: #{tpu_custom_call.1} parent=1 // pred_check
      _
    $region27: #{tpu_custom_call.1} parent=1 // pred_check_branch
      %49 = sbr.rel (0) target = $region29
    $region28: #{tpu_custom_call.1} parent=1 // pred_region
      _
    $region29: #{tpu_custom_call.1} parent=1 // pred_fallthru
      _
    // Predicated region
    $region30: #{tpu_custom_call.1} parent=1 // pred_check
      _
    $region31: #{tpu_custom_call.1} parent=1 // pred_check_branch
      %51 = sbr.rel (0) target = $region33
    $region32: #{tpu_custom_call.1} parent=1 // pred_region
      %52 = dma.done [#allocation3], 256
    $region33: #{tpu_custom_call.1} parent=1 // pred_fallthru
      _
    // Predicated region
    $region34: #{tpu_custom_call.1} parent=1 // pred_check
      _
    $region35: #{tpu_custom_call.1} parent=1 // pred_check_branch
      %54 = sbr.rel (0) target = $region37
    $region36: #{tpu_custom_call.1} parent=1 // pred_region
      %55 = dma.done [#allocation6], 128
    $region37: #{tpu_custom_call.1} parent=1 // pred_fallthru
      _
    %v57 = vld [vmem:[#allocation5] sm:$0xff]
    %v58 = vsub.f32 1.0, %v57
    %v59 = vmul.f32 %v58, -1e+09
    %v62 = vunpack.c.l.s4 1966171168
    %v63 = vunpack.c.0.s8 %v62
    %v64 = vlaneseq
    %v65 = vshrl.u32 %v64, 7
    %v66 = vsub.s32 %v63, %v65
    %v67 = vrot.slane %v59, %v66
    %v68 = vcombine.high %v67, %v67
    %v70 = vunpack.c.l.s4 1966171168
    %v71 = vunpack.c.0.s8 %v70
    %v72 = vlaneseq
    %v73 = vshrl.u32 %v72, 7
    %v74 = vsub.s32 %v71, %v73
    %v75 = vrot.slane %v67, %v74
    %v77 = vunpack.c.l.s4 1966171168
    %v78 = vunpack.c.0.s8 %v77
    %v79 = vlaneseq
    %v80 = vshrl.u32 %v79, 7
    %v81 = vsub.s32 %v78, %v80
    %v82 = vrot.slane %v68, %v81
    %v83 = vld [vmem:[#allocation2] sm:$0xff]
    %v84 = vld [vmem:[#allocation2 + $0x8] sm:$0xff]
    %vm85 = vcmask 261120
    %v86 = vsel %vm85, %v83, 0.0
    %87 = vadd.xlane.f32.xlu0 %v86
    %v88 = vpop.xlane.xlu0 %87
    %v89 = vsel %vm85, %v84, 0.0
    %90 = vadd.xlane.f32.xlu0 %v89
    %v91 = vpop.xlane.xlu0 %90
    %v92 = vrcp.pop 32.0
    %v93 = vmul.f32 %v88, %v92
    %v94 = vmul.f32 %v91, %v92
    %v95 = vsub.f32 %v83, %v93
    %v96 = vsub.f32 %v84, %v94
    %v97 = vmul.f32 %v95, %v95
    %v98 = vmul.f32 %v96, %v96
    %v99 = vsel %vm85, %v97, 0.0
    %100 = vadd.xlane.f32.xlu0 %v99
    %v101 = vpop.xlane.xlu0 %100
    %v102 = vsel %vm85, %v98, 0.0
    %103 = vadd.xlane.f32.xlu0 %v102
    %v104 = vpop.xlane.xlu0 %103
    %v105 = vmul.f32 %v101, %v92
    %v106 = vmul.f32 %v104, %v92
    %v107 = vadd.f32 %v105, 1e-12
    %v108 = vadd.f32 %v106, 1e-12
    %v109 = vrsqrt.pop %v107
    %v110 = vrsqrt.pop %v108
    %v111 = vmul.f32 %v95, %v109
    %v112 = vmul.f32 %v96, %v110
    %v113 = vlaneseq
    %v114 = vshrl.u32 %v113, 7
    %v115 = vsub.s32 4, %v114
    %v116 = vrot.slane %v57, %v115
    %v117 = vmul.f32 %v111, %v116
    %v118 = vmul.f32 %v112, %v116
    %v119 = vlaneseq
    %v120 = vshrl.u32 %v119, 7
    %v121 = vsub.s32 5, %v120
    %v122 = vrot.slane %v57, %v121
    %v123 = vadd.f32 %v117, %v122
    %v124 = vadd.f32 %v118, %v122
    %v125 = vld [vmem:[%s6] sm:$0xff]
    %v126 = vpack.c.bf16 %v124, %v123
    %v127 = vld [vmem:[%s2] sm:$0xf]
    %v128 = vld [vmem:[%s2 + $0x4] sm:$0xf]
    %v129 = vld [vmem:[%s2 + $0x8] sm:$0xf]
    %v130 = vld [vmem:[%s2 + $0xc] sm:$0xf]
    %v131 = vlaneseq
    %v132 = vshrl.u32 %v131, 7
    %v133 = vsub.s32 0, %v132
    %v134 = vrot.slane %v125, %v133
    %v139 = vunpack.c.l.b16 %v127
    %v140 = vunpack.c.l.b16 %v128
    %v141 = vunpack.c.l.b16 %v129
    %v142 = vunpack.c.l.b16 %v130
    %v143 = vpack.c.b16 %v140, %v139
    %v144 = vpack.c.b16 %v142, %v141
    %v148 = vsel %vm85, %v126, 0
    %150 = vmatprep.subr.bf16.mxu0 0
    %151 = vmatpush1.bf16.msra.mxu0 %v143
    %152 = vmatprep.subr.bf16.mxu0 0
    %153 = vmatpush1.bf16.msra.mxu0 %v144
    %154 = vmatprep.subr.bf16.mxu0 0
    %155 = vmatpush1.bf16.msra.mxu0 0
    %156 = vmatprep.subr.bf16.mxu0 0
    %157 = vmatpush1.bf16.msra.mxu0 0
    %158 = vmatprep.subr.bf16.mxu0 0
    %159 = vmatpush1.bf16.msra.mxu0 0
    %160 = vmatprep.subr.bf16.mxu0 0
    %161 = vmatpush1.bf16.msra.mxu0 0
    %162 = vmatprep.subr.bf16.mxu0 0
    %163 = vmatpush1.bf16.msra.mxu0 0
    %164 = vmatprep.subr.bf16.mxu0 0
    %165 = vmatpush1.bf16.msra.mxu0 0
    %166 = vmatprep.subr.bf16.mxu0 0
    %167 = vmatpush1.bf16.msra.mxu0 0
    %168 = vmatprep.subr.bf16.mxu0 0
    %169 = vmatpush1.bf16.msra.mxu0 0
    %170 = vmatprep.subr.bf16.mxu0 0
    %171 = vmatpush1.bf16.msra.mxu0 0
    %172 = vmatprep.subr.bf16.mxu0 0
    %173 = vmatpush1.bf16.msra.mxu0 0
    %174 = vmatprep.subr.bf16.mxu0 0
    %175 = vmatpush1.bf16.msra.mxu0 0
    %176 = vmatprep.subr.bf16.mxu0 0
    %177 = vmatpush1.bf16.msra.mxu0 0
    %178 = vmatprep.subr.bf16.mxu0 0
    %179 = vmatpush1.bf16.msra.mxu0 0
    %180 = vmatprep.subr.bf16.mxu0 0
    %181 = vmatpush1.bf16.msra.mxu0 0
    %182 = vmatprep.mubr.bf16.mxu0 0
    %183 = vmatmul.mubr.bf16.gmra.mrb[0].mxu0 %v148
    %v184 = vpop.f32.mrb[0].mxu0
    %v185 = vadd.f32 %v134, %v184
    %v186 = vpop.f32.mrb[0].mxu0
    %v187 = vpop.f32.mrb[0].mxu0
    %v188 = vadd.f32 %v134, %v187
    %v189 = vpop.f32.mrb[0].mxu0
    %190 = vdwg.mxu0
    %193 = vrot.lane.b32.xlu0 %v185, 120
    %v194 = vpop.permute.xlu0 %193
    %195 = vrot.lane.b32.xlu0 %v188, 120
    %v196 = vpop.permute.xlu0 %195
    %199 = vrot.lane.b32.xlu0 %v185, 112
    %v200 = vpop.permute.xlu0 %199
    %201 = vrot.lane.b32.xlu0 %v188, 112
    %v202 = vpop.permute.xlu0 %201
    %205 = vrot.lane.b32.xlu0 %v185, 104
    %v206 = vpop.permute.xlu0 %205
    %207 = vrot.lane.b32.xlu0 %v188, 104
    %v208 = vpop.permute.xlu0 %207
    %v211 = vpack.c.bf16 %v185, %v185
    %v212 = vpack.c.bf16 %v188, %v188
    %v213 = vpack.c.bf16 %v194, %v194
    %v214 = vpack.c.bf16 %v196, %v196
    %v215 = vpack.c.bf16 %v200, %v200
    %v216 = vpack.c.bf16 %v202, %v202
    %v217 = vpack.c.bf16 %v206, %v206
    %v218 = vpack.c.bf16 %v208, %v208
    %220 = vrot.lane.b32.xlu0 %v211, 96
    %v221 = vpop.permute.xlu0 %220
    %vm222 = vcmask 64512
    %v224 = vsel %vm222, %v211, 0
    %v227 = vsel %vm222, %v221, 0
    %229 = vmatprep.subr.bf16.mxu0 0
    %230 = vmatpush1.bf16.xpose.msra.mxu0 %v227
    %231 = vmatprep.subr.bf16.mxu0 0
    %232 = vmatpush1.bf16.xpose.msra.mxu0 0
    %233 = vmatprep.subr.bf16.mxu0 0
    %234 = vmatpush1.bf16.xpose.msra.mxu0 0
    %235 = vmatprep.subr.bf16.mxu0 0
    %236 = vmatpush1.bf16.xpose.msra.mxu0 0
    %237 = vmatprep.subr.bf16.mxu0 0
    %238 = vmatpush1.bf16.xpose.msra.mxu0 0
    %239 = vmatprep.subr.bf16.mxu0 0
    %240 = vmatpush1.bf16.xpose.msra.mxu0 0
    %241 = vmatprep.subr.bf16.mxu0 0
    %242 = vmatpush1.bf16.xpose.msra.mxu0 0
    %243 = vmatprep.subr.bf16.mxu0 0
    %244 = vmatpush1.bf16.xpose.msra.mxu0 0
    %245 = vmatprep.subr.bf16.mxu0 0
    %246 = vmatpush1.bf16.xpose.msra.mxu0 0
    %247 = vmatprep.subr.bf16.mxu0 0
    %248 = vmatpush1.bf16.xpose.msra.mxu0 0
    %249 = vmatprep.subr.bf16.mxu0 0
    %250 = vmatpush1.bf16.xpose.msra.mxu0 0
    %251 = vmatprep.subr.bf16.mxu0 0
    %252 = vmatpush1.bf16.xpose.msra.mxu0 0
    %253 = vmatprep.subr.bf16.mxu0 0
    %254 = vmatpush1.bf16.xpose.msra.mxu0 0
    %255 = vmatprep.subr.bf16.mxu0 0
    %256 = vmatpush1.bf16.xpose.msra.mxu0 0
    %257 = vmatprep.subr.bf16.mxu0 0
    %258 = vmatpush1.bf16.xpose.msra.mxu0 0
    %259 = vmatprep.subr.bf16.mxu0 0
    %260 = vmatpush1.bf16.xpose.msra.mxu0 0
    %261 = vmatprep.mubr.bf16.mxu0 0
    %262 = vmatmul.mubr.bf16.gmra.mrb[0].mxu0 %v224
    %v263 = vpop.f32.mrb[0].mxu0
    %v264 = vadd.f32 0.0, %v263
    %v265 = vpop.f32.mrb[0].mxu0
    %v266 = vpop.f32.mrb[0].mxu0
    %v267 = vpop.f32.mrb[0].mxu0
    %268 = vdwg.mxu0
    %270 = vrot.lane.b32.xlu0 %v212, 96
    %v271 = vpop.permute.xlu0 %270
    %v273 = vsel %vm222, %v212, 0
    %v276 = vsel %vm222, %v271, 0
    %278 = vmatprep.subr.bf16.mxu0 0
    %279 = vmatpush1.bf16.xpose.msra.mxu0 %v276
    %280 = vmatprep.subr.bf16.mxu0 0
    %281 = vmatpush1.bf16.xpose.msra.mxu0 0
    %282 = vmatprep.subr.bf16.mxu0 0
    %283 = vmatpush1.bf16.xpose.msra.mxu0 0
    %284 = vmatprep.subr.bf16.mxu0 0
    %285 = vmatpush1.bf16.xpose.msra.mxu0 0
    %286 = vmatprep.subr.bf16.mxu0 0
    %287 = vmatpush1.bf16.xpose.msra.mxu0 0
    %288 = vmatprep.subr.bf16.mxu0 0
    %289 = vmatpush1.bf16.xpose.msra.mxu0 0
    %290 = vmatprep.subr.bf16.mxu0 0
    %291 = vmatpush1.bf16.xpose.msra.mxu0 0
    %292 = vmatprep.subr.bf16.mxu0 0
    %293 = vmatpush1.bf16.xpose.msra.mxu0 0
    %294 = vmatprep.subr.bf16.mxu0 0
    %295 = vmatpush1.bf16.xpose.msra.mxu0 0
    %296 = vmatprep.subr.bf16.mxu0 0
    %297 = vmatpush1.bf16.xpose.msra.mxu0 0
    %298 = vmatprep.subr.bf16.mxu0 0
    %299 = vmatpush1.bf16.xpose.msra.mxu0 0
    %300 = vmatprep.subr.bf16.mxu0 0
    %301 = vmatpush1.bf16.xpose.msra.mxu0 0
    %302 = vmatprep.subr.bf16.mxu0 0
    %303 = vmatpush1.bf16.xpose.msra.mxu0 0
    %304 = vmatprep.subr.bf16.mxu0 0
    %305 = vmatpush1.bf16.xpose.msra.mxu0 0
    %306 = vmatprep.subr.bf16.mxu0 0
    %307 = vmatpush1.bf16.xpose.msra.mxu0 0
    %308 = vmatprep.subr.bf16.mxu0 0
    %309 = vmatpush1.bf16.xpose.msra.mxu0 0
    %310 = vmatprep.mubr.bf16.mxu0 0
    %311 = vmatmul.mubr.bf16.gmra.mrb[0].mxu0 %v273
    %v312 = vpop.f32.mrb[0].mxu0
    %v313 = vadd.f32 0.0, %v312
    %v314 = vpop.f32.mrb[0].mxu0
    %v315 = vpop.f32.mrb[0].mxu0
    %v316 = vpop.f32.mrb[0].mxu0
    %317 = vdwg.mxu0
    %319 = vrot.lane.b32.xlu0 %v213, 96
    %v320 = vpop.permute.xlu0 %319
    %v322 = vsel %vm222, %v213, 0
    %v325 = vsel %vm222, %v320, 0
    %327 = vmatprep.subr.bf16.mxu0 0
    %328 = vmatpush1.bf16.xpose.msra.mxu0 %v325
    %329 = vmatprep.subr.bf16.mxu0 0
    %330 = vmatpush1.bf16.xpose.msra.mxu0 0
    %331 = vmatprep.subr.bf16.mxu0 0
    %332 = vmatpush1.bf16.xpose.msra.mxu0 0
    %333 = vmatprep.subr.bf16.mxu0 0
    %334 = vmatpush1.bf16.xpose.msra.mxu0 0
    %335 = vmatprep.subr.bf16.mxu0 0
    %336 = vmatpush1.bf16.xpose.msra.mxu0 0
    %337 = vmatprep.subr.bf16.mxu0 0
    %338 = vmatpush1.bf16.xpose.msra.mxu0 0
    %339 = vmatprep.subr.bf16.mxu0 0
    %340 = vmatpush1.bf16.xpose.msra.mxu0 0
    %341 = vmatprep.subr.bf16.mxu0 0
    %342 = vmatpush1.bf16.xpose.msra.mxu0 0
    %343 = vmatprep.subr.bf16.mxu0 0
    %344 = vmatpush1.bf16.xpose.msra.mxu0 0
    %345 = vmatprep.subr.bf16.mxu0 0
    %346 = vmatpush1.bf16.xpose.msra.mxu0 0
    %347 = vmatprep.subr.bf16.mxu0 0
    %348 = vmatpush1.bf16.xpose.msra.mxu0 0
    %349 = vmatprep.subr.bf16.mxu0 0
    %350 = vmatpush1.bf16.xpose.msra.mxu0 0
    %351 = vmatprep.subr.bf16.mxu0 0
    %352 = vmatpush1.bf16.xpose.msra.mxu0 0
    %353 = vmatprep.subr.bf16.mxu0 0
    %354 = vmatpush1.bf16.xpose.msra.mxu0 0
    %355 = vmatprep.subr.bf16.mxu0 0
    %356 = vmatpush1.bf16.xpose.msra.mxu0 0
    %357 = vmatprep.subr.bf16.mxu0 0
    %358 = vmatpush1.bf16.xpose.msra.mxu0 0
    %359 = vmatprep.mubr.bf16.mxu0 0
    %360 = vmatmul.mubr.bf16.gmra.mrb[0].mxu0 %v322
    %v361 = vpop.f32.mrb[0].mxu0
    %v362 = vadd.f32 0.0, %v361
    %v363 = vpop.f32.mrb[0].mxu0
    %v364 = vpop.f32.mrb[0].mxu0
    %v365 = vpop.f32.mrb[0].mxu0
    %366 = vdwg.mxu0
    %368 = vrot.lane.b32.xlu0 %v214, 96
    %v369 = vpop.permute.xlu0 %368
    %v371 = vsel %vm222, %v214, 0
    %v374 = vsel %vm222, %v369, 0
    %376 = vmatprep.subr.bf16.mxu0 0
    %377 = vmatpush1.bf16.xpose.msra.mxu0 %v374
    %378 = vmatprep.subr.bf16.mxu0 0
    %379 = vmatpush1.bf16.xpose.msra.mxu0 0
    %380 = vmatprep.subr.bf16.mxu0 0
    %381 = vmatpush1.bf16.xpose.msra.mxu0 0
    %382 = vmatprep.subr.bf16.mxu0 0
    %383 = vmatpush1.bf16.xpose.msra.mxu0 0
    %384 = vmatprep.subr.bf16.mxu0 0
    %385 = vmatpush1.bf16.xpose.msra.mxu0 0
    %386 = vmatprep.subr.bf16.mxu0 0
    %387 = vmatpush1.bf16.xpose.msra.mxu0 0
    %388 = vmatprep.subr.bf16.mxu0 0
    %389 = vmatpush1.bf16.xpose.msra.mxu0 0
    %390 = vmatprep.subr.bf16.mxu0 0
    %391 = vmatpush1.bf16.xpose.msra.mxu0 0
    %392 = vmatprep.subr.bf16.mxu0 0
    %393 = vmatpush1.bf16.xpose.msra.mxu0 0
    %394 = vmatprep.subr.bf16.mxu0 0
    %395 = vmatpush1.bf16.xpose.msra.mxu0 0
    %396 = vmatprep.subr.bf16.mxu0 0
    %397 = vmatpush1.bf16.xpose.msra.mxu0 0
    %398 = vmatprep.subr.bf16.mxu0 0
    %399 = vmatpush1.bf16.xpose.msra.mxu0 0
    %400 = vmatprep.subr.bf16.mxu0 0
    %401 = vmatpush1.bf16.xpose.msra.mxu0 0
    %402 = vmatprep.subr.bf16.mxu0 0
    %403 = vmatpush1.bf16.xpose.msra.mxu0 0
    %404 = vmatprep.subr.bf16.mxu0 0
    %405 = vmatpush1.bf16.xpose.msra.mxu0 0
    %406 = vmatprep.subr.bf16.mxu0 0
    %407 = vmatpush1.bf16.xpose.msra.mxu0 0
    %408 = vmatprep.mubr.bf16.mxu0 0
    %409 = vmatmul.mubr.bf16.gmra.mrb[0].mxu0 %v371
    %v410 = vpop.f32.mrb[0].mxu0
    %v411 = vadd.f32 0.0, %v410
    %v412 = vpop.f32.mrb[0].mxu0
    %v413 = vpop.f32.mrb[0].mxu0
    %v414 = vpop.f32.mrb[0].mxu0
    %415 = vdwg.mxu0
    %417 = vrot.lane.b32.xlu0 %v215, 96
    %v418 = vpop.permute.xlu0 %417
    %v420 = vsel %vm222, %v215, 0
    %v423 = vsel %vm222, %v418, 0
    %425 = vmatprep.subr.bf16.mxu0 0
    %426 = vmatpush1.bf16.xpose.msra.mxu0 %v423
    %427 = vmatprep.subr.bf16.mxu0 0
    %428 = vmatpush1.bf16.xpose.msra.mxu0 0
    %429 = vmatprep.subr.bf16.mxu0 0
    %430 = vmatpush1.bf16.xpose.msra.mxu0 0
    %431 = vmatprep.subr.bf16.mxu0 0
    %432 = vmatpush1.bf16.xpose.msra.mxu0 0
    %433 = vmatprep.subr.bf16.mxu0 0
    %434 = vmatpush1.bf16.xpose.msra.mxu0 0
    %435 = vmatprep.subr.bf16.mxu0 0
    %436 = vmatpush1.bf16.xpose.msra.mxu0 0
    %437 = vmatprep.subr.bf16.mxu0 0
    %438 = vmatpush1.bf16.xpose.msra.mxu0 0
    %439 = vmatprep.subr.bf16.mxu0 0
    %440 = vmatpush1.bf16.xpose.msra.mxu0 0
    %441 = vmatprep.subr.bf16.mxu0 0
    %442 = vmatpush1.bf16.xpose.msra.mxu0 0
    %443 = vmatprep.subr.bf16.mxu0 0
    %444 = vmatpush1.bf16.xpose.msra.mxu0 0
    %445 = vmatprep.subr.bf16.mxu0 0
    %446 = vmatpush1.bf16.xpose.msra.mxu0 0
    %447 = vmatprep.subr.bf16.mxu0 0
    %448 = vmatpush1.bf16.xpose.msra.mxu0 0
    %449 = vmatprep.subr.bf16.mxu0 0
    %450 = vmatpush1.bf16.xpose.msra.mxu0 0
    %451 = vmatprep.subr.bf16.mxu0 0
    %452 = vmatpush1.bf16.xpose.msra.mxu0 0
    %453 = vmatprep.subr.bf16.mxu0 0
    %454 = vmatpush1.bf16.xpose.msra.mxu0 0
    %455 = vmatprep.subr.bf16.mxu0 0
    %456 = vmatpush1.bf16.xpose.msra.mxu0 0
    %457 = vmatprep.mubr.bf16.mxu0 0
    %458 = vmatmul.mubr.bf16.gmra.mrb[0].mxu0 %v420
    %v459 = vpop.f32.mrb[0].mxu0
    %v460 = vadd.f32 0.0, %v459
    %v461 = vpop.f32.mrb[0].mxu0
    %v462 = vpop.f32.mrb[0].mxu0
    %v463 = vpop.f32.mrb[0].mxu0
    %464 = vdwg.mxu0
    %466 = vrot.lane.b32.xlu0 %v216, 96
    %v467 = vpop.permute.xlu0 %466
    %v469 = vsel %vm222, %v216, 0
    %v472 = vsel %vm222, %v467, 0
    %474 = vmatprep.subr.bf16.mxu0 0
    %475 = vmatpush1.bf16.xpose.msra.mxu0 %v472
    %476 = vmatprep.subr.bf16.mxu0 0
    %477 = vmatpush1.bf16.xpose.msra.mxu0 0
    %478 = vmatprep.subr.bf16.mxu0 0
    %479 = vmatpush1.bf16.xpose.msra.mxu0 0
    %480 = vmatprep.subr.bf16.mxu0 0
    %481 = vmatpush1.bf16.xpose.msra.mxu0 0
    %482 = vmatprep.subr.bf16.mxu0 0
    %483 = vmatpush1.bf16.xpose.msra.mxu0 0
    %484 = vmatprep.subr.bf16.mxu0 0
    %485 = vmatpush1.bf16.xpose.msra.mxu0 0
    %486 = vmatprep.subr.bf16.mxu0 0
    %487 = vmatpush1.bf16.xpose.msra.mxu0 0
    %488 = vmatprep.subr.bf16.mxu0 0
    %489 = vmatpush1.bf16.xpose.msra.mxu0 0
    %490 = vmatprep.subr.bf16.mxu0 0
    %491 = vmatpush1.bf16.xpose.msra.mxu0 0
    %492 = vmatprep.subr.bf16.mxu0 0
    %493 = vmatpush1.bf16.xpose.msra.mxu0 0
    %494 = vmatprep.subr.bf16.mxu0 0
    %495 = vmatpush1.bf16.xpose.msra.mxu0 0
    %496 = vmatprep.subr.bf16.mxu0 0
    %497 = vmatpush1.bf16.xpose.msra.mxu0 0
    %498 = vmatprep.subr.bf16.mxu0 0
    %499 = vmatpush1.bf16.xpose.msra.mxu0 0
    %500 = vmatprep.subr.bf16.mxu0 0
    %501 = vmatpush1.bf16.xpose.msra.mxu0 0
    %502 = vmatprep.subr.bf16.mxu0 0
    %503 = vmatpush1.bf16.xpose.msra.mxu0 0
    %504 = vmatprep.subr.bf16.mxu0 0
    %505 = vmatpush1.bf16.xpose.msra.mxu0 0
    %506 = vmatprep.mubr.bf16.mxu0 0
    %507 = vmatmul.mubr.bf16.gmra.mrb[0].mxu0 %v469
    %v508 = vpop.f32.mrb[0].mxu0
    %v509 = vadd.f32 0.0, %v508
    %v510 = vpop.f32.mrb[0].mxu0
    %v511 = vpop.f32.mrb[0].mxu0
    %v512 = vpop.f32.mrb[0].mxu0
    %513 = vdwg.mxu0
    %515 = vrot.lane.b32.xlu0 %v217, 96
    %v516 = vpop.permute.xlu0 %515
    %v518 = vsel %vm222, %v217, 0
    %v521 = vsel %vm222, %v516, 0
    %523 = vmatprep.subr.bf16.mxu0 0
    %524 = vmatpush1.bf16.xpose.msra.mxu0 %v521
    %525 = vmatprep.subr.bf16.mxu0 0
    %526 = vmatpush1.bf16.xpose.msra.mxu0 0
    %527 = vmatprep.subr.bf16.mxu0 0
    %528 = vmatpush1.bf16.xpose.msra.mxu0 0
    %529 = vmatprep.subr.bf16.mxu0 0
    %530 = vmatpush1.bf16.xpose.msra.mxu0 0
    %531 = vmatprep.subr.bf16.mxu0 0
    %532 = vmatpush1.bf16.xpose.msra.mxu0 0
    %533 = vmatprep.subr.bf16.mxu0 0
    %534 = vmatpush1.bf16.xpose.msra.mxu0 0
    %535 = vmatprep.subr.bf16.mxu0 0
    %536 = vmatpush1.bf16.xpose.msra.mxu0 0
    %537 = vmatprep.subr.bf16.mxu0 0
    %538 = vmatpush1.bf16.xpose.msra.mxu0 0
    %539 = vmatprep.subr.bf16.mxu0 0
    %540 = vmatpush1.bf16.xpose.msra.mxu0 0
    %541 = vmatprep.subr.bf16.mxu0 0
    %542 = vmatpush1.bf16.xpose.msra.mxu0 0
    %543 = vmatprep.subr.bf16.mxu0 0
    %544 = vmatpush1.bf16.xpose.msra.mxu0 0
    %545 = vmatprep.subr.bf16.mxu0 0
    %546 = vmatpush1.bf16.xpose.msra.mxu0 0
    %547 = vmatprep.subr.bf16.mxu0 0
    %548 = vmatpush1.bf16.xpose.msra.mxu0 0
    %549 = vmatprep.subr.bf16.mxu0 0
    %550 = vmatpush1.bf16.xpose.msra.mxu0 0
    %551 = vmatprep.subr.bf16.mxu0 0
    %552 = vmatpush1.bf16.xpose.msra.mxu0 0
    %553 = vmatprep.subr.bf16.mxu0 0
    %554 = vmatpush1.bf16.xpose.msra.mxu0 0
    %555 = vmatprep.mubr.bf16.mxu0 0
    %556 = vmatmul.mubr.bf16.gmra.mrb[0].mxu0 %v518
    %v557 = vpop.f32.mrb[0].mxu0
    %v558 = vadd.f32 0.0, %v557
    %v559 = vpop.f32.mrb[0].mxu0
    %v560 = vpop.f32.mrb[0].mxu0
    %v561 = vpop.f32.mrb[0].mxu0
    %562 = vdwg.mxu0
    %564 = vrot.lane.b32.xlu0 %v218, 96
    %v565 = vpop.permute.xlu0 %564
    %v567 = vsel %vm222, %v218, 0
    %v570 = vsel %vm222, %v565, 0
    %572 = vmatprep.subr.bf16.mxu0 0
    %573 = vmatpush1.bf16.xpose.msra.mxu0 %v570
    %574 = vmatprep.subr.bf16.mxu0 0
    %575 = vmatpush1.bf16.xpose.msra.mxu0 0
    %576 = vmatprep.subr.bf16.mxu0 0
    %577 = vmatpush1.bf16.xpose.msra.mxu0 0
    %578 = vmatprep.subr.bf16.mxu0 0
    %579 = vmatpush1.bf16.xpose.msra.mxu0 0
    %580 = vmatprep.subr.bf16.mxu0 0
    %581 = vmatpush1.bf16.xpose.msra.mxu0 0
    %582 = vmatprep.subr.bf16.mxu0 0
    %583 = vmatpush1.bf16.xpose.msra.mxu0 0
    %584 = vmatprep.subr.bf16.mxu0 0
    %585 = vmatpush1.bf16.xpose.msra.mxu0 0
    %586 = vmatprep.subr.bf16.mxu0 0
    %587 = vmatpush1.bf16.xpose.msra.mxu0 0
    %588 = vmatprep.subr.bf16.mxu0 0
    %589 = vmatpush1.bf16.xpose.msra.mxu0 0
    %590 = vmatprep.subr.bf16.mxu0 0
    %591 = vmatpush1.bf16.xpose.msra.mxu0 0
    %592 = vmatprep.subr.bf16.mxu0 0
    %593 = vmatpush1.bf16.xpose.msra.mxu0 0
    %594 = vmatprep.subr.bf16.mxu0 0
    %595 = vmatpush1.bf16.xpose.msra.mxu0 0
    %596 = vmatprep.subr.bf16.mxu0 0
    %597 = vmatpush1.bf16.xpose.msra.mxu0 0
    %598 = vmatprep.subr.bf16.mxu0 0
    %599 = vmatpush1.bf16.xpose.msra.mxu0 0
    %600 = vmatprep.subr.bf16.mxu0 0
    %601 = vmatpush1.bf16.xpose.msra.mxu0 0
    %602 = vmatprep.subr.bf16.mxu0 0
    %603 = vmatpush1.bf16.xpose.msra.mxu0 0
    %604 = vmatprep.mubr.bf16.mxu0 0
    %605 = vmatmul.mubr.bf16.gmra.mrb[0].mxu0 %v567
    %v606 = vpop.f32.mrb[0].mxu0
    %v607 = vadd.f32 0.0, %v606
    %v608 = vpop.f32.mrb[0].mxu0
    %v609 = vpop.f32.mrb[0].mxu0
    %v610 = vpop.f32.mrb[0].mxu0
    %611 = vdwg.mxu0
    %v612 = vmul.f32 %v264, 0.35355338
    %v613 = vmul.f32 %v313, 0.35355338
    %v614 = vmul.f32 %v362, 0.35355338
    %v615 = vmul.f32 %v411, 0.35355338
    %v616 = vmul.f32 %v460, 0.35355338
    %v617 = vmul.f32 %v509, 0.35355338
    %v618 = vmul.f32 %v558, 0.35355338
    %v619 = vmul.f32 %v607, 0.35355338
    %v620 = vlaneseq
    %v621 = vshrl.u32 %v620, 7
    %v622 = vsub.s32 0, %v621
    %v623 = vrot.slane %v75, %v622
    %v624 = vlaneseq
    %v625 = vshrl.u32 %v624, 7
    %v626 = vsub.s32 0, %v625
    %v627 = vrot.slane %v82, %v626
    %v630 = vadd.f32 %v612, %v623
    %v631 = vadd.f32 %v613, %v627
    %v632 = vadd.f32 %v614, %v623
    %v633 = vadd.f32 %v615, %v627
    %v634 = vadd.f32 %v616, %v623
    %v635 = vadd.f32 %v617, %v627
    %v636 = vadd.f32 %v618, %v623
    %v637 = vadd.f32 %v619, %v627
    %v638 = vsel %vm222, %v630, -inf
    %639 = vmax.xlane.f32.xlu0 %v638
    %v640 = vpop.xlane.xlu0 %639
    %v641 = vsel %vm222, %v631, -inf
    %642 = vmax.xlane.f32.xlu0 %v641
    %v643 = vpop.xlane.xlu0 %642
    %v644 = vsel %vm222, %v632, -inf
    %645 = vmax.xlane.f32.xlu0 %v644
    %v646 = vpop.xlane.xlu0 %645
    %v647 = vsel %vm222, %v633, -inf
    %648 = vmax.xlane.f32.xlu0 %v647
    %v649 = vpop.xlane.xlu0 %648
    %v650 = vsel %vm222, %v634, -inf
    %651 = vmax.xlane.f32.xlu0 %v650
    %v652 = vpop.xlane.xlu0 %651
    %v653 = vsel %vm222, %v635, -inf
    %654 = vmax.xlane.f32.xlu0 %v653
    %v655 = vpop.xlane.xlu0 %654
    %v656 = vsel %vm222, %v636, -inf
    %657 = vmax.xlane.f32.xlu0 %v656
    %v658 = vpop.xlane.xlu0 %657
    %v659 = vsel %vm222, %v637, -inf
    %660 = vmax.xlane.f32.xlu0 %v659
    %v661 = vpop.xlane.xlu0 %660
    %v662 = vsub.f32 %v630, %v640
    %v663 = vsub.f32 %v631, %v643
    %v664 = vsub.f32 %v632, %v646
    %v665 = vsub.f32 %v633, %v649
    %v666 = vsub.f32 %v634, %v652
    %v667 = vsub.f32 %v635, %v655
    %v668 = vsub.f32 %v636, %v658
    %v669 = vsub.f32 %v637, %v661
    %v670 = vmul.f32 %v662, 1.442695
    %v671 = vpow.pop %v670
    %v672 = vmul.f32 %v663, 1.442695
    %v673 = vpow.pop %v672
    %v674 = vmul.f32 %v664, 1.442695
    %v675 = vpow.pop %v674
    %v676 = vmul.f32 %v665, 1.442695
    %v677 = vpow.pop %v676
    %v678 = vmul.f32 %v666, 1.442695
    %v679 = vpow.pop %v678
    %v680 = vmul.f32 %v667, 1.442695
    %v681 = vpow.pop %v680
    %v682 = vmul.f32 %v668, 1.442695
    %v683 = vpow.pop %v682
    %v684 = vmul.f32 %v669, 1.442695
    %v685 = vpow.pop %v684
    %v686 = vsel %vm222, %v671, 0.0
    %687 = vadd.xlane.f32.xlu0 %v686
    %v688 = vpop.xlane.xlu0 %687
    %v689 = vsel %vm222, %v673, 0.0
    %690 = vadd.xlane.f32.xlu0 %v689
    %v691 = vpop.xlane.xlu0 %690
    %v692 = vsel %vm222, %v675, 0.0
    %693 = vadd.xlane.f32.xlu0 %v692
    %v694 = vpop.xlane.xlu0 %693
    %v695 = vsel %vm222, %v677, 0.0
    %696 = vadd.xlane.f32.xlu0 %v695
    %v697 = vpop.xlane.xlu0 %696
    %v698 = vsel %vm222, %v679, 0.0
    %699 = vadd.xlane.f32.xlu0 %v698
    %v700 = vpop.xlane.xlu0 %699
    %v701 = vsel %vm222, %v681, 0.0
    %702 = vadd.xlane.f32.xlu0 %v701
    %v703 = vpop.xlane.xlu0 %702
    %v704 = vsel %vm222, %v683, 0.0
    %705 = vadd.xlane.f32.xlu0 %v704
    %v706 = vpop.xlane.xlu0 %705
    %v707 = vsel %vm222, %v685, 0.0
    %708 = vadd.xlane.f32.xlu0 %v707
    %v709 = vpop.xlane.xlu0 %708
    %v710 = vrcp.pop %v688
    %v711 = vrcp.pop %v691
    %v712 = vrcp.pop %v694
    %v713 = vrcp.pop %v697
    %v714 = vrcp.pop %v700
    %v715 = vrcp.pop %v703
    %v716 = vrcp.pop %v706
    %v717 = vrcp.pop %v709
    %v718 = vmul.f32 %v671, %v710
    %v719 = vmul.f32 %v673, %v711
    %v720 = vmul.f32 %v675, %v712
    %v721 = vmul.f32 %v677, %v713
    %v722 = vmul.f32 %v679, %v714
    %v723 = vmul.f32 %v681, %v715
    %v724 = vmul.f32 %v683, %v716
    %v725 = vmul.f32 %v685, %v717
    %v726 = vpack.c.bf16 %v718, %v718
    %v727 = vpack.c.bf16 %v719, %v719
    %v728 = vpack.c.bf16 %v720, %v720
    %v729 = vpack.c.bf16 %v721, %v721
    %v730 = vpack.c.bf16 %v722, %v722
    %v731 = vpack.c.bf16 %v723, %v723
    %v732 = vpack.c.bf16 %v724, %v724
    %v733 = vpack.c.bf16 %v725, %v725
    %734 = vrot.lane.b32.xlu0 %v211, 64
    %v735 = vpop.permute.xlu0 %734
    %v737 = vsel %vm222, %v726, 0
    %vm739 = vcmask 1043456
    %v741 = vsel %vm739, %v735, 0
    %743 = vmatprep.subr.bf16.mxu0 0
    %744 = vmatpush1.bf16.msra.mxu0 %v741
    %745 = vmatprep.subr.bf16.mxu0 0
    %746 = vmatpush1.bf16.msra.mxu0 0
    %747 = vmatprep.subr.bf16.mxu0 0
    %748 = vmatpush1.bf16.msra.mxu0 0
    %749 = vmatprep.subr.bf16.mxu0 0
    %750 = vmatpush1.bf16.msra.mxu0 0
    %751 = vmatprep.subr.bf16.mxu0 0
    %752 = vmatpush1.bf16.msra.mxu0 0
    %753 = vmatprep.subr.bf16.mxu0 0
    %754 = vmatpush1.bf16.msra.mxu0 0
    %755 = vmatprep.subr.bf16.mxu0 0
    %756 = vmatpush1.bf16.msra.mxu0 0
    %757 = vmatprep.subr.bf16.mxu0 0
    %758 = vmatpush1.bf16.msra.mxu0 0
    %759 = vmatprep.subr.bf16.mxu0 0
    %760 = vmatpush1.bf16.msra.mxu0 0
    %761 = vmatprep.subr.bf16.mxu0 0
    %762 = vmatpush1.bf16.msra.mxu0 0
    %763 = vmatprep.subr.bf16.mxu0 0
    %764 = vmatpush1.bf16.msra.mxu0 0
    %765 = vmatprep.subr.bf16.mxu0 0
    %766 = vmatpush1.bf16.msra.mxu0 0
    %767 = vmatprep.subr.bf16.mxu0 0
    %768 = vmatpush1.bf16.msra.mxu0 0
    %769 = vmatprep.subr.bf16.mxu0 0
    %770 = vmatpush1.bf16.msra.mxu0 0
    %771 = vmatprep.subr.bf16.mxu0 0
    %772 = vmatpush1.bf16.msra.mxu0 0
    %773 = vmatprep.subr.bf16.mxu0 0
    %774 = vmatpush1.bf16.msra.mxu0 0
    %775 = vmatprep.mubr.bf16.mxu0 0
    %776 = vmatmul.mubr.bf16.gmra.mrb[0].mxu0 %v737
    %v777 = vpop.f32.mrb[0].mxu0
    %v778 = vadd.f32 0.0, %v777
    %v779 = vpop.f32.mrb[0].mxu0
    %v780 = vpop.f32.mrb[0].mxu0
    %v781 = vpop.f32.mrb[0].mxu0
    %782 = vdwg.mxu0
    %783 = vrot.lane.b32.xlu0 %v212, 64
    %v784 = vpop.permute.xlu0 %783
    %v786 = vsel %vm222, %v727, 0
    %v789 = vsel %vm739, %v784, 0
    %791 = vmatprep.subr.bf16.mxu0 0
    %792 = vmatpush1.bf16.msra.mxu0 %v789
    %793 = vmatprep.subr.bf16.mxu0 0
    %794 = vmatpush1.bf16.msra.mxu0 0
    %795 = vmatprep.subr.bf16.mxu0 0
    %796 = vmatpush1.bf16.msra.mxu0 0
    %797 = vmatprep.subr.bf16.mxu0 0
    %798 = vmatpush1.bf16.msra.mxu0 0
    %799 = vmatprep.subr.bf16.mxu0 0
    %800 = vmatpush1.bf16.msra.mxu0 0
    %801 = vmatprep.subr.bf16.mxu0 0
    %802 = vmatpush1.bf16.msra.mxu0 0
    %803 = vmatprep.subr.bf16.mxu0 0
    %804 = vmatpush1.bf16.msra.mxu0 0
    %805 = vmatprep.subr.bf16.mxu0 0
    %806 = vmatpush1.bf16.msra.mxu0 0
    %807 = vmatprep.subr.bf16.mxu0 0
    %808 = vmatpush1.bf16.msra.mxu0 0
    %809 = vmatprep.subr.bf16.mxu0 0
    %810 = vmatpush1.bf16.msra.mxu0 0
    %811 = vmatprep.subr.bf16.mxu0 0
    %812 = vmatpush1.bf16.msra.mxu0 0
    %813 = vmatprep.subr.bf16.mxu0 0
    %814 = vmatpush1.bf16.msra.mxu0 0
    %815 = vmatprep.subr.bf16.mxu0 0
    %816 = vmatpush1.bf16.msra.mxu0 0
    %817 = vmatprep.subr.bf16.mxu0 0
    %818 = vmatpush1.bf16.msra.mxu0 0
    %819 = vmatprep.subr.bf16.mxu0 0
    %820 = vmatpush1.bf16.msra.mxu0 0
    %821 = vmatprep.subr.bf16.mxu0 0
    %822 = vmatpush1.bf16.msra.mxu0 0
    %823 = vmatprep.mubr.bf16.mxu0 0
    %824 = vmatmul.mubr.bf16.gmra.mrb[0].mxu0 %v786
    %v825 = vpop.f32.mrb[0].mxu0
    %v826 = vadd.f32 0.0, %v825
    %v827 = vpop.f32.mrb[0].mxu0
    %v828 = vpop.f32.mrb[0].mxu0
    %v829 = vpop.f32.mrb[0].mxu0
    %830 = vdwg.mxu0
    %831 = vrot.lane.b32.xlu0 %v213, 64
    %v832 = vpop.permute.xlu0 %831
    %v834 = vsel %vm222, %v728, 0
    %v837 = vsel %vm739, %v832, 0
    %839 = vmatprep.subr.bf16.mxu0 0
    %840 = vmatpush1.bf16.msra.mxu0 %v837
    %841 = vmatprep.subr.bf16.mxu0 0
    %842 = vmatpush1.bf16.msra.mxu0 0
    %843 = vmatprep.subr.bf16.mxu0 0
    %844 = vmatpush1.bf16.msra.mxu0 0
    %845 = vmatprep.subr.bf16.mxu0 0
    %846 = vmatpush1.bf16.msra.mxu0 0
    %847 = vmatprep.subr.bf16.mxu0 0
    %848 = vmatpush1.bf16.msra.mxu0 0
    %849 = vmatprep.subr.bf16.mxu0 0
    %850 = vmatpush1.bf16.msra.mxu0 0
    %851 = vmatprep.subr.bf16.mxu0 0
    %852 = vmatpush1.bf16.msra.mxu0 0
    %853 = vmatprep.subr.bf16.mxu0 0
    %854 = vmatpush1.bf16.msra.mxu0 0
    %855 = vmatprep.subr.bf16.mxu0 0
    %856 = vmatpush1.bf16.msra.mxu0 0
    %857 = vmatprep.subr.bf16.mxu0 0
    %858 = vmatpush1.bf16.msra.mxu0 0
    %859 = vmatprep.subr.bf16.mxu0 0
    %860 = vmatpush1.bf16.msra.mxu0 0
    %861 = vmatprep.subr.bf16.mxu0 0
    %862 = vmatpush1.bf16.msra.mxu0 0
    %863 = vmatprep.subr.bf16.mxu0 0
    %864 = vmatpush1.bf16.msra.mxu0 0
    %865 = vmatprep.subr.bf16.mxu0 0
    %866 = vmatpush1.bf16.msra.mxu0 0
    %867 = vmatprep.subr.bf16.mxu0 0
    %868 = vmatpush1.bf16.msra.mxu0 0
    %869 = vmatprep.subr.bf16.mxu0 0
    %870 = vmatpush1.bf16.msra.mxu0 0
    %871 = vmatprep.mubr.bf16.mxu0 0
    %872 = vmatmul.mubr.bf16.gmra.mrb[0].mxu0 %v834
    %v873 = vpop.f32.mrb[0].mxu0
    %v874 = vadd.f32 0.0, %v873
    %v875 = vpop.f32.mrb[0].mxu0
    %v876 = vpop.f32.mrb[0].mxu0
    %v877 = vpop.f32.mrb[0].mxu0
    %878 = vdwg.mxu0
    %879 = vrot.lane.b32.xlu0 %v214, 64
    %v880 = vpop.permute.xlu0 %879
    %v882 = vsel %vm222, %v729, 0
    %v885 = vsel %vm739, %v880, 0
    %887 = vmatprep.subr.bf16.mxu0 0
    %888 = vmatpush1.bf16.msra.mxu0 %v885
    %889 = vmatprep.subr.bf16.mxu0 0
    %890 = vmatpush1.bf16.msra.mxu0 0
    %891 = vmatprep.subr.bf16.mxu0 0
    %892 = vmatpush1.bf16.msra.mxu0 0
    %893 = vmatprep.subr.bf16.mxu0 0
    %894 = vmatpush1.bf16.msra.mxu0 0
    %895 = vmatprep.subr.bf16.mxu0 0
    %896 = vmatpush1.bf16.msra.mxu0 0
    %897 = vmatprep.subr.bf16.mxu0 0
    %898 = vmatpush1.bf16.msra.mxu0 0
    %899 = vmatprep.subr.bf16.mxu0 0
    %900 = vmatpush1.bf16.msra.mxu0 0
    %901 = vmatprep.subr.bf16.mxu0 0
    %902 = vmatpush1.bf16.msra.mxu0 0
    %903 = vmatprep.subr.bf16.mxu0 0
    %904 = vmatpush1.bf16.msra.mxu0 0
    %905 = vmatprep.subr.bf16.mxu0 0
    %906 = vmatpush1.bf16.msra.mxu0 0
    %907 = vmatprep.subr.bf16.mxu0 0
    %908 = vmatpush1.bf16.msra.mxu0 0
    %909 = vmatprep.subr.bf16.mxu0 0
    %910 = vmatpush1.bf16.msra.mxu0 0
    %911 = vmatprep.subr.bf16.mxu0 0
    %912 = vmatpush1.bf16.msra.mxu0 0
    %913 = vmatprep.subr.bf16.mxu0 0
    %914 = vmatpush1.bf16.msra.mxu0 0
    %915 = vmatprep.subr.bf16.mxu0 0
    %916 = vmatpush1.bf16.msra.mxu0 0
    %917 = vmatprep.subr.bf16.mxu0 0
    %918 = vmatpush1.bf16.msra.mxu0 0
    %919 = vmatprep.mubr.bf16.mxu0 0
    %920 = vmatmul.mubr.bf16.gmra.mrb[0].mxu0 %v882
    %v921 = vpop.f32.mrb[0].mxu0
    %v922 = vadd.f32 0.0, %v921
    %v923 = vpop.f32.mrb[0].mxu0
    %v924 = vpop.f32.mrb[0].mxu0
    %v925 = vpop.f32.mrb[0].mxu0
    %926 = vdwg.mxu0
    %927 = vrot.lane.b32.xlu0 %v215, 64
    %v928 = vpop.permute.xlu0 %927
    %v930 = vsel %vm222, %v730, 0
    %v933 = vsel %vm739, %v928, 0
    %935 = vmatprep.subr.bf16.mxu0 0
    %936 = vmatpush1.bf16.msra.mxu0 %v933
    %937 = vmatprep.subr.bf16.mxu0 0
    %938 = vmatpush1.bf16.msra.mxu0 0
    %939 = vmatprep.subr.bf16.mxu0 0
    %940 = vmatpush1.bf16.msra.mxu0 0
    %941 = vmatprep.subr.bf16.mxu0 0
    %942 = vmatpush1.bf16.msra.mxu0 0
    %943 = vmatprep.subr.bf16.mxu0 0
    %944 = vmatpush1.bf16.msra.mxu0 0
    %945 = vmatprep.subr.bf16.mxu0 0
    %946 = vmatpush1.bf16.msra.mxu0 0
    %947 = vmatprep.subr.bf16.mxu0 0
    %948 = vmatpush1.bf16.msra.mxu0 0
    %949 = vmatprep.subr.bf16.mxu0 0
    %950 = vmatpush1.bf16.msra.mxu0 0
    %951 = vmatprep.subr.bf16.mxu0 0
    %952 = vmatpush1.bf16.msra.mxu0 0
    %953 = vmatprep.subr.bf16.mxu0 0
    %954 = vmatpush1.bf16.msra.mxu0 0
    %955 = vmatprep.subr.bf16.mxu0 0
    %956 = vmatpush1.bf16.msra.mxu0 0
    %957 = vmatprep.subr.bf16.mxu0 0
    %958 = vmatpush1.bf16.msra.mxu0 0
    %959 = vmatprep.subr.bf16.mxu0 0
    %960 = vmatpush1.bf16.msra.mxu0 0
    %961 = vmatprep.subr.bf16.mxu0 0
    %962 = vmatpush1.bf16.msra.mxu0 0
    %963 = vmatprep.subr.bf16.mxu0 0
    %964 = vmatpush1.bf16.msra.mxu0 0
    %965 = vmatprep.subr.bf16.mxu0 0
    %966 = vmatpush1.bf16.msra.mxu0 0
    %967 = vmatprep.mubr.bf16.mxu0 0
    %968 = vmatmul.mubr.bf16.gmra.mrb[0].mxu0 %v930
    %v969 = vpop.f32.mrb[0].mxu0
    %v970 = vadd.f32 0.0, %v969
    %v971 = vpop.f32.mrb[0].mxu0
    %v972 = vpop.f32.mrb[0].mxu0
    %v973 = vpop.f32.mrb[0].mxu0
    %974 = vdwg.mxu0
    %975 = vrot.lane.b32.xlu0 %v216, 64
    %v976 = vpop.permute.xlu0 %975
    %v978 = vsel %vm222, %v731, 0
    %v981 = vsel %vm739, %v976, 0
    %983 = vmatprep.subr.bf16.mxu0 0
    %984 = vmatpush1.bf16.msra.mxu0 %v981
    %985 = vmatprep.subr.bf16.mxu0 0
    %986 = vmatpush1.bf16.msra.mxu0 0
    %987 = vmatprep.subr.bf16.mxu0 0
    %988 = vmatpush1.bf16.msra.mxu0 0
    %989 = vmatprep.subr.bf16.mxu0 0
    %990 = vmatpush1.bf16.msra.mxu0 0
    %991 = vmatprep.subr.bf16.mxu0 0
    %992 = vmatpush1.bf16.msra.mxu0 0
    %993 = vmatprep.subr.bf16.mxu0 0
    %994 = vmatpush1.bf16.msra.mxu0 0
    %995 = vmatprep.subr.bf16.mxu0 0
    %996 = vmatpush1.bf16.msra.mxu0 0
    %997 = vmatprep.subr.bf16.mxu0 0
    %998 = vmatpush1.bf16.msra.mxu0 0
    %999 = vmatprep.subr.bf16.mxu0 0
    %1000 = vmatpush1.bf16.msra.mxu0 0
    %1001 = vmatprep.subr.bf16.mxu0 0
    %1002 = vmatpush1.bf16.msra.mxu0 0
    %1003 = vmatprep.subr.bf16.mxu0 0
    %1004 = vmatpush1.bf16.msra.mxu0 0
    %1005 = vmatprep.subr.bf16.mxu0 0
    %1006 = vmatpush1.bf16.msra.mxu0 0
    %1007 = vmatprep.subr.bf16.mxu0 0
    %1008 = vmatpush1.bf16.msra.mxu0 0
    %1009 = vmatprep.subr.bf16.mxu0 0
    %1010 = vmatpush1.bf16.msra.mxu0 0
    %1011 = vmatprep.subr.bf16.mxu0 0
    %1012 = vmatpush1.bf16.msra.mxu0 0
    %1013 = vmatprep.subr.bf16.mxu0 0
    %1014 = vmatpush1.bf16.msra.mxu0 0
    %1015 = vmatprep.mubr.bf16.mxu0 0
    %1016 = vmatmul.mubr.bf16.gmra.mrb[0].mxu0 %v978
    %v1017 = vpop.f32.mrb[0].mxu0
    %v1018 = vadd.f32 0.0, %v1017
    %v1019 = vpop.f32.mrb[0].mxu0
    %v1020 = vpop.f32.mrb[0].mxu0
    %v1021 = vpop.f32.mrb[0].mxu0
    %1022 = vdwg.mxu0
    %1023 = vrot.lane.b32.xlu0 %v217, 64
    %v1024 = vpop.permute.xlu0 %1023
    %v1026 = vsel %vm222, %v732, 0
    %v1029 = vsel %vm739, %v1024, 0
    %1031 = vmatprep.subr.bf16.mxu0 0
    %1032 = vmatpush1.bf16.msra.mxu0 %v1029
    %1033 = vmatprep.subr.bf16.mxu0 0
    %1034 = vmatpush1.bf16.msra.mxu0 0
    %1035 = vmatprep.subr.bf16.mxu0 0
    %1036 = vmatpush1.bf16.msra.mxu0 0
    %1037 = vmatprep.subr.bf16.mxu0 0
    %1038 = vmatpush1.bf16.msra.mxu0 0
    %1039 = vmatprep.subr.bf16.mxu0 0
    %1040 = vmatpush1.bf16.msra.mxu0 0
    %1041 = vmatprep.subr.bf16.mxu0 0
    %1042 = vmatpush1.bf16.msra.mxu0 0
    %1043 = vmatprep.subr.bf16.mxu0 0
    %1044 = vmatpush1.bf16.msra.mxu0 0
    %1045 = vmatprep.subr.bf16.mxu0 0
    %1046 = vmatpush1.bf16.msra.mxu0 0
    %1047 = vmatprep.subr.bf16.mxu0 0
    %1048 = vmatpush1.bf16.msra.mxu0 0
    %1049 = vmatprep.subr.bf16.mxu0 0
    %1050 = vmatpush1.bf16.msra.mxu0 0
    %1051 = vmatprep.subr.bf16.mxu0 0
    %1052 = vmatpush1.bf16.msra.mxu0 0
    %1053 = vmatprep.subr.bf16.mxu0 0
    %1054 = vmatpush1.bf16.msra.mxu0 0
    %1055 = vmatprep.subr.bf16.mxu0 0
    %1056 = vmatpush1.bf16.msra.mxu0 0
    %1057 = vmatprep.subr.bf16.mxu0 0
    %1058 = vmatpush1.bf16.msra.mxu0 0
    %1059 = vmatprep.subr.bf16.mxu0 0
    %1060 = vmatpush1.bf16.msra.mxu0 0
    %1061 = vmatprep.subr.bf16.mxu0 0
    %1062 = vmatpush1.bf16.msra.mxu0 0
    %1063 = vmatprep.mubr.bf16.mxu0 0
    %1064 = vmatmul.mubr.bf16.gmra.mrb[0].mxu0 %v1026
    %v1065 = vpop.f32.mrb[0].mxu0
    %v1066 = vadd.f32 0.0, %v1065
    %v1067 = vpop.f32.mrb[0].mxu0
    %v1068 = vpop.f32.mrb[0].mxu0
    %v1069 = vpop.f32.mrb[0].mxu0
    %1070 = vdwg.mxu0
    %1071 = vrot.lane.b32.xlu0 %v218, 64
    %v1072 = vpop.permute.xlu0 %1071
    %v1074 = vsel %vm222, %v733, 0
    %v1077 = vsel %vm739, %v1072, 0
    %1079 = vmatprep.subr.bf16.mxu0 0
    %1080 = vmatpush1.bf16.msra.mxu0 %v1077
    %1081 = vmatprep.subr.bf16.mxu0 0
    %1082 = vmatpush1.bf16.msra.mxu0 0
    %1083 = vmatprep.subr.bf16.mxu0 0
    %1084 = vmatpush1.bf16.msra.mxu0 0
    %1085 = vmatprep.subr.bf16.mxu0 0
    %1086 = vmatpush1.bf16.msra.mxu0 0
    %1087 = vmatprep.subr.bf16.mxu0 0
    %1088 = vmatpush1.bf16.msra.mxu0 0
    %1089 = vmatprep.subr.bf16.mxu0 0
    %1090 = vmatpush1.bf16.msra.mxu0 0
    %1091 = vmatprep.subr.bf16.mxu0 0
    %1092 = vmatpush1.bf16.msra.mxu0 0
    %1093 = vmatprep.subr.bf16.mxu0 0
    %1094 = vmatpush1.bf16.msra.mxu0 0
    %1095 = vmatprep.subr.bf16.mxu0 0
    %1096 = vmatpush1.bf16.msra.mxu0 0
    %1097 = vmatprep.subr.bf16.mxu0 0
    %1098 = vmatpush1.bf16.msra.mxu0 0
    %1099 = vmatprep.subr.bf16.mxu0 0
    %1100 = vmatpush1.bf16.msra.mxu0 0
    %1101 = vmatprep.subr.bf16.mxu0 0
    %1102 = vmatpush1.bf16.msra.mxu0 0
    %1103 = vmatprep.subr.bf16.mxu0 0
    %1104 = vmatpush1.bf16.msra.mxu0 0
    %1105 = vmatprep.subr.bf16.mxu0 0
    %1106 = vmatpush1.bf16.msra.mxu0 0
    %1107 = vmatprep.subr.bf16.mxu0 0
    %1108 = vmatpush1.bf16.msra.mxu0 0
    %1109 = vmatprep.subr.bf16.mxu0 0
    %1110 = vmatpush1.bf16.msra.mxu0 0
    %1111 = vmatprep.mubr.bf16.mxu0 0
    %1112 = vmatmul.mubr.bf16.gmra.mrb[0].mxu0 %v1074
    %v1113 = vpop.f32.mrb[0].mxu0
    %v1114 = vadd.f32 0.0, %v1113
    %v1115 = vpop.f32.mrb[0].mxu0
    %v1116 = vpop.f32.mrb[0].mxu0
    %v1117 = vpop.f32.mrb[0].mxu0
    %1118 = vdwg.mxu0
    %1121 = vrot.lane.b32.xlu0 %v874, 8
    %v1122 = vpop.permute.xlu0 %1121
    %1123 = vrot.lane.b32.xlu0 %v922, 8
    %v1124 = vpop.permute.xlu0 %1123
    %1129 = vrot.lane.b32.xlu0 %v970, 16
    %v1130 = vpop.permute.xlu0 %1129
    %1131 = vrot.lane.b32.xlu0 %v1018, 16
    %v1132 = vpop.permute.xlu0 %1131
    %1137 = vrot.lane.b32.xlu0 %v1066, 24
    %v1138 = vpop.permute.xlu0 %1137
    %1139 = vrot.lane.b32.xlu0 %v1114, 24
    %v1140 = vpop.permute.xlu0 %1139
    %v1143 = vsel %vm222, %v778, %v1122
    %v1144 = vsel %vm222, %v826, %v1124
    %vm1145 = vcmask 130048
    %v1146 = vsel %vm1145, %v1143, %v1130
    %v1147 = vsel %vm1145, %v1144, %v1132
    %vm1148 = vcmask 195584
    %v1149 = vsel %vm1148, %v1146, %v1138
    %v1150 = vsel %vm1148, %v1147, %v1140
    %v1151 = vpack.c.bf16 %v1150, %v1149
    %v1152 = vld [vmem:[%s3] sm:$0xf]
    %v1153 = vld [vmem:[%s3 + $0x4] sm:$0xf]
    %v1154 = vld [vmem:[%s3 + $0x8] sm:$0xf]
    %v1155 = vld [vmem:[%s3 + $0xc] sm:$0xf]
    %v1156 = vlaneseq
    %v1157 = vshrl.u32 %v1156, 7
    %v1158 = vsub.s32 1, %v1157
    %v1159 = vrot.slane %v125, %v1158
    %v1164 = vunpack.c.l.b16 %v1152
    %v1165 = vunpack.c.l.b16 %v1153
    %v1166 = vunpack.c.l.b16 %v1154
    %v1167 = vunpack.c.l.b16 %v1155
    %v1168 = vpack.c.b16 %v1165, %v1164
    %v1169 = vpack.c.b16 %v1167, %v1166
    %v1173 = vsel %vm85, %v1151, 0
    %1175 = vmatprep.subr.bf16.mxu0 0
    %1176 = vmatpush1.bf16.msra.mxu0 %v1168
    %1177 = vmatprep.subr.bf16.mxu0 0
    %1178 = vmatpush1.bf16.msra.mxu0 %v1169
    %1179 = vmatprep.subr.bf16.mxu0 0
    %1180 = vmatpush1.bf16.msra.mxu0 0
    %1181 = vmatprep.subr.bf16.mxu0 0
    %1182 = vmatpush1.bf16.msra.mxu0 0
    %1183 = vmatprep.subr.bf16.mxu0 0
    %1184 = vmatpush1.bf16.msra.mxu0 0
    %1185 = vmatprep.subr.bf16.mxu0 0
    %1186 = vmatpush1.bf16.msra.mxu0 0
    %1187 = vmatprep.subr.bf16.mxu0 0
    %1188 = vmatpush1.bf16.msra.mxu0 0
    %1189 = vmatprep.subr.bf16.mxu0 0
    %1190 = vmatpush1.bf16.msra.mxu0 0
    %1191 = vmatprep.subr.bf16.mxu0 0
    %1192 = vmatpush1.bf16.msra.mxu0 0
    %1193 = vmatprep.subr.bf16.mxu0 0
    %1194 = vmatpush1.bf16.msra.mxu0 0
    %1195 = vmatprep.subr.bf16.mxu0 0
    %1196 = vmatpush1.bf16.msra.mxu0 0
    %1197 = vmatprep.subr.bf16.mxu0 0
    %1198 = vmatpush1.bf16.msra.mxu0 0
    %1199 = vmatprep.subr.bf16.mxu0 0
    %1200 = vmatpush1.bf16.msra.mxu0 0
    %1201 = vmatprep.subr.bf16.mxu0 0
    %1202 = vmatpush1.bf16.msra.mxu0 0
    %1203 = vmatprep.subr.bf16.mxu0 0
    %1204 = vmatpush1.bf16.msra.mxu0 0
    %1205 = vmatprep.subr.bf16.mxu0 0
    %1206 = vmatpush1.bf16.msra.mxu0 0
    %1207 = vmatprep.mubr.bf16.mxu0 0
    %1208 = vmatmul.mubr.bf16.gmra.mrb[0].mxu0 %v1173
    %v1209 = vpop.f32.mrb[0].mxu0
    %v1210 = vadd.f32 %v1159, %v1209
    %v1211 = vpop.f32.mrb[0].mxu0
    %v1212 = vpop.f32.mrb[0].mxu0
    %v1213 = vadd.f32 %v1159, %v1212
    %v1214 = vpop.f32.mrb[0].mxu0
    %1215 = vdwg.mxu0
    %v1216 = vadd.f32 %v123, %v1210
    %v1217 = vadd.f32 %v124, %v1213
    %v1218 = vsel %vm85, %v1216, 0.0
    %1219 = vadd.xlane.f32.xlu0 %v1218
    %v1220 = vpop.xlane.xlu0 %1219
    %v1221 = vsel %vm85, %v1217, 0.0
    %1222 = vadd.xlane.f32.xlu0 %v1221
    %v1223 = vpop.xlane.xlu0 %1222
    %v1224 = vmul.f32 %v1220, %v92
    %v1225 = vmul.f32 %v1223, %v92
    %v1226 = vsub.f32 %v1216, %v1224
    %v1227 = vsub.f32 %v1217, %v1225
    %v1228 = vmul.f32 %v1226, %v1226
    %v1229 = vmul.f32 %v1227, %v1227
    %v1230 = vsel %vm85, %v1228, 0.0
    %1231 = vadd.xlane.f32.xlu0 %v1230
    %v1232 = vpop.xlane.xlu0 %1231
    %v1233 = vsel %vm85, %v1229, 0.0
    %1234 = vadd.xlane.f32.xlu0 %v1233
    %v1235 = vpop.xlane.xlu0 %1234
    %v1236 = vmul.f32 %v1232, %v92
    %v1237 = vmul.f32 %v1235, %v92
    %v1238 = vadd.f32 %v1236, 1e-12
    %v1239 = vadd.f32 %v1237, 1e-12
    %v1240 = vrsqrt.pop %v1238
    %v1241 = vrsqrt.pop %v1239
    %v1242 = vmul.f32 %v1226, %v1240
    %v1243 = vmul.f32 %v1227, %v1241
    %v1244 = vlaneseq
    %v1245 = vshrl.u32 %v1244, 7
    %v1246 = vsub.s32 2, %v1245
    %v1247 = vrot.slane %v125, %v1246
    %v1248 = vmul.f32 %v1242, %v1247
    %v1249 = vmul.f32 %v1243, %v1247
    %v1250 = vlaneseq
    %v1251 = vshrl.u32 %v1250, 7
    %v1252 = vsub.s32 3, %v1251
    %v1253 = vrot.slane %v125, %v1252
    %v1254 = vadd.f32 %v1248, %v1253
    %v1255 = vadd.f32 %v1249, %v1253
    %v1256 = vpack.c.bf16 %v1255, %v1254
    %v1257 = vld [vmem:[%s4] sm:$0xf]
    %v1258 = vld [vmem:[%s4 + $0x4] sm:$0xf]
    %v1259 = vld [vmem:[%s4 + $0x8] sm:$0xf]
    %v1260 = vld [vmem:[%s4 + $0xc] sm:$0xf]
    %v1261 = vlaneseq
    %v1262 = vshrl.u32 %v1261, 7
    %v1263 = vsub.s32 4, %v1262
    %v1264 = vrot.slane %v125, %v1263
    %v1269 = vunpack.c.l.b16 %v1257
    %v1270 = vunpack.c.l.b16 %v1258
    %v1271 = vunpack.c.l.b16 %v1259
    %v1272 = vunpack.c.l.b16 %v1260
    %v1273 = vpack.c.b16 %v1270, %v1269
    %v1274 = vpack.c.b16 %v1272, %v1271
    %v1278 = vsel %vm85, %v1256, 0
    %1280 = vmatprep.subr.bf16.mxu0 0
    %1281 = vmatpush1.bf16.msra.mxu0 %v1273
    %1282 = vmatprep.subr.bf16.mxu0 0
    %1283 = vmatpush1.bf16.msra.mxu0 %v1274
    %1284 = vmatprep.subr.bf16.mxu0 0
    %1285 = vmatpush1.bf16.msra.mxu0 0
    %1286 = vmatprep.subr.bf16.mxu0 0
    %1287 = vmatpush1.bf16.msra.mxu0 0
    %1288 = vmatprep.subr.bf16.mxu0 0
    %1289 = vmatpush1.bf16.msra.mxu0 0
    %1290 = vmatprep.subr.bf16.mxu0 0
    %1291 = vmatpush1.bf16.msra.mxu0 0
    %1292 = vmatprep.subr.bf16.mxu0 0
    %1293 = vmatpush1.bf16.msra.mxu0 0
    %1294 = vmatprep.subr.bf16.mxu0 0
    %1295 = vmatpush1.bf16.msra.mxu0 0
    %1296 = vmatprep.subr.bf16.mxu0 0
    %1297 = vmatpush1.bf16.msra.mxu0 0
    %1298 = vmatprep.subr.bf16.mxu0 0
    %1299 = vmatpush1.bf16.msra.mxu0 0
    %1300 = vmatprep.subr.bf16.mxu0 0
    %1301 = vmatpush1.bf16.msra.mxu0 0
    %1302 = vmatprep.subr.bf16.mxu0 0
    %1303 = vmatpush1.bf16.msra.mxu0 0
    %1304 = vmatprep.subr.bf16.mxu0 0
    %1305 = vmatpush1.bf16.msra.mxu0 0
    %1306 = vmatprep.subr.bf16.mxu0 0
    %1307 = vmatpush1.bf16.msra.mxu0 0
    %1308 = vmatprep.subr.bf16.mxu0 0
    %1309 = vmatpush1.bf16.msra.mxu0 0
    %1310 = vmatprep.subr.bf16.mxu0 0
    %1311 = vmatpush1.bf16.msra.mxu0 0
    %1312 = vmatprep.mubr.bf16.mxu0 0
    %1313 = vmatmul.mubr.bf16.gmra.mrb[0].mxu0 %v1278
    %v1314 = vpop.f32.mrb[0].mxu0
    %v1315 = vadd.f32 %v1264, %v1314
    %v1316 = vpop.f32.mrb[0].mxu0
    %v1317 = vpop.f32.mrb[0].mxu0
    %v1318 = vadd.f32 %v1264, %v1317
    %v1319 = vpop.f32.mrb[0].mxu0
    %1320 = vdwg.mxu0
    %v1321 = vmul.f32 %v1315, %v1315
    %v1322 = vmul.f32 %v1318, %v1318
    %v1323 = vmul.f32 %v1315, %v1321
    %v1324 = vmul.f32 %v1318, %v1322
    %v1325 = vmul.f32 %v1323, 0.044715
    %v1326 = vmul.f32 %v1324, 0.044715
    %v1327 = vadd.f32 %v1315, %v1325
    %v1328 = vadd.f32 %v1318, %v1326
    %v1329 = vmul.f32 %v1327, 0.7978846
    %v1330 = vmul.f32 %v1328, 0.7978846
    %v1331 = vtanh.pop %v1329
    %v1332 = vtanh.pop %v1330
    %v1333 = vadd.f32 %v1331, 1.0
    %v1334 = vadd.f32 %v1332, 1.0
    %v1335 = vmul.f32 %v1333, 0.5
    %v1336 = vmul.f32 %v1334, 0.5
    %v1337 = vmul.f32 %v1315, %v1335
    %v1338 = vmul.f32 %v1318, %v1336
    %v1339 = vpack.c.bf16 %v1338, %v1337
    %v1340 = vld [vmem:[%s5] sm:$0xf]
    %v1341 = vld [vmem:[%s5 + $0x4] sm:$0xf]
    %v1342 = vld [vmem:[%s5 + $0x8] sm:$0xf]
    %v1343 = vld [vmem:[%s5 + $0xc] sm:$0xf]
    %v1344 = vld [vmem:[%s5 + $0x10] sm:$0xf]
    %v1345 = vld [vmem:[%s5 + $0x14] sm:$0xf]
    %v1346 = vld [vmem:[%s5 + $0x18] sm:$0xf]
    %v1347 = vld [vmem:[%s5 + $0x1c] sm:$0xf]
    %v1348 = vlaneseq
    %v1349 = vshrl.u32 %v1348, 7
    %v1350 = vsub.s32 5, %v1349
    %v1351 = vrot.slane %v125, %v1350
    %v1360 = vunpack.c.l.b16 %v1340
    %v1361 = vunpack.c.l.b16 %v1341
    %v1362 = vunpack.c.l.b16 %v1342
    %v1363 = vunpack.c.l.b16 %v1343
    %v1364 = vunpack.c.l.b16 %v1344
    %v1365 = vunpack.c.l.b16 %v1345
    %v1366 = vunpack.c.l.b16 %v1346
    %v1367 = vunpack.c.l.b16 %v1347
    %v1368 = vpack.c.b16 %v1361, %v1360
    %v1369 = vpack.c.b16 %v1363, %v1362
    %v1370 = vpack.c.b16 %v1365, %v1364
    %v1371 = vpack.c.b16 %v1367, %v1366
    %vm1376 = vcmask 523264
    %v1378 = vsel %vm1376, %v1339, 0
    %1380 = vmatprep.subr.bf16.mxu0 0
    %1381 = vmatpush1.bf16.msra.mxu0 %v1368
    %1382 = vmatprep.subr.bf16.mxu0 0
    %1383 = vmatpush1.bf16.msra.mxu0 %v1369
    %1384 = vmatprep.subr.bf16.mxu0 0
    %1385 = vmatpush1.bf16.msra.mxu0 %v1370
    %1386 = vmatprep.subr.bf16.mxu0 0
    %1387 = vmatpush1.bf16.msra.mxu0 %v1371
    %1388 = vmatprep.subr.bf16.mxu0 0
    %1389 = vmatpush1.bf16.msra.mxu0 0
    %1390 = vmatprep.subr.bf16.mxu0 0
    %1391 = vmatpush1.bf16.msra.mxu0 0
    %1392 = vmatprep.subr.bf16.mxu0 0
    %1393 = vmatpush1.bf16.msra.mxu0 0
    %1394 = vmatprep.subr.bf16.mxu0 0
    %1395 = vmatpush1.bf16.msra.mxu0 0
    %1396 = vmatprep.subr.bf16.mxu0 0
    %1397 = vmatpush1.bf16.msra.mxu0 0
    %1398 = vmatprep.subr.bf16.mxu0 0
    %1399 = vmatpush1.bf16.msra.mxu0 0
    %1400 = vmatprep.subr.bf16.mxu0 0
    %1401 = vmatpush1.bf16.msra.mxu0 0
    %1402 = vmatprep.subr.bf16.mxu0 0
    %1403 = vmatpush1.bf16.msra.mxu0 0
    %1404 = vmatprep.subr.bf16.mxu0 0
    %1405 = vmatpush1.bf16.msra.mxu0 0
    %1406 = vmatprep.subr.bf16.mxu0 0
    %1407 = vmatpush1.bf16.msra.mxu0 0
    %1408 = vmatprep.subr.bf16.mxu0 0
    %1409 = vmatpush1.bf16.msra.mxu0 0
    %1410 = vmatprep.subr.bf16.mxu0 0
    %1411 = vmatpush1.bf16.msra.mxu0 0
    %1412 = vmatprep.mubr.bf16.mxu0 0
    %1413 = vmatmul.mubr.bf16.gmra.mrb[0].mxu0 %v1378
    %v1414 = vpop.f32.mrb[0].mxu0
    %v1415 = vadd.f32 %v1351, %v1414
    %v1416 = vpop.f32.mrb[0].mxu0
    %v1417 = vpop.f32.mrb[0].mxu0
    %v1418 = vadd.f32 %v1351, %v1417
    %v1419 = vpop.f32.mrb[0].mxu0
    %1420 = vdwg.mxu0
    %v1421 = vadd.f32 %v1254, %v1415
    %v1422 = vadd.f32 %v1255, %v1418
    %v1423 = vsel %vm85, %v1421, 0.0
    %1424 = vadd.xlane.f32.xlu0 %v1423
    %v1425 = vpop.xlane.xlu0 %1424
    %v1426 = vsel %vm85, %v1422, 0.0
    %1427 = vadd.xlane.f32.xlu0 %v1426
    %v1428 = vpop.xlane.xlu0 %1427
    %v1429 = vmul.f32 %v1425, %v92
    %v1430 = vmul.f32 %v1428, %v92
    %v1431 = vsub.f32 %v1421, %v1429
    %v1432 = vsub.f32 %v1422, %v1430
    %v1433 = vmul.f32 %v1431, %v1431
    %v1434 = vmul.f32 %v1432, %v1432
    %v1435 = vsel %vm85, %v1433, 0.0
    %1436 = vadd.xlane.f32.xlu0 %v1435
    %v1437 = vpop.xlane.xlu0 %1436
    %v1438 = vsel %vm85, %v1434, 0.0
    %1439 = vadd.xlane.f32.xlu0 %v1438
    %v1440 = vpop.xlane.xlu0 %1439
    %v1441 = vmul.f32 %v1437, %v92
    %v1442 = vmul.f32 %v1440, %v92
    %v1443 = vadd.f32 %v1441, 1e-12
    %v1444 = vadd.f32 %v1442, 1e-12
    %v1445 = vrsqrt.pop %v1443
    %v1446 = vrsqrt.pop %v1444
    %v1447 = vmul.f32 %v1431, %v1445
    %v1448 = vmul.f32 %v1432, %v1446
    %v1449 = vlaneseq
    %v1450 = vshrl.u32 %v1449, 7
    %v1451 = vsub.s32 6, %v1450
    %v1452 = vrot.slane %v125, %v1451
    %v1453 = vmul.f32 %v1447, %v1452
    %v1454 = vmul.f32 %v1448, %v1452
    %v1455 = vlaneseq
    %v1456 = vshrl.u32 %v1455, 7
    %v1457 = vsub.s32 7, %v1456
    %v1458 = vrot.slane %v125, %v1457
    %v1459 = vadd.f32 %v1453, %v1458
    %v1460 = vadd.f32 %v1454, %v1458
    %s1461 = scalar_lea.vmem %s6, 8
    %v1462 = vld [vmem:[%s1461] sm:$0xff]
    %v1463 = vpack.c.bf16 %v1460, %v1459
    %s1464 = scalar_lea.vmem %s2, 16
    %v1465 = vld [vmem:[%s1464] sm:$0xf]
    %v1466 = vld [vmem:[%s1464 + $0x4] sm:$0xf]
    %v1467 = vld [vmem:[%s1464 + $0x8] sm:$0xf]
    %v1468 = vld [vmem:[%s1464 + $0xc] sm:$0xf]
    %v1469 = vlaneseq
    %v1470 = vshrl.u32 %v1469, 7
    %v1471 = vsub.s32 0, %v1470
    %v1472 = vrot.slane %v1462, %v1471
    %v1477 = vunpack.c.l.b16 %v1465
    %v1478 = vunpack.c.l.b16 %v1466
    %v1479 = vunpack.c.l.b16 %v1467
    %v1480 = vunpack.c.l.b16 %v1468
    %v1481 = vpack.c.b16 %v1478, %v1477
    %v1482 = vpack.c.b16 %v1480, %v1479
    %v1486 = vsel %vm85, %v1463, 0
    %1488 = vmatprep.subr.bf16.mxu0 0
    %1489 = vmatpush1.bf16.msra.mxu0 %v1481
    %1490 = vmatprep.subr.bf16.mxu0 0
    %1491 = vmatpush1.bf16.msra.mxu0 %v1482
    %1492 = vmatprep.subr.bf16.mxu0 0
    %1493 = vmatpush1.bf16.msra.mxu0 0
    %1494 = vmatprep.subr.bf16.mxu0 0
    %1495 = vmatpush1.bf16.msra.mxu0 0
    %1496 = vmatprep.subr.bf16.mxu0 0
    %1497 = vmatpush1.bf16.msra.mxu0 0
    %1498 = vmatprep.subr.bf16.mxu0 0
    %1499 = vmatpush1.bf16.msra.mxu0 0
    %1500 = vmatprep.subr.bf16.mxu0 0
    %1501 = vmatpush1.bf16.msra.mxu0 0
    %1502 = vmatprep.subr.bf16.mxu0 0
    %1503 = vmatpush1.bf16.msra.mxu0 0
    %1504 = vmatprep.subr.bf16.mxu0 0
    %1505 = vmatpush1.bf16.msra.mxu0 0
    %1506 = vmatprep.subr.bf16.mxu0 0
    %1507 = vmatpush1.bf16.msra.mxu0 0
    %1508 = vmatprep.subr.bf16.mxu0 0
    %1509 = vmatpush1.bf16.msra.mxu0 0
    %1510 = vmatprep.subr.bf16.mxu0 0
    %1511 = vmatpush1.bf16.msra.mxu0 0
    %1512 = vmatprep.subr.bf16.mxu0 0
    %1513 = vmatpush1.bf16.msra.mxu0 0
    %1514 = vmatprep.subr.bf16.mxu0 0
    %1515 = vmatpush1.bf16.msra.mxu0 0
    %1516 = vmatprep.subr.bf16.mxu0 0
    %1517 = vmatpush1.bf16.msra.mxu0 0
    %1518 = vmatprep.subr.bf16.mxu0 0
    %1519 = vmatpush1.bf16.msra.mxu0 0
    %1520 = vmatprep.mubr.bf16.mxu0 0
    %1521 = vmatmul.mubr.bf16.gmra.mrb[0].mxu0 %v1486
    %v1522 = vpop.f32.mrb[0].mxu0
    %v1523 = vadd.f32 %v1472, %v1522
    %v1524 = vpop.f32.mrb[0].mxu0
    %v1525 = vpop.f32.mrb[0].mxu0
    %v1526 = vadd.f32 %v1472, %v1525
    %v1527 = vpop.f32.mrb[0].mxu0
    %1528 = vdwg.mxu0
    %1531 = vrot.lane.b32.xlu0 %v1523, 120
    %v1532 = vpop.permute.xlu0 %1531
    %1533 = vrot.lane.b32.xlu0 %v1526, 120
    %v1534 = vpop.permute.xlu0 %1533
    %1537 = vrot.lane.b32.xlu0 %v1523, 112
    %v1538 = vpop.permute.xlu0 %1537
    %1539 = vrot.lane.b32.xlu0 %v1526, 112
    %v1540 = vpop.permute.xlu0 %1539
    %1543 = vrot.lane.b32.xlu0 %v1523, 104
    %v1544 = vpop.permute.xlu0 %1543
    %1545 = vrot.lane.b32.xlu0 %v1526, 104
    %v1546 = vpop.permute.xlu0 %1545
    %v1549 = vpack.c.bf16 %v1523, %v1523
    %v1550 = vpack.c.bf16 %v1526, %v1526
    %v1551 = vpack.c.bf16 %v1532, %v1532
    %v1552 = vpack.c.bf16 %v1534, %v1534
    %v1553 = vpack.c.bf16 %v1538, %v1538
    %v1554 = vpack.c.bf16 %v1540, %v1540
    %v1555 = vpack.c.bf16 %v1544, %v1544
    %v1556 = vpack.c.bf16 %v1546, %v1546
    %1558 = vrot.lane.b32.xlu0 %v1549, 96
    %v1559 = vpop.permute.xlu0 %1558
    %v1561 = vsel %vm222, %v1549, 0
    %v1564 = vsel %vm222, %v1559, 0
    %1566 = vmatprep.subr.bf16.mxu0 0
    %1567 = vmatpush1.bf16.xpose.msra.mxu0 %v1564
    %1568 = vmatprep.subr.bf16.mxu0 0
    %1569 = vmatpush1.bf16.xpose.msra.mxu0 0
    %1570 = vmatprep.subr.bf16.mxu0 0
    %1571 = vmatpush1.bf16.xpose.msra.mxu0 0
    %1572 = vmatprep.subr.bf16.mxu0 0
    %1573 = vmatpush1.bf16.xpose.msra.mxu0 0
    %1574 = vmatprep.subr.bf16.mxu0 0
    %1575 = vmatpush1.bf16.xpose.msra.mxu0 0
    %1576 = vmatprep.subr.bf16.mxu0 0
    %1577 = vmatpush1.bf16.xpose.msra.mxu0 0
    %1578 = vmatprep.subr.bf16.mxu0 0
    %1579 = vmatpush1.bf16.xpose.msra.mxu0 0
    %1580 = vmatprep.subr.bf16.mxu0 0
    %1581 = vmatpush1.bf16.xpose.msra.mxu0 0
    %1582 = vmatprep.subr.bf16.mxu0 0
    %1583 = vmatpush1.bf16.xpose.msra.mxu0 0
    %1584 = vmatprep.subr.bf16.mxu0 0
    %1585 = vmatpush1.bf16.xpose.msra.mxu0 0
    %1586 = vmatprep.subr.bf16.mxu0 0
    %1587 = vmatpush1.bf16.xpose.msra.mxu0 0
    %1588 = vmatprep.subr.bf16.mxu0 0
    %1589 = vmatpush1.bf16.xpose.msra.mxu0 0
    %1590 = vmatprep.subr.bf16.mxu0 0
    %1591 = vmatpush1.bf16.xpose.msra.mxu0 0
    %1592 = vmatprep.subr.bf16.mxu0 0
    %1593 = vmatpush1.bf16.xpose.msra.mxu0 0
    %1594 = vmatprep.subr.bf16.mxu0 0
    %1595 = vmatpush1.bf16.xpose.msra.mxu0 0
    %1596 = vmatprep.subr.bf16.mxu0 0
    %1597 = vmatpush1.bf16.xpose.msra.mxu0 0
    %1598 = vmatprep.mubr.bf16.mxu0 0
    %1599 = vmatmul.mubr.bf16.gmra.mrb[0].mxu0 %v1561
    %v1600 = vpop.f32.mrb[0].mxu0
    %v1601 = vadd.f32 0.0, %v1600
    %v1602 = vpop.f32.mrb[0].mxu0
    %v1603 = vpop.f32.mrb[0].mxu0
    %v1604 = vpop.f32.mrb[0].mxu0
    %1605 = vdwg.mxu0
    %1607 = vrot.lane.b32.xlu0 %v1550, 96
    %v1608 = vpop.permute.xlu0 %1607
    %v1610 = vsel %vm222, %v1550, 0
    %v1613 = vsel %vm222, %v1608, 0
    %1615 = vmatprep.subr.bf16.mxu0 0
    %1616 = vmatpush1.bf16.xpose.msra.mxu0 %v1613
    %1617 = vmatprep.subr.bf16.mxu0 0
    %1618 = vmatpush1.bf16.xpose.msra.mxu0 0
    %1619 = vmatprep.subr.bf16.mxu0 0
    %1620 = vmatpush1.bf16.xpose.msra.mxu0 0
    %1621 = vmatprep.subr.bf16.mxu0 0
    %1622 = vmatpush1.bf16.xpose.msra.mxu0 0
    %1623 = vmatprep.subr.bf16.mxu0 0
    %1624 = vmatpush1.bf16.xpose.msra.mxu0 0
    %1625 = vmatprep.subr.bf16.mxu0 0
    %1626 = vmatpush1.bf16.xpose.msra.mxu0 0
    %1627 = vmatprep.subr.bf16.mxu0 0
    %1628 = vmatpush1.bf16.xpose.msra.mxu0 0
    %1629 = vmatprep.subr.bf16.mxu0 0
    %1630 = vmatpush1.bf16.xpose.msra.mxu0 0
    %1631 = vmatprep.subr.bf16.mxu0 0
    %1632 = vmatpush1.bf16.xpose.msra.mxu0 0
    %1633 = vmatprep.subr.bf16.mxu0 0
    %1634 = vmatpush1.bf16.xpose.msra.mxu0 0
    %1635 = vmatprep.subr.bf16.mxu0 0
    %1636 = vmatpush1.bf16.xpose.msra.mxu0 0
    %1637 = vmatprep.subr.bf16.mxu0 0
    %1638 = vmatpush1.bf16.xpose.msra.mxu0 0
    %1639 = vmatprep.subr.bf16.mxu0 0
    %1640 = vmatpush1.bf16.xpose.msra.mxu0 0
    %1641 = vmatprep.subr.bf16.mxu0 0
    %1642 = vmatpush1.bf16.xpose.msra.mxu0 0
    %1643 = vmatprep.subr.bf16.mxu0 0
    %1644 = vmatpush1.bf16.xpose.msra.mxu0 0
    %1645 = vmatprep.subr.bf16.mxu0 0
    %1646 = vmatpush1.bf16.xpose.msra.mxu0 0
    %1647 = vmatprep.mubr.bf16.mxu0 0
    %1648 = vmatmul.mubr.bf16.gmra.mrb[0].mxu0 %v1610
    %v1649 = vpop.f32.mrb[0].mxu0
    %v1650 = vadd.f32 0.0, %v1649
    %v1651 = vpop.f32.mrb[0].mxu0
    %v1652 = vpop.f32.mrb[0].mxu0
    %v1653 = vpop.f32.mrb[0].mxu0
    %1654 = vdwg.mxu0
    %1656 = vrot.lane.b32.xlu0 %v1551, 96
    %v1657 = vpop.permute.xlu0 %1656
    %v1659 = vsel %vm222, %v1551, 0
    %v1662 = vsel %vm222, %v1657, 0
    %1664 = vmatprep.subr.bf16.mxu0 0
    %1665 = vmatpush1.bf16.xpose.msra.mxu0 %v1662
    %1666 = vmatprep.subr.bf16.mxu0 0
    %1667 = vmatpush1.bf16.xpose.msra.mxu0 0
    %1668 = vmatprep.subr.bf16.mxu0 0
    %1669 = vmatpush1.bf16.xpose.msra.mxu0 0
    %1670 = vmatprep.subr.bf16.mxu0 0
    %1671 = vmatpush1.bf16.xpose.msra.mxu0 0
    %1672 = vmatprep.subr.bf16.mxu0 0
    %1673 = vmatpush1.bf16.xpose.msra.mxu0 0
    %1674 = vmatprep.subr.bf16.mxu0 0
    %1675 = vmatpush1.bf16.xpose.msra.mxu0 0
    %1676 = vmatprep.subr.bf16.mxu0 0
    %1677 = vmatpush1.bf16.xpose.msra.mxu0 0
    %1678 = vmatprep.subr.bf16.mxu0 0
    %1679 = vmatpush1.bf16.xpose.msra.mxu0 0
    %1680 = vmatprep.subr.bf16.mxu0 0
    %1681 = vmatpush1.bf16.xpose.msra.mxu0 0
    %1682 = vmatprep.subr.bf16.mxu0 0
    %1683 = vmatpush1.bf16.xpose.msra.mxu0 0
    %1684 = vmatprep.subr.bf16.mxu0 0
    %1685 = vmatpush1.bf16.xpose.msra.mxu0 0
    %1686 = vmatprep.subr.bf16.mxu0 0
    %1687 = vmatpush1.bf16.xpose.msra.mxu0 0
    %1688 = vmatprep.subr.bf16.mxu0 0
    %1689 = vmatpush1.bf16.xpose.msra.mxu0 0
    %1690 = vmatprep.subr.bf16.mxu0 0
    %1691 = vmatpush1.bf16.xpose.msra.mxu0 0
    %1692 = vmatprep.subr.bf16.mxu0 0
    %1693 = vmatpush1.bf16.xpose.msra.mxu0 0
    %1694 = vmatprep.subr.bf16.mxu0 0
    %1695 = vmatpush1.bf16.xpose.msra.mxu0 0
    %1696 = vmatprep.mubr.bf16.mxu0 0
    %1697 = vmatmul.mubr.bf16.gmra.mrb[0].mxu0 %v1659
    %v1698 = vpop.f32.mrb[0].mxu0
    %v1699 = vadd.f32 0.0, %v1698
    %v1700 = vpop.f32.mrb[0].mxu0
    %v1701 = vpop.f32.mrb[0].mxu0
    %v1702 = vpop.f32.mrb[0].mxu0
    %1703 = vdwg.mxu0
    %1705 = vrot.lane.b32.xlu0 %v1552, 96
    %v1706 = vpop.permute.xlu0 %1705
    %v1708 = vsel %vm222, %v1552, 0
    %v1711 = vsel %vm222, %v1706, 0
    %1713 = vmatprep.subr.bf16.mxu0 0
    %1714 = vmatpush1.bf16.xpose.msra.mxu0 %v1711
    %1715 = vmatprep.subr.bf16.mxu0 0
    %1716 = vmatpush1.bf16.xpose.msra.mxu0 0
    %1717 = vmatprep.subr.bf16.mxu0 0
    %1718 = vmatpush1.bf16.xpose.msra.mxu0 0
    %1719 = vmatprep.subr.bf16.mxu0 0
    %1720 = vmatpush1.bf16.xpose.msra.mxu0 0
    %1721 = vmatprep.subr.bf16.mxu0 0
    %1722 = vmatpush1.bf16.xpose.msra.mxu0 0
    %1723 = vmatprep.subr.bf16.mxu0 0
    %1724 = vmatpush1.bf16.xpose.msra.mxu0 0
    %1725 = vmatprep.subr.bf16.mxu0 0
    %1726 = vmatpush1.bf16.xpose.msra.mxu0 0
    %1727 = vmatprep.subr.bf16.mxu0 0
    %1728 = vmatpush1.bf16.xpose.msra.mxu0 0
    %1729 = vmatprep.subr.bf16.mxu0 0
    %1730 = vmatpush1.bf16.xpose.msra.mxu0 0
    %1731 = vmatprep.subr.bf16.mxu0 0
    %1732 = vmatpush1.bf16.xpose.msra.mxu0 0
    %1733 = vmatprep.subr.bf16.mxu0 0
    %1734 = vmatpush1.bf16.xpose.msra.mxu0 0
    %1735 = vmatprep.subr.bf16.mxu0 0
    %1736 = vmatpush1.bf16.xpose.msra.mxu0 0
    %1737 = vmatprep.subr.bf16.mxu0 0
    %1738 = vmatpush1.bf16.xpose.msra.mxu0 0
    %1739 = vmatprep.subr.bf16.mxu0 0
    %1740 = vmatpush1.bf16.xpose.msra.mxu0 0
    %1741 = vmatprep.subr.bf16.mxu0 0
    %1742 = vmatpush1.bf16.xpose.msra.mxu0 0
    %1743 = vmatprep.subr.bf16.mxu0 0
    %1744 = vmatpush1.bf16.xpose.msra.mxu0 0
    %1745 = vmatprep.mubr.bf16.mxu0 0
    %1746 = vmatmul.mubr.bf16.gmra.mrb[0].mxu0 %v1708
    %v1747 = vpop.f32.mrb[0].mxu0
    %v1748 = vadd.f32 0.0, %v1747
    %v1749 = vpop.f32.mrb[0].mxu0
    %v1750 = vpop.f32.mrb[0].mxu0
    %v1751 = vpop.f32.mrb[0].mxu0
    %1752 = vdwg.mxu0
    %1754 = vrot.lane.b32.xlu0 %v1553, 96
    %v1755 = vpop.permute.xlu0 %1754
    %v1757 = vsel %vm222, %v1553, 0
    %v1760 = vsel %vm222, %v1755, 0
    %1762 = vmatprep.subr.bf16.mxu0 0
    %1763 = vmatpush1.bf16.xpose.msra.mxu0 %v1760
    %1764 = vmatprep.subr.bf16.mxu0 0
    %1765 = vmatpush1.bf16.xpose.msra.mxu0 0
    %1766 = vmatprep.subr.bf16.mxu0 0
    %1767 = vmatpush1.bf16.xpose.msra.mxu0 0
    %1768 = vmatprep.subr.bf16.mxu0 0
    %1769 = vmatpush1.bf16.xpose.msra.mxu0 0
    %1770 = vmatprep.subr.bf16.mxu0 0
    %1771 = vmatpush1.bf16.xpose.msra.mxu0 0
    %1772 = vmatprep.subr.bf16.mxu0 0
    %1773 = vmatpush1.bf16.xpose.msra.mxu0 0
    %1774 = vmatprep.subr.bf16.mxu0 0
    %1775 = vmatpush1.bf16.xpose.msra.mxu0 0
    %1776 = vmatprep.subr.bf16.mxu0 0
    %1777 = vmatpush1.bf16.xpose.msra.mxu0 0
    %1778 = vmatprep.subr.bf16.mxu0 0
    %1779 = vmatpush1.bf16.xpose.msra.mxu0 0
    %1780 = vmatprep.subr.bf16.mxu0 0
    %1781 = vmatpush1.bf16.xpose.msra.mxu0 0
    %1782 = vmatprep.subr.bf16.mxu0 0
    %1783 = vmatpush1.bf16.xpose.msra.mxu0 0
    %1784 = vmatprep.subr.bf16.mxu0 0
    %1785 = vmatpush1.bf16.xpose.msra.mxu0 0
    %1786 = vmatprep.subr.bf16.mxu0 0
    %1787 = vmatpush1.bf16.xpose.msra.mxu0 0
    %1788 = vmatprep.subr.bf16.mxu0 0
    %1789 = vmatpush1.bf16.xpose.msra.mxu0 0
    %1790 = vmatprep.subr.bf16.mxu0 0
    %1791 = vmatpush1.bf16.xpose.msra.mxu0 0
    %1792 = vmatprep.subr.bf16.mxu0 0
    %1793 = vmatpush1.bf16.xpose.msra.mxu0 0
    %1794 = vmatprep.mubr.bf16.mxu0 0
    %1795 = vmatmul.mubr.bf16.gmra.mrb[0].mxu0 %v1757
    %v1796 = vpop.f32.mrb[0].mxu0
    %v1797 = vadd.f32 0.0, %v1796
    %v1798 = vpop.f32.mrb[0].mxu0
    %v1799 = vpop.f32.mrb[0].mxu0
    %v1800 = vpop.f32.mrb[0].mxu0
    %1801 = vdwg.mxu0
    %1803 = vrot.lane.b32.xlu0 %v1554, 96
    %v1804 = vpop.permute.xlu0 %1803
    %v1806 = vsel %vm222, %v1554, 0
    %v1809 = vsel %vm222, %v1804, 0
    %1811 = vmatprep.subr.bf16.mxu0 0
    %1812 = vmatpush1.bf16.xpose.msra.mxu0 %v1809
    %1813 = vmatprep.subr.bf16.mxu0 0
    %1814 = vmatpush1.bf16.xpose.msra.mxu0 0
    %1815 = vmatprep.subr.bf16.mxu0 0
    %1816 = vmatpush1.bf16.xpose.msra.mxu0 0
    %1817 = vmatprep.subr.bf16.mxu0 0
    %1818 = vmatpush1.bf16.xpose.msra.mxu0 0
    %1819 = vmatprep.subr.bf16.mxu0 0
    %1820 = vmatpush1.bf16.xpose.msra.mxu0 0
    %1821 = vmatprep.subr.bf16.mxu0 0
    %1822 = vmatpush1.bf16.xpose.msra.mxu0 0
    %1823 = vmatprep.subr.bf16.mxu0 0
    %1824 = vmatpush1.bf16.xpose.msra.mxu0 0
    %1825 = vmatprep.subr.bf16.mxu0 0
    %1826 = vmatpush1.bf16.xpose.msra.mxu0 0
    %1827 = vmatprep.subr.bf16.mxu0 0
    %1828 = vmatpush1.bf16.xpose.msra.mxu0 0
    %1829 = vmatprep.subr.bf16.mxu0 0
    %1830 = vmatpush1.bf16.xpose.msra.mxu0 0
    %1831 = vmatprep.subr.bf16.mxu0 0
    %1832 = vmatpush1.bf16.xpose.msra.mxu0 0
    %1833 = vmatprep.subr.bf16.mxu0 0
    %1834 = vmatpush1.bf16.xpose.msra.mxu0 0
    %1835 = vmatprep.subr.bf16.mxu0 0
    %1836 = vmatpush1.bf16.xpose.msra.mxu0 0
    %1837 = vmatprep.subr.bf16.mxu0 0
    %1838 = vmatpush1.bf16.xpose.msra.mxu0 0
    %1839 = vmatprep.subr.bf16.mxu0 0
    %1840 = vmatpush1.bf16.xpose.msra.mxu0 0
    %1841 = vmatprep.subr.bf16.mxu0 0
    %1842 = vmatpush1.bf16.xpose.msra.mxu0 0
    %1843 = vmatprep.mubr.bf16.mxu0 0
    %1844 = vmatmul.mubr.bf16.gmra.mrb[0].mxu0 %v1806
    %v1845 = vpop.f32.mrb[0].mxu0
    %v1846 = vadd.f32 0.0, %v1845
    %v1847 = vpop.f32.mrb[0].mxu0
    %v1848 = vpop.f32.mrb[0].mxu0
    %v1849 = vpop.f32.mrb[0].mxu0
    %1850 = vdwg.mxu0
    %1852 = vrot.lane.b32.xlu0 %v1555, 96
    %v1853 = vpop.permute.xlu0 %1852
    %v1855 = vsel %vm222, %v1555, 0
    %v1858 = vsel %vm222, %v1853, 0
    %1860 = vmatprep.subr.bf16.mxu0 0
    %1861 = vmatpush1.bf16.xpose.msra.mxu0 %v1858
    %1862 = vmatprep.subr.bf16.mxu0 0
    %1863 = vmatpush1.bf16.xpose.msra.mxu0 0
    %1864 = vmatprep.subr.bf16.mxu0 0
    %1865 = vmatpush1.bf16.xpose.msra.mxu0 0
    %1866 = vmatprep.subr.bf16.mxu0 0
    %1867 = vmatpush1.bf16.xpose.msra.mxu0 0
    %1868 = vmatprep.subr.bf16.mxu0 0
    %1869 = vmatpush1.bf16.xpose.msra.mxu0 0
    %1870 = vmatprep.subr.bf16.mxu0 0
    %1871 = vmatpush1.bf16.xpose.msra.mxu0 0
    %1872 = vmatprep.subr.bf16.mxu0 0
    %1873 = vmatpush1.bf16.xpose.msra.mxu0 0
    %1874 = vmatprep.subr.bf16.mxu0 0
    %1875 = vmatpush1.bf16.xpose.msra.mxu0 0
    %1876 = vmatprep.subr.bf16.mxu0 0
    %1877 = vmatpush1.bf16.xpose.msra.mxu0 0
    %1878 = vmatprep.subr.bf16.mxu0 0
    %1879 = vmatpush1.bf16.xpose.msra.mxu0 0
    %1880 = vmatprep.subr.bf16.mxu0 0
    %1881 = vmatpush1.bf16.xpose.msra.mxu0 0
    %1882 = vmatprep.subr.bf16.mxu0 0
    %1883 = vmatpush1.bf16.xpose.msra.mxu0 0
    %1884 = vmatprep.subr.bf16.mxu0 0
    %1885 = vmatpush1.bf16.xpose.msra.mxu0 0
    %1886 = vmatprep.subr.bf16.mxu0 0
    %1887 = vmatpush1.bf16.xpose.msra.mxu0 0
    %1888 = vmatprep.subr.bf16.mxu0 0
    %1889 = vmatpush1.bf16.xpose.msra.mxu0 0
    %1890 = vmatprep.subr.bf16.mxu0 0
    %1891 = vmatpush1.bf16.xpose.msra.mxu0 0
    %1892 = vmatprep.mubr.bf16.mxu0 0
    %1893 = vmatmul.mubr.bf16.gmra.mrb[0].mxu0 %v1855
    %v1894 = vpop.f32.mrb[0].mxu0
    %v1895 = vadd.f32 0.0, %v1894
    %v1896 = vpop.f32.mrb[0].mxu0
    %v1897 = vpop.f32.mrb[0].mxu0
    %v1898 = vpop.f32.mrb[0].mxu0
    %1899 = vdwg.mxu0
    %1901 = vrot.lane.b32.xlu0 %v1556, 96
    %v1902 = vpop.permute.xlu0 %1901
    %v1904 = vsel %vm222, %v1556, 0
    %v1907 = vsel %vm222, %v1902, 0
    %1909 = vmatprep.subr.bf16.mxu0 0
    %1910 = vmatpush1.bf16.xpose.msra.mxu0 %v1907
    %1911 = vmatprep.subr.bf16.mxu0 0
    %1912 = vmatpush1.bf16.xpose.msra.mxu0 0
    %1913 = vmatprep.subr.bf16.mxu0 0
    %1914 = vmatpush1.bf16.xpose.msra.mxu0 0
    %1915 = vmatprep.subr.bf16.mxu0 0
    %1916 = vmatpush1.bf16.xpose.msra.mxu0 0
    %1917 = vmatprep.subr.bf16.mxu0 0
    %1918 = vmatpush1.bf16.xpose.msra.mxu0 0
    %1919 = vmatprep.subr.bf16.mxu0 0
    %1920 = vmatpush1.bf16.xpose.msra.mxu0 0
    %1921 = vmatprep.subr.bf16.mxu0 0
    %1922 = vmatpush1.bf16.xpose.msra.mxu0 0
    %1923 = vmatprep.subr.bf16.mxu0 0
    %1924 = vmatpush1.bf16.xpose.msra.mxu0 0
    %1925 = vmatprep.subr.bf16.mxu0 0
    %1926 = vmatpush1.bf16.xpose.msra.mxu0 0
    %1927 = vmatprep.subr.bf16.mxu0 0
    %1928 = vmatpush1.bf16.xpose.msra.mxu0 0
    %1929 = vmatprep.subr.bf16.mxu0 0
    %1930 = vmatpush1.bf16.xpose.msra.mxu0 0
    %1931 = vmatprep.subr.bf16.mxu0 0
    %1932 = vmatpush1.bf16.xpose.msra.mxu0 0
    %1933 = vmatprep.subr.bf16.mxu0 0
    %1934 = vmatpush1.bf16.xpose.msra.mxu0 0
    %1935 = vmatprep.subr.bf16.mxu0 0
    %1936 = vmatpush1.bf16.xpose.msra.mxu0 0
    %1937 = vmatprep.subr.bf16.mxu0 0
    %1938 = vmatpush1.bf16.xpose.msra.mxu0 0
    %1939 = vmatprep.subr.bf16.mxu0 0
    %1940 = vmatpush1.bf16.xpose.msra.mxu0 0
    %1941 = vmatprep.mubr.bf16.mxu0 0
    %1942 = vmatmul.mubr.bf16.gmra.mrb[0].mxu0 %v1904
    %v1943 = vpop.f32.mrb[0].mxu0
    %v1944 = vadd.f32 0.0, %v1943
    %v1945 = vpop.f32.mrb[0].mxu0
    %v1946 = vpop.f32.mrb[0].mxu0
    %v1947 = vpop.f32.mrb[0].mxu0
    %1948 = vdwg.mxu0
    %v1949 = vmul.f32 %v1601, 0.35355338
    %v1950 = vmul.f32 %v1650, 0.35355338
    %v1951 = vmul.f32 %v1699, 0.35355338
    %v1952 = vmul.f32 %v1748, 0.35355338
    %v1953 = vmul.f32 %v1797, 0.35355338
    %v1954 = vmul.f32 %v1846, 0.35355338
    %v1955 = vmul.f32 %v1895, 0.35355338
    %v1956 = vmul.f32 %v1944, 0.35355338
    %v1957 = vadd.f32 %v1949, %v623
    %v1958 = vadd.f32 %v1950, %v627
    %v1959 = vadd.f32 %v1951, %v623
    %v1960 = vadd.f32 %v1952, %v627
    %v1961 = vadd.f32 %v1953, %v623
    %v1962 = vadd.f32 %v1954, %v627
    %v1963 = vadd.f32 %v1955, %v623
    %v1964 = vadd.f32 %v1956, %v627
    %v1965 = vsel %vm222, %v1957, -inf
    %1966 = vmax.xlane.f32.xlu0 %v1965
    %v1967 = vpop.xlane.xlu0 %1966
    %v1968 = vsel %vm222, %v1958, -inf
    %1969 = vmax.xlane.f32.xlu0 %v1968
    %v1970 = vpop.xlane.xlu0 %1969
    %v1971 = vsel %vm222, %v1959, -inf
    %1972 = vmax.xlane.f32.xlu0 %v1971
    %v1973 = vpop.xlane.xlu0 %1972
    %v1974 = vsel %vm222, %v1960, -inf
    %1975 = vmax.xlane.f32.xlu0 %v1974
    %v1976 = vpop.xlane.xlu0 %1975
    %v1977 = vsel %vm222, %v1961, -inf
    %1978 = vmax.xlane.f32.xlu0 %v1977
    %v1979 = vpop.xlane.xlu0 %1978
    %v1980 = vsel %vm222, %v1962, -inf
    %1981 = vmax.xlane.f32.xlu0 %v1980
    %v1982 = vpop.xlane.xlu0 %1981
    %v1983 = vsel %vm222, %v1963, -inf
    %1984 = vmax.xlane.f32.xlu0 %v1983
    %v1985 = vpop.xlane.xlu0 %1984
    %v1986 = vsel %vm222, %v1964, -inf
    %1987 = vmax.xlane.f32.xlu0 %v1986
    %v1988 = vpop.xlane.xlu0 %1987
    %v1989 = vsub.f32 %v1957, %v1967
    %v1990 = vsub.f32 %v1958, %v1970
    %v1991 = vsub.f32 %v1959, %v1973
    %v1992 = vsub.f32 %v1960, %v1976
    %v1993 = vsub.f32 %v1961, %v1979
    %v1994 = vsub.f32 %v1962, %v1982
    %v1995 = vsub.f32 %v1963, %v1985
    %v1996 = vsub.f32 %v1964, %v1988
    %v1997 = vmul.f32 %v1989, 1.442695
    %v1998 = vpow.pop %v1997
    %v1999 = vmul.f32 %v1990, 1.442695
    %v2000 = vpow.pop %v1999
    %v2001 = vmul.f32 %v1991, 1.442695
    %v2002 = vpow.pop %v2001
    %v2003 = vmul.f32 %v1992, 1.442695
    %v2004 = vpow.pop %v2003
    %v2005 = vmul.f32 %v1993, 1.442695
    %v2006 = vpow.pop %v2005
    %v2007 = vmul.f32 %v1994, 1.442695
    %v2008 = vpow.pop %v2007
    %v2009 = vmul.f32 %v1995, 1.442695
    %v2010 = vpow.pop %v2009
    %v2011 = vmul.f32 %v1996, 1.442695
    %v2012 = vpow.pop %v2011
    %v2013 = vsel %vm222, %v1998, 0.0
    %2014 = vadd.xlane.f32.xlu0 %v2013
    %v2015 = vpop.xlane.xlu0 %2014
    %v2016 = vsel %vm222, %v2000, 0.0
    %2017 = vadd.xlane.f32.xlu0 %v2016
    %v2018 = vpop.xlane.xlu0 %2017
    %v2019 = vsel %vm222, %v2002, 0.0
    %2020 = vadd.xlane.f32.xlu0 %v2019
    %v2021 = vpop.xlane.xlu0 %2020
    %v2022 = vsel %vm222, %v2004, 0.0
    %2023 = vadd.xlane.f32.xlu0 %v2022
    %v2024 = vpop.xlane.xlu0 %2023
    %v2025 = vsel %vm222, %v2006, 0.0
    %2026 = vadd.xlane.f32.xlu0 %v2025
    %v2027 = vpop.xlane.xlu0 %2026
    %v2028 = vsel %vm222, %v2008, 0.0
    %2029 = vadd.xlane.f32.xlu0 %v2028
    %v2030 = vpop.xlane.xlu0 %2029
    %v2031 = vsel %vm222, %v2010, 0.0
    %2032 = vadd.xlane.f32.xlu0 %v2031
    %v2033 = vpop.xlane.xlu0 %2032
    %v2034 = vsel %vm222, %v2012, 0.0
    %2035 = vadd.xlane.f32.xlu0 %v2034
    %v2036 = vpop.xlane.xlu0 %2035
    %v2037 = vrcp.pop %v2015
    %v2038 = vrcp.pop %v2018
    %v2039 = vrcp.pop %v2021
    %v2040 = vrcp.pop %v2024
    %v2041 = vrcp.pop %v2027
    %v2042 = vrcp.pop %v2030
    %v2043 = vrcp.pop %v2033
    %v2044 = vrcp.pop %v2036
    %v2045 = vmul.f32 %v1998, %v2037
    %v2046 = vmul.f32 %v2000, %v2038
    %v2047 = vmul.f32 %v2002, %v2039
    %v2048 = vmul.f32 %v2004, %v2040
    %v2049 = vmul.f32 %v2006, %v2041
    %v2050 = vmul.f32 %v2008, %v2042
    %v2051 = vmul.f32 %v2010, %v2043
    %v2052 = vmul.f32 %v2012, %v2044
    %v2053 = vpack.c.bf16 %v2045, %v2045
    %v2054 = vpack.c.bf16 %v2046, %v2046
    %v2055 = vpack.c.bf16 %v2047, %v2047
    %v2056 = vpack.c.bf16 %v2048, %v2048
    %v2057 = vpack.c.bf16 %v2049, %v2049
    %v2058 = vpack.c.bf16 %v2050, %v2050
    %v2059 = vpack.c.bf16 %v2051, %v2051
    %v2060 = vpack.c.bf16 %v2052, %v2052
    %2061 = vrot.lane.b32.xlu0 %v1549, 64
    %v2062 = vpop.permute.xlu0 %2061
    %v2064 = vsel %vm222, %v2053, 0
    %v2067 = vsel %vm739, %v2062, 0
    %2069 = vmatprep.subr.bf16.mxu0 0
    %2070 = vmatpush1.bf16.msra.mxu0 %v2067
    %2071 = vmatprep.subr.bf16.mxu0 0
    %2072 = vmatpush1.bf16.msra.mxu0 0
    %2073 = vmatprep.subr.bf16.mxu0 0
    %2074 = vmatpush1.bf16.msra.mxu0 0
    %2075 = vmatprep.subr.bf16.mxu0 0
    %2076 = vmatpush1.bf16.msra.mxu0 0
    %2077 = vmatprep.subr.bf16.mxu0 0
    %2078 = vmatpush1.bf16.msra.mxu0 0
    %2079 = vmatprep.subr.bf16.mxu0 0
    %2080 = vmatpush1.bf16.msra.mxu0 0
    %2081 = vmatprep.subr.bf16.mxu0 0
    %2082 = vmatpush1.bf16.msra.mxu0 0
    %2083 = vmatprep.subr.bf16.mxu0 0
    %2084 = vmatpush1.bf16.msra.mxu0 0
    %2085 = vmatprep.subr.bf16.mxu0 0
    %2086 = vmatpush1.bf16.msra.mxu0 0
    %2087 = vmatprep.subr.bf16.mxu0 0
    %2088 = vmatpush1.bf16.msra.mxu0 0
    %2089 = vmatprep.subr.bf16.mxu0 0
    %2090 = vmatpush1.bf16.msra.mxu0 0
    %2091 = vmatprep.subr.bf16.mxu0 0
    %2092 = vmatpush1.bf16.msra.mxu0 0
    %2093 = vmatprep.subr.bf16.mxu0 0
    %2094 = vmatpush1.bf16.msra.mxu0 0
    %2095 = vmatprep.subr.bf16.mxu0 0
    %2096 = vmatpush1.bf16.msra.mxu0 0
    %2097 = vmatprep.subr.bf16.mxu0 0
    %2098 = vmatpush1.bf16.msra.mxu0 0
    %2099 = vmatprep.subr.bf16.mxu0 0
    %2100 = vmatpush1.bf16.msra.mxu0 0
    %2101 = vmatprep.mubr.bf16.mxu0 0
    %2102 = vmatmul.mubr.bf16.gmra.mrb[0].mxu0 %v2064
    %v2103 = vpop.f32.mrb[0].mxu0
    %v2104 = vadd.f32 0.0, %v2103
    %v2105 = vpop.f32.mrb[0].mxu0
    %v2106 = vpop.f32.mrb[0].mxu0
    %v2107 = vpop.f32.mrb[0].mxu0
    %2108 = vdwg.mxu0
    %2109 = vrot.lane.b32.xlu0 %v1550, 64
    %v2110 = vpop.permute.xlu0 %2109
    %v2112 = vsel %vm222, %v2054, 0
    %v2115 = vsel %vm739, %v2110, 0
    %2117 = vmatprep.subr.bf16.mxu0 0
    %2118 = vmatpush1.bf16.msra.mxu0 %v2115
    %2119 = vmatprep.subr.bf16.mxu0 0
    %2120 = vmatpush1.bf16.msra.mxu0 0
    %2121 = vmatprep.subr.bf16.mxu0 0
    %2122 = vmatpush1.bf16.msra.mxu0 0
    %2123 = vmatprep.subr.bf16.mxu0 0
    %2124 = vmatpush1.bf16.msra.mxu0 0
    %2125 = vmatprep.subr.bf16.mxu0 0
    %2126 = vmatpush1.bf16.msra.mxu0 0
    %2127 = vmatprep.subr.bf16.mxu0 0
    %2128 = vmatpush1.bf16.msra.mxu0 0
    %2129 = vmatprep.subr.bf16.mxu0 0
    %2130 = vmatpush1.bf16.msra.mxu0 0
    %2131 = vmatprep.subr.bf16.mxu0 0
    %2132 = vmatpush1.bf16.msra.mxu0 0
    %2133 = vmatprep.subr.bf16.mxu0 0
    %2134 = vmatpush1.bf16.msra.mxu0 0
    %2135 = vmatprep.subr.bf16.mxu0 0
    %2136 = vmatpush1.bf16.msra.mxu0 0
    %2137 = vmatprep.subr.bf16.mxu0 0
    %2138 = vmatpush1.bf16.msra.mxu0 0
    %2139 = vmatprep.subr.bf16.mxu0 0
    %2140 = vmatpush1.bf16.msra.mxu0 0
    %2141 = vmatprep.subr.bf16.mxu0 0
    %2142 = vmatpush1.bf16.msra.mxu0 0
    %2143 = vmatprep.subr.bf16.mxu0 0
    %2144 = vmatpush1.bf16.msra.mxu0 0
    %2145 = vmatprep.subr.bf16.mxu0 0
    %2146 = vmatpush1.bf16.msra.mxu0 0
    %2147 = vmatprep.subr.bf16.mxu0 0
    %2148 = vmatpush1.bf16.msra.mxu0 0
    %2149 = vmatprep.mubr.bf16.mxu0 0
    %2150 = vmatmul.mubr.bf16.gmra.mrb[0].mxu0 %v2112
    %v2151 = vpop.f32.mrb[0].mxu0
    %v2152 = vadd.f32 0.0, %v2151
    %v2153 = vpop.f32.mrb[0].mxu0
    %v2154 = vpop.f32.mrb[0].mxu0
    %v2155 = vpop.f32.mrb[0].mxu0
    %2156 = vdwg.mxu0
    %2157 = vrot.lane.b32.xlu0 %v1551, 64
    %v2158 = vpop.permute.xlu0 %2157
    %v2160 = vsel %vm222, %v2055, 0
    %v2163 = vsel %vm739, %v2158, 0
    %2165 = vmatprep.subr.bf16.mxu0 0
    %2166 = vmatpush1.bf16.msra.mxu0 %v2163
    %2167 = vmatprep.subr.bf16.mxu0 0
    %2168 = vmatpush1.bf16.msra.mxu0 0
    %2169 = vmatprep.subr.bf16.mxu0 0
    %2170 = vmatpush1.bf16.msra.mxu0 0
    %2171 = vmatprep.subr.bf16.mxu0 0
    %2172 = vmatpush1.bf16.msra.mxu0 0
    %2173 = vmatprep.subr.bf16.mxu0 0
    %2174 = vmatpush1.bf16.msra.mxu0 0
    %2175 = vmatprep.subr.bf16.mxu0 0
    %2176 = vmatpush1.bf16.msra.mxu0 0
    %2177 = vmatprep.subr.bf16.mxu0 0
    %2178 = vmatpush1.bf16.msra.mxu0 0
    %2179 = vmatprep.subr.bf16.mxu0 0
    %2180 = vmatpush1.bf16.msra.mxu0 0
    %2181 = vmatprep.subr.bf16.mxu0 0
    %2182 = vmatpush1.bf16.msra.mxu0 0
    %2183 = vmatprep.subr.bf16.mxu0 0
    %2184 = vmatpush1.bf16.msra.mxu0 0
    %2185 = vmatprep.subr.bf16.mxu0 0
    %2186 = vmatpush1.bf16.msra.mxu0 0
    %2187 = vmatprep.subr.bf16.mxu0 0
    %2188 = vmatpush1.bf16.msra.mxu0 0
    %2189 = vmatprep.subr.bf16.mxu0 0
    %2190 = vmatpush1.bf16.msra.mxu0 0
    %2191 = vmatprep.subr.bf16.mxu0 0
    %2192 = vmatpush1.bf16.msra.mxu0 0
    %2193 = vmatprep.subr.bf16.mxu0 0
    %2194 = vmatpush1.bf16.msra.mxu0 0
    %2195 = vmatprep.subr.bf16.mxu0 0
    %2196 = vmatpush1.bf16.msra.mxu0 0
    %2197 = vmatprep.mubr.bf16.mxu0 0
    %2198 = vmatmul.mubr.bf16.gmra.mrb[0].mxu0 %v2160
    %v2199 = vpop.f32.mrb[0].mxu0
    %v2200 = vadd.f32 0.0, %v2199
    %v2201 = vpop.f32.mrb[0].mxu0
    %v2202 = vpop.f32.mrb[0].mxu0
    %v2203 = vpop.f32.mrb[0].mxu0
    %2204 = vdwg.mxu0
    %2205 = vrot.lane.b32.xlu0 %v1552, 64
    %v2206 = vpop.permute.xlu0 %2205
    %v2208 = vsel %vm222, %v2056, 0
    %v2211 = vsel %vm739, %v2206, 0
    %2213 = vmatprep.subr.bf16.mxu0 0
    %2214 = vmatpush1.bf16.msra.mxu0 %v2211
    %2215 = vmatprep.subr.bf16.mxu0 0
    %2216 = vmatpush1.bf16.msra.mxu0 0
    %2217 = vmatprep.subr.bf16.mxu0 0
    %2218 = vmatpush1.bf16.msra.mxu0 0
    %2219 = vmatprep.subr.bf16.mxu0 0
    %2220 = vmatpush1.bf16.msra.mxu0 0
    %2221 = vmatprep.subr.bf16.mxu0 0
    %2222 = vmatpush1.bf16.msra.mxu0 0
    %2223 = vmatprep.subr.bf16.mxu0 0
    %2224 = vmatpush1.bf16.msra.mxu0 0
    %2225 = vmatprep.subr.bf16.mxu0 0
    %2226 = vmatpush1.bf16.msra.mxu0 0
    %2227 = vmatprep.subr.bf16.mxu0 0
    %2228 = vmatpush1.bf16.msra.mxu0 0
    %2229 = vmatprep.subr.bf16.mxu0 0
    %2230 = vmatpush1.bf16.msra.mxu0 0
    %2231 = vmatprep.subr.bf16.mxu0 0
    %2232 = vmatpush1.bf16.msra.mxu0 0
    %2233 = vmatprep.subr.bf16.mxu0 0
    %2234 = vmatpush1.bf16.msra.mxu0 0
    %2235 = vmatprep.subr.bf16.mxu0 0
    %2236 = vmatpush1.bf16.msra.mxu0 0
    %2237 = vmatprep.subr.bf16.mxu0 0
    %2238 = vmatpush1.bf16.msra.mxu0 0
    %2239 = vmatprep.subr.bf16.mxu0 0
    %2240 = vmatpush1.bf16.msra.mxu0 0
    %2241 = vmatprep.subr.bf16.mxu0 0
    %2242 = vmatpush1.bf16.msra.mxu0 0
    %2243 = vmatprep.subr.bf16.mxu0 0
    %2244 = vmatpush1.bf16.msra.mxu0 0
    %2245 = vmatprep.mubr.bf16.mxu0 0
    %2246 = vmatmul.mubr.bf16.gmra.mrb[0].mxu0 %v2208
    %v2247 = vpop.f32.mrb[0].mxu0
    %v2248 = vadd.f32 0.0, %v2247
    %v2249 = vpop.f32.mrb[0].mxu0
    %v2250 = vpop.f32.mrb[0].mxu0
    %v2251 = vpop.f32.mrb[0].mxu0
    %2252 = vdwg.mxu0
    %2253 = vrot.lane.b32.xlu0 %v1553, 64
    %v2254 = vpop.permute.xlu0 %2253
    %v2256 = vsel %vm222, %v2057, 0
    %v2259 = vsel %vm739, %v2254, 0
    %2261 = vmatprep.subr.bf16.mxu0 0
    %2262 = vmatpush1.bf16.msra.mxu0 %v2259
    %2263 = vmatprep.subr.bf16.mxu0 0
    %2264 = vmatpush1.bf16.msra.mxu0 0
    %2265 = vmatprep.subr.bf16.mxu0 0
    %2266 = vmatpush1.bf16.msra.mxu0 0
    %2267 = vmatprep.subr.bf16.mxu0 0
    %2268 = vmatpush1.bf16.msra.mxu0 0
    %2269 = vmatprep.subr.bf16.mxu0 0
    %2270 = vmatpush1.bf16.msra.mxu0 0
    %2271 = vmatprep.subr.bf16.mxu0 0
    %2272 = vmatpush1.bf16.msra.mxu0 0
    %2273 = vmatprep.subr.bf16.mxu0 0
    %2274 = vmatpush1.bf16.msra.mxu0 0
    %2275 = vmatprep.subr.bf16.mxu0 0
    %2276 = vmatpush1.bf16.msra.mxu0 0
    %2277 = vmatprep.subr.bf16.mxu0 0
    %2278 = vmatpush1.bf16.msra.mxu0 0
    %2279 = vmatprep.subr.bf16.mxu0 0
    %2280 = vmatpush1.bf16.msra.mxu0 0
    %2281 = vmatprep.subr.bf16.mxu0 0
    %2282 = vmatpush1.bf16.msra.mxu0 0
    %2283 = vmatprep.subr.bf16.mxu0 0
    %2284 = vmatpush1.bf16.msra.mxu0 0
    %2285 = vmatprep.subr.bf16.mxu0 0
    %2286 = vmatpush1.bf16.msra.mxu0 0
    %2287 = vmatprep.subr.bf16.mxu0 0
    %2288 = vmatpush1.bf16.msra.mxu0 0
    %2289 = vmatprep.subr.bf16.mxu0 0
    %2290 = vmatpush1.bf16.msra.mxu0 0
    %2291 = vmatprep.subr.bf16.mxu0 0
    %2292 = vmatpush1.bf16.msra.mxu0 0
    %2293 = vmatprep.mubr.bf16.mxu0 0
    %2294 = vmatmul.mubr.bf16.gmra.mrb[0].mxu0 %v2256
    %v2295 = vpop.f32.mrb[0].mxu0
    %v2296 = vadd.f32 0.0, %v2295
    %v2297 = vpop.f32.mrb[0].mxu0
    %v2298 = vpop.f32.mrb[0].mxu0
    %v2299 = vpop.f32.mrb[0].mxu0
    %2300 = vdwg.mxu0
    %2301 = vrot.lane.b32.xlu0 %v1554, 64
    %v2302 = vpop.permute.xlu0 %2301
    %v2304 = vsel %vm222, %v2058, 0
    %v2307 = vsel %vm739, %v2302, 0
    %2309 = vmatprep.subr.bf16.mxu0 0
    %2310 = vmatpush1.bf16.msra.mxu0 %v2307
    %2311 = vmatprep.subr.bf16.mxu0 0
    %2312 = vmatpush1.bf16.msra.mxu0 0
    %2313 = vmatprep.subr.bf16.mxu0 0
    %2314 = vmatpush1.bf16.msra.mxu0 0
    %2315 = vmatprep.subr.bf16.mxu0 0
    %2316 = vmatpush1.bf16.msra.mxu0 0
    %2317 = vmatprep.subr.bf16.mxu0 0
    %2318 = vmatpush1.bf16.msra.mxu0 0
    %2319 = vmatprep.subr.bf16.mxu0 0
    %2320 = vmatpush1.bf16.msra.mxu0 0
    %2321 = vmatprep.subr.bf16.mxu0 0
    %2322 = vmatpush1.bf16.msra.mxu0 0
    %2323 = vmatprep.subr.bf16.mxu0 0
    %2324 = vmatpush1.bf16.msra.mxu0 0
    %2325 = vmatprep.subr.bf16.mxu0 0
    %2326 = vmatpush1.bf16.msra.mxu0 0
    %2327 = vmatprep.subr.bf16.mxu0 0
    %2328 = vmatpush1.bf16.msra.mxu0 0
    %2329 = vmatprep.subr.bf16.mxu0 0
    %2330 = vmatpush1.bf16.msra.mxu0 0
    %2331 = vmatprep.subr.bf16.mxu0 0
    %2332 = vmatpush1.bf16.msra.mxu0 0
    %2333 = vmatprep.subr.bf16.mxu0 0
    %2334 = vmatpush1.bf16.msra.mxu0 0
    %2335 = vmatprep.subr.bf16.mxu0 0
    %2336 = vmatpush1.bf16.msra.mxu0 0
    %2337 = vmatprep.subr.bf16.mxu0 0
    %2338 = vmatpush1.bf16.msra.mxu0 0
    %2339 = vmatprep.subr.bf16.mxu0 0
    %2340 = vmatpush1.bf16.msra.mxu0 0
    %2341 = vmatprep.mubr.bf16.mxu0 0
    %2342 = vmatmul.mubr.bf16.gmra.mrb[0].mxu0 %v2304
    %v2343 = vpop.f32.mrb[0].mxu0
    %v2344 = vadd.f32 0.0, %v2343
    %v2345 = vpop.f32.mrb[0].mxu0
    %v2346 = vpop.f32.mrb[0].mxu0
    %v2347 = vpop.f32.mrb[0].mxu0
    %2348 = vdwg.mxu0
    %2349 = vrot.lane.b32.xlu0 %v1555, 64
    %v2350 = vpop.permute.xlu0 %2349
    %v2352 = vsel %vm222, %v2059, 0
    %v2355 = vsel %vm739, %v2350, 0
    %2357 = vmatprep.subr.bf16.mxu0 0
    %2358 = vmatpush1.bf16.msra.mxu0 %v2355
    %2359 = vmatprep.subr.bf16.mxu0 0
    %2360 = vmatpush1.bf16.msra.mxu0 0
    %2361 = vmatprep.subr.bf16.mxu0 0
    %2362 = vmatpush1.bf16.msra.mxu0 0
    %2363 = vmatprep.subr.bf16.mxu0 0
    %2364 = vmatpush1.bf16.msra.mxu0 0
    %2365 = vmatprep.subr.bf16.mxu0 0
    %2366 = vmatpush1.bf16.msra.mxu0 0
    %2367 = vmatprep.subr.bf16.mxu0 0
    %2368 = vmatpush1.bf16.msra.mxu0 0
    %2369 = vmatprep.subr.bf16.mxu0 0
    %2370 = vmatpush1.bf16.msra.mxu0 0
    %2371 = vmatprep.subr.bf16.mxu0 0
    %2372 = vmatpush1.bf16.msra.mxu0 0
    %2373 = vmatprep.subr.bf16.mxu0 0
    %2374 = vmatpush1.bf16.msra.mxu0 0
    %2375 = vmatprep.subr.bf16.mxu0 0
    %2376 = vmatpush1.bf16.msra.mxu0 0
    %2377 = vmatprep.subr.bf16.mxu0 0
    %2378 = vmatpush1.bf16.msra.mxu0 0
    %2379 = vmatprep.subr.bf16.mxu0 0
    %2380 = vmatpush1.bf16.msra.mxu0 0
    %2381 = vmatprep.subr.bf16.mxu0 0
    %2382 = vmatpush1.bf16.msra.mxu0 0
    %2383 = vmatprep.subr.bf16.mxu0 0
    %2384 = vmatpush1.bf16.msra.mxu0 0
    %2385 = vmatprep.subr.bf16.mxu0 0
    %2386 = vmatpush1.bf16.msra.mxu0 0
    %2387 = vmatprep.subr.bf16.mxu0 0
    %2388 = vmatpush1.bf16.msra.mxu0 0
    %2389 = vmatprep.mubr.bf16.mxu0 0
    %2390 = vmatmul.mubr.bf16.gmra.mrb[0].mxu0 %v2352
    %v2391 = vpop.f32.mrb[0].mxu0
    %v2392 = vadd.f32 0.0, %v2391
    %v2393 = vpop.f32.mrb[0].mxu0
    %v2394 = vpop.f32.mrb[0].mxu0
    %v2395 = vpop.f32.mrb[0].mxu0
    %2396 = vdwg.mxu0
    %2397 = vrot.lane.b32.xlu0 %v1556, 64
    %v2398 = vpop.permute.xlu0 %2397
    %v2400 = vsel %vm222, %v2060, 0
    %v2403 = vsel %vm739, %v2398, 0
    %2405 = vmatprep.subr.bf16.mxu0 0
    %2406 = vmatpush1.bf16.msra.mxu0 %v2403
    %2407 = vmatprep.subr.bf16.mxu0 0
    %2408 = vmatpush1.bf16.msra.mxu0 0
    %2409 = vmatprep.subr.bf16.mxu0 0
    %2410 = vmatpush1.bf16.msra.mxu0 0
    %2411 = vmatprep.subr.bf16.mxu0 0
    %2412 = vmatpush1.bf16.msra.mxu0 0
    %2413 = vmatprep.subr.bf16.mxu0 0
    %2414 = vmatpush1.bf16.msra.mxu0 0
    %2415 = vmatprep.subr.bf16.mxu0 0
    %2416 = vmatpush1.bf16.msra.mxu0 0
    %2417 = vmatprep.subr.bf16.mxu0 0
    %2418 = vmatpush1.bf16.msra.mxu0 0
    %2419 = vmatprep.subr.bf16.mxu0 0
    %2420 = vmatpush1.bf16.msra.mxu0 0
    %2421 = vmatprep.subr.bf16.mxu0 0
    %2422 = vmatpush1.bf16.msra.mxu0 0
    %2423 = vmatprep.subr.bf16.mxu0 0
    %2424 = vmatpush1.bf16.msra.mxu0 0
    %2425 = vmatprep.subr.bf16.mxu0 0
    %2426 = vmatpush1.bf16.msra.mxu0 0
    %2427 = vmatprep.subr.bf16.mxu0 0
    %2428 = vmatpush1.bf16.msra.mxu0 0
    %2429 = vmatprep.subr.bf16.mxu0 0
    %2430 = vmatpush1.bf16.msra.mxu0 0
    %2431 = vmatprep.subr.bf16.mxu0 0
    %2432 = vmatpush1.bf16.msra.mxu0 0
    %2433 = vmatprep.subr.bf16.mxu0 0
    %2434 = vmatpush1.bf16.msra.mxu0 0
    %2435 = vmatprep.subr.bf16.mxu0 0
    %2436 = vmatpush1.bf16.msra.mxu0 0
    %2437 = vmatprep.mubr.bf16.mxu0 0
    %2438 = vmatmul.mubr.bf16.gmra.mrb[0].mxu0 %v2400
    %v2439 = vpop.f32.mrb[0].mxu0
    %v2440 = vadd.f32 0.0, %v2439
    %v2441 = vpop.f32.mrb[0].mxu0
    %v2442 = vpop.f32.mrb[0].mxu0
    %v2443 = vpop.f32.mrb[0].mxu0
    %2444 = vdwg.mxu0
    %2447 = vrot.lane.b32.xlu0 %v2200, 8
    %v2448 = vpop.permute.xlu0 %2447
    %2449 = vrot.lane.b32.xlu0 %v2248, 8
    %v2450 = vpop.permute.xlu0 %2449
    %2455 = vrot.lane.b32.xlu0 %v2296, 16
    %v2456 = vpop.permute.xlu0 %2455
    %2457 = vrot.lane.b32.xlu0 %v2344, 16
    %v2458 = vpop.permute.xlu0 %2457
    %2463 = vrot.lane.b32.xlu0 %v2392, 24
    %v2464 = vpop.permute.xlu0 %2463
    %2465 = vrot.lane.b32.xlu0 %v2440, 24
    %v2466 = vpop.permute.xlu0 %2465
    %v2469 = vsel %vm222, %v2104, %v2448
    %v2470 = vsel %vm222, %v2152, %v2450
    %v2471 = vsel %vm1145, %v2469, %v2456
    %v2472 = vsel %vm1145, %v2470, %v2458
    %v2473 = vsel %vm1148, %v2471, %v2464
    %v2474 = vsel %vm1148, %v2472, %v2466
    %v2475 = vpack.c.bf16 %v2474, %v2473
    %s2476 = scalar_lea.vmem %s3, 16
    %v2477 = vld [vmem:[%s2476] sm:$0xf]
    %v2478 = vld [vmem:[%s2476 + $0x4] sm:$0xf]
    %v2479 = vld [vmem:[%s2476 + $0x8] sm:$0xf]
    %v2480 = vld [vmem:[%s2476 + $0xc] sm:$0xf]
    %v2481 = vlaneseq
    %v2482 = vshrl.u32 %v2481, 7
    %v2483 = vsub.s32 1, %v2482
    %v2484 = vrot.slane %v1462, %v2483
    %v2489 = vunpack.c.l.b16 %v2477
    %v2490 = vunpack.c.l.b16 %v2478
    %v2491 = vunpack.c.l.b16 %v2479
    %v2492 = vunpack.c.l.b16 %v2480
    %v2493 = vpack.c.b16 %v2490, %v2489
    %v2494 = vpack.c.b16 %v2492, %v2491
    %v2498 = vsel %vm85, %v2475, 0
    %2500 = vmatprep.subr.bf16.mxu0 0
    %2501 = vmatpush1.bf16.msra.mxu0 %v2493
    %2502 = vmatprep.subr.bf16.mxu0 0
    %2503 = vmatpush1.bf16.msra.mxu0 %v2494
    %2504 = vmatprep.subr.bf16.mxu0 0
    %2505 = vmatpush1.bf16.msra.mxu0 0
    %2506 = vmatprep.subr.bf16.mxu0 0
    %2507 = vmatpush1.bf16.msra.mxu0 0
    %2508 = vmatprep.subr.bf16.mxu0 0
    %2509 = vmatpush1.bf16.msra.mxu0 0
    %2510 = vmatprep.subr.bf16.mxu0 0
    %2511 = vmatpush1.bf16.msra.mxu0 0
    %2512 = vmatprep.subr.bf16.mxu0 0
    %2513 = vmatpush1.bf16.msra.mxu0 0
    %2514 = vmatprep.subr.bf16.mxu0 0
    %2515 = vmatpush1.bf16.msra.mxu0 0
    %2516 = vmatprep.subr.bf16.mxu0 0
    %2517 = vmatpush1.bf16.msra.mxu0 0
    %2518 = vmatprep.subr.bf16.mxu0 0
    %2519 = vmatpush1.bf16.msra.mxu0 0
    %2520 = vmatprep.subr.bf16.mxu0 0
    %2521 = vmatpush1.bf16.msra.mxu0 0
    %2522 = vmatprep.subr.bf16.mxu0 0
    %2523 = vmatpush1.bf16.msra.mxu0 0
    %2524 = vmatprep.subr.bf16.mxu0 0
    %2525 = vmatpush1.bf16.msra.mxu0 0
    %2526 = vmatprep.subr.bf16.mxu0 0
    %2527 = vmatpush1.bf16.msra.mxu0 0
    %2528 = vmatprep.subr.bf16.mxu0 0
    %2529 = vmatpush1.bf16.msra.mxu0 0
    %2530 = vmatprep.subr.bf16.mxu0 0
    %2531 = vmatpush1.bf16.msra.mxu0 0
    %2532 = vmatprep.mubr.bf16.mxu0 0
    %2533 = vmatmul.mubr.bf16.gmra.mrb[0].mxu0 %v2498
    %v2534 = vpop.f32.mrb[0].mxu0
    %v2535 = vadd.f32 %v2484, %v2534
    %v2536 = vpop.f32.mrb[0].mxu0
    %v2537 = vpop.f32.mrb[0].mxu0
    %v2538 = vadd.f32 %v2484, %v2537
    %v2539 = vpop.f32.mrb[0].mxu0
    %2540 = vdwg.mxu0
    %v2541 = vadd.f32 %v1459, %v2535
    %v2542 = vadd.f32 %v1460, %v2538
    %v2543 = vsel %vm85, %v2541, 0.0
    %2544 = vadd.xlane.f32.xlu0 %v2543
    %v2545 = vpop.xlane.xlu0 %2544
    %v2546 = vsel %vm85, %v2542, 0.0
    %2547 = vadd.xlane.f32.xlu0 %v2546
    %v2548 = vpop.xlane.xlu0 %2547
    %v2549 = vmul.f32 %v2545, %v92
    %v2550 = vmul.f32 %v2548, %v92
    %v2551 = vsub.f32 %v2541, %v2549
    %v2552 = vsub.f32 %v2542, %v2550
    %v2553 = vmul.f32 %v2551, %v2551
    %v2554 = vmul.f32 %v2552, %v2552
    %v2555 = vsel %vm85, %v2553, 0.0
    %2556 = vadd.xlane.f32.xlu0 %v2555
    %v2557 = vpop.xlane.xlu0 %2556
    %v2558 = vsel %vm85, %v2554, 0.0
    %2559 = vadd.xlane.f32.xlu0 %v2558
    %v2560 = vpop.xlane.xlu0 %2559
    %v2561 = vmul.f32 %v2557, %v92
    %v2562 = vmul.f32 %v2560, %v92
    %v2563 = vadd.f32 %v2561, 1e-12
    %v2564 = vadd.f32 %v2562, 1e-12
    %v2565 = vrsqrt.pop %v2563
    %v2566 = vrsqrt.pop %v2564
    %v2567 = vmul.f32 %v2551, %v2565
    %v2568 = vmul.f32 %v2552, %v2566
    %v2569 = vlaneseq
    %v2570 = vshrl.u32 %v2569, 7
    %v2571 = vsub.s32 2, %v2570
    %v2572 = vrot.slane %v1462, %v2571
    %v2573 = vmul.f32 %v2567, %v2572
    %v2574 = vmul.f32 %v2568, %v2572
    %v2575 = vlaneseq
    %v2576 = vshrl.u32 %v2575, 7
    %v2577 = vsub.s32 3, %v2576
    %v2578 = vrot.slane %v1462, %v2577
    %v2579 = vadd.f32 %v2573, %v2578
    %v2580 = vadd.f32 %v2574, %v2578
    %v2581 = vpack.c.bf16 %v2580, %v2579
    %s2582 = scalar_lea.vmem %s4, 16
    %v2583 = vld [vmem:[%s2582] sm:$0xf]
    %v2584 = vld [vmem:[%s2582 + $0x4] sm:$0xf]
    %v2585 = vld [vmem:[%s2582 + $0x8] sm:$0xf]
    %v2586 = vld [vmem:[%s2582 + $0xc] sm:$0xf]
    %v2587 = vlaneseq
    %v2588 = vshrl.u32 %v2587, 7
    %v2589 = vsub.s32 4, %v2588
    %v2590 = vrot.slane %v1462, %v2589
    %v2595 = vunpack.c.l.b16 %v2583
    %v2596 = vunpack.c.l.b16 %v2584
    %v2597 = vunpack.c.l.b16 %v2585
    %v2598 = vunpack.c.l.b16 %v2586
    %v2599 = vpack.c.b16 %v2596, %v2595
    %v2600 = vpack.c.b16 %v2598, %v2597
    %v2604 = vsel %vm85, %v2581, 0
    %2606 = vmatprep.subr.bf16.mxu0 0
    %2607 = vmatpush1.bf16.msra.mxu0 %v2599
    %2608 = vmatprep.subr.bf16.mxu0 0
    %2609 = vmatpush1.bf16.msra.mxu0 %v2600
    %2610 = vmatprep.subr.bf16.mxu0 0
    %2611 = vmatpush1.bf16.msra.mxu0 0
    %2612 = vmatprep.subr.bf16.mxu0 0
    %2613 = vmatpush1.bf16.msra.mxu0 0
    %2614 = vmatprep.subr.bf16.mxu0 0
    %2615 = vmatpush1.bf16.msra.mxu0 0
    %2616 = vmatprep.subr.bf16.mxu0 0
    %2617 = vmatpush1.bf16.msra.mxu0 0
    %2618 = vmatprep.subr.bf16.mxu0 0
    %2619 = vmatpush1.bf16.msra.mxu0 0
    %2620 = vmatprep.subr.bf16.mxu0 0
    %2621 = vmatpush1.bf16.msra.mxu0 0
    %2622 = vmatprep.subr.bf16.mxu0 0
    %2623 = vmatpush1.bf16.msra.mxu0 0
    %2624 = vmatprep.subr.bf16.mxu0 0
    %2625 = vmatpush1.bf16.msra.mxu0 0
    %2626 = vmatprep.subr.bf16.mxu0 0
    %2627 = vmatpush1.bf16.msra.mxu0 0
    %2628 = vmatprep.subr.bf16.mxu0 0
    %2629 = vmatpush1.bf16.msra.mxu0 0
    %2630 = vmatprep.subr.bf16.mxu0 0
    %2631 = vmatpush1.bf16.msra.mxu0 0
    %2632 = vmatprep.subr.bf16.mxu0 0
    %2633 = vmatpush1.bf16.msra.mxu0 0
    %2634 = vmatprep.subr.bf16.mxu0 0
    %2635 = vmatpush1.bf16.msra.mxu0 0
    %2636 = vmatprep.subr.bf16.mxu0 0
    %2637 = vmatpush1.bf16.msra.mxu0 0
    %2638 = vmatprep.mubr.bf16.mxu0 0
    %2639 = vmatmul.mubr.bf16.gmra.mrb[0].mxu0 %v2604
    %v2640 = vpop.f32.mrb[0].mxu0
    %v2641 = vadd.f32 %v2590, %v2640
    %v2642 = vpop.f32.mrb[0].mxu0
    %v2643 = vpop.f32.mrb[0].mxu0
    %v2644 = vadd.f32 %v2590, %v2643
    %v2645 = vpop.f32.mrb[0].mxu0
    %2646 = vdwg.mxu0
    %v2647 = vmul.f32 %v2641, %v2641
    %v2648 = vmul.f32 %v2644, %v2644
    %v2649 = vmul.f32 %v2641, %v2647
    %v2650 = vmul.f32 %v2644, %v2648
    %v2651 = vmul.f32 %v2649, 0.044715
    %v2652 = vmul.f32 %v2650, 0.044715
    %v2653 = vadd.f32 %v2641, %v2651
    %v2654 = vadd.f32 %v2644, %v2652
    %v2655 = vmul.f32 %v2653, 0.7978846
    %v2656 = vmul.f32 %v2654, 0.7978846
    %v2657 = vtanh.pop %v2655
    %v2658 = vtanh.pop %v2656
    %v2659 = vadd.f32 %v2657, 1.0
    %v2660 = vadd.f32 %v2658, 1.0
    %v2661 = vmul.f32 %v2659, 0.5
    %v2662 = vmul.f32 %v2660, 0.5
    %v2663 = vmul.f32 %v2641, %v2661
    %v2664 = vmul.f32 %v2644, %v2662
    %v2665 = vpack.c.bf16 %v2664, %v2663
    %s2666 = scalar_lea.vmem %s5, 32
    %v2667 = vld [vmem:[%s2666] sm:$0xf]
    %v2668 = vld [vmem:[%s2666 + $0x4] sm:$0xf]
    %v2669 = vld [vmem:[%s2666 + $0x8] sm:$0xf]
    %v2670 = vld [vmem:[%s2666 + $0xc] sm:$0xf]
    %v2671 = vld [vmem:[%s2666 + $0x10] sm:$0xf]
    %v2672 = vld [vmem:[%s2666 + $0x14] sm:$0xf]
    %v2673 = vld [vmem:[%s2666 + $0x18] sm:$0xf]
    %v2674 = vld [vmem:[%s2666 + $0x1c] sm:$0xf]
    %v2675 = vlaneseq
    %v2676 = vshrl.u32 %v2675, 7
    %v2677 = vsub.s32 5, %v2676
    %v2678 = vrot.slane %v1462, %v2677
    %v2687 = vunpack.c.l.b16 %v2667
    %v2688 = vunpack.c.l.b16 %v2668
    %v2689 = vunpack.c.l.b16 %v2669
    %v2690 = vunpack.c.l.b16 %v2670
    %v2691 = vunpack.c.l.b16 %v2671
    %v2692 = vunpack.c.l.b16 %v2672
    %v2693 = vunpack.c.l.b16 %v2673
    %v2694 = vunpack.c.l.b16 %v2674
    %v2695 = vpack.c.b16 %v2688, %v2687
    %v2696 = vpack.c.b16 %v2690, %v2689
    %v2697 = vpack.c.b16 %v2692, %v2691
    %v2698 = vpack.c.b16 %v2694, %v2693
    %v2704 = vsel %vm1376, %v2665, 0
    %2706 = vmatprep.subr.bf16.mxu0 0
    %2707 = vmatpush1.bf16.msra.mxu0 %v2695
    %2708 = vmatprep.subr.bf16.mxu0 0
    %2709 = vmatpush1.bf16.msra.mxu0 %v2696
    %2710 = vmatprep.subr.bf16.mxu0 0
    %2711 = vmatpush1.bf16.msra.mxu0 %v2697
    %2712 = vmatprep.subr.bf16.mxu0 0
    %2713 = vmatpush1.bf16.msra.mxu0 %v2698
    %2714 = vmatprep.subr.bf16.mxu0 0
    %2715 = vmatpush1.bf16.msra.mxu0 0
    %2716 = vmatprep.subr.bf16.mxu0 0
    %2717 = vmatpush1.bf16.msra.mxu0 0
    %2718 = vmatprep.subr.bf16.mxu0 0
    %2719 = vmatpush1.bf16.msra.mxu0 0
    %2720 = vmatprep.subr.bf16.mxu0 0
    %2721 = vmatpush1.bf16.msra.mxu0 0
    %2722 = vmatprep.subr.bf16.mxu0 0
    %2723 = vmatpush1.bf16.msra.mxu0 0
    %2724 = vmatprep.subr.bf16.mxu0 0
    %2725 = vmatpush1.bf16.msra.mxu0 0
    %2726 = vmatprep.subr.bf16.mxu0 0
    %2727 = vmatpush1.bf16.msra.mxu0 0
    %2728 = vmatprep.subr.bf16.mxu0 0
    %2729 = vmatpush1.bf16.msra.mxu0 0
    %2730 = vmatprep.subr.bf16.mxu0 0
    %2731 = vmatpush1.bf16.msra.mxu0 0
    %2732 = vmatprep.subr.bf16.mxu0 0
    %2733 = vmatpush1.bf16.msra.mxu0 0
    %2734 = vmatprep.subr.bf16.mxu0 0
    %2735 = vmatpush1.bf16.msra.mxu0 0
    %2736 = vmatprep.subr.bf16.mxu0 0
    %2737 = vmatpush1.bf16.msra.mxu0 0
    %2738 = vmatprep.mubr.bf16.mxu0 0
    %2739 = vmatmul.mubr.bf16.gmra.mrb[0].mxu0 %v2704
    %v2740 = vpop.f32.mrb[0].mxu0
    %v2741 = vadd.f32 %v2678, %v2740
    %v2742 = vpop.f32.mrb[0].mxu0
    %v2743 = vpop.f32.mrb[0].mxu0
    %v2744 = vadd.f32 %v2678, %v2743
    %v2745 = vpop.f32.mrb[0].mxu0
    %2746 = vdwg.mxu0
    %v2747 = vadd.f32 %v2579, %v2741
    %v2748 = vadd.f32 %v2580, %v2744
    %v2749 = vsel %vm85, %v2747, 0.0
    %2750 = vadd.xlane.f32.xlu0 %v2749
    %v2751 = vpop.xlane.xlu0 %2750
    %v2752 = vsel %vm85, %v2748, 0.0
    %2753 = vadd.xlane.f32.xlu0 %v2752
    %v2754 = vpop.xlane.xlu0 %2753
    %v2755 = vmul.f32 %v2751, %v92
    %v2756 = vmul.f32 %v2754, %v92
    %v2757 = vsub.f32 %v2747, %v2755
    %v2758 = vsub.f32 %v2748, %v2756
    %v2759 = vmul.f32 %v2757, %v2757
    %v2760 = vmul.f32 %v2758, %v2758
    %v2761 = vsel %vm85, %v2759, 0.0
    %2762 = vadd.xlane.f32.xlu0 %v2761
    %v2763 = vpop.xlane.xlu0 %2762
    %v2764 = vsel %vm85, %v2760, 0.0
    %2765 = vadd.xlane.f32.xlu0 %v2764
    %v2766 = vpop.xlane.xlu0 %2765
    %v2767 = vmul.f32 %v2763, %v92
    %v2768 = vmul.f32 %v2766, %v92
    %v2769 = vadd.f32 %v2767, 1e-12
    %v2770 = vadd.f32 %v2768, 1e-12
    %v2771 = vrsqrt.pop %v2769
    %v2772 = vrsqrt.pop %v2770
    %v2773 = vmul.f32 %v2757, %v2771
    %v2774 = vmul.f32 %v2758, %v2772
    %v2775 = vlaneseq
    %v2776 = vshrl.u32 %v2775, 7
    %v2777 = vsub.s32 6, %v2776
    %v2778 = vrot.slane %v1462, %v2777
    %v2779 = vmul.f32 %v2773, %v2778
    %v2780 = vmul.f32 %v2774, %v2778
    %v2781 = vlaneseq
    %v2782 = vshrl.u32 %v2781, 7
    %v2783 = vsub.s32 7, %v2782
    %v2784 = vrot.slane %v1462, %v2783
    %v2785 = vadd.f32 %v2779, %v2784
    %v2786 = vadd.f32 %v2780, %v2784
    %2787 = vst.msk [vmem:[#allocation7] sm:$0xff] %vm85, %v2785
    %2788 = vst.msk [vmem:[#allocation7 + $0x8] sm:$0xff] %vm85, %v2786
    %v2789 = vlaneseq
    %v2790 = vshrl.u32 %v2789, 7
    %v2791 = vsub.s32 0, %v2790
    %v2792 = vrot.slane %v57, %v2791
    %2794 = vbcast.lane.b32.xlu0 %v2792, 256
    %v2795 = vpop.permute.xlu0 %2794
    %v2796 = vlaneseq
    %v2797 = vshrl.u32 %v2796, 7
    %v2798 = vsub.s32 1, %v2797
    %v2799 = vrot.slane %v57, %v2798
    %2801 = vbcast.lane.b32.xlu0 %v2799, 256
    %v2802 = vpop.permute.xlu0 %2801
    %v2803 = vmul.f32 %v2785, %v2795
    %v2804 = vmul.f32 %v2786, %v2802
    %v2805 = vsel %vm85, %v2803, 0.0
    %v2806 = vrot.slane %v2805, 4
    %v2807 = vadd.f32 %v2805, %v2806
    %v2808 = vrot.slane %v2807, 2
    %v2809 = vadd.f32 %v2807, %v2808
    %v2810 = vrot.slane %v2809, 1
    %v2811 = vadd.f32 %v2809, %v2810
    %v2812 = vsel %vm85, %v2804, 0.0
    %v2813 = vrot.slane %v2812, 4
    %v2814 = vadd.f32 %v2812, %v2813
    %v2815 = vrot.slane %v2814, 2
    %v2816 = vadd.f32 %v2814, %v2815
    %v2817 = vrot.slane %v2816, 1
    %v2818 = vadd.f32 %v2816, %v2817
    %vm2819 = vcmask 58368
    %v2820 = vsel %vm2819, %v57, 0.0
    %2821 = vadd.xlane.f32.xlu0 %v2820
    %v2822 = vpop.xlane.xlu0 %2821
    %v2823 = vmax.f32 %v2822, 1e-09
    %v2825 = vrot.slane %v2823, 1
    %v2828 = vrcp.pop %v2823
    %v2829 = vmul.f32 %v2811, %v2828
    %v2830 = vrcp.pop %v2825
    %v2831 = vmul.f32 %v2818, %v2830
    %v2834 = vrot.slane %v2831, 7
    %vm2835 = vcmask 1041409
    %v2836 = vsel %vm2835, %v2834, %v2829
    %vm2838 = vcmask 254976
    %2839 = vst.msk [vmem:[#allocation8] sm:$0x3] %vm2838, %v2836
    // Predicated region
    $region38: #{tpu_custom_call.1} parent=1 // pred_check
      _
    $region39: #{tpu_custom_call.1} parent=1 // pred_check_branch
      %2841 = sbr.rel (0) target = $region41
    $region40: #{tpu_custom_call.1} parent=1 // pred_region
      %s2843 = ssub.s32 256, 256
      %2844 = vsyncadd [#allocation4], %s2843
      %s2845 = sshll.u32 [#allocation7], 4
      %s2846 = int_to_ptr.vmem [resolvable:$true] %s2845
      %2851 = dma.vmem_to_hbm [thread:$0]  %s2846, 256, %s7, [#allocation4], 128, 128, 8
    $region41: #{tpu_custom_call.1} parent=1 // pred_fallthru
      _
    // Predicated region
    $region42: #{tpu_custom_call.1} parent=1 // pred_check
      _
    $region43: #{tpu_custom_call.1} parent=1 // pred_check_branch
      %2853 = sbr.rel (0) target = $region45
    $region44: #{tpu_custom_call.1} parent=1 // pred_region
      %s2855 = ssub.s32 32, 32
      %2856 = vsyncadd [#allocation9], %s2855
      %s2858 = sshll.u32 [#allocation8], 4
      %s2859 = int_to_ptr.vmem [resolvable:$true] %s2858
      %2861 = dma.vmem_to_hbm [thread:$0]  %s2859, 32, %s8, [#allocation9]
    $region45: #{tpu_custom_call.1} parent=1 // pred_fallthru
      _
    // Predicated region
    $region46: #{tpu_custom_call.1} parent=1 // pred_check
      _
    $region47: #{tpu_custom_call.1} parent=1 // pred_check_branch
      %2863 = sbr.rel (0) target = $region49
    $region48: #{tpu_custom_call.1} parent=1 // pred_region
      %2864 = dma.done [#allocation4], 256
    $region49: #{tpu_custom_call.1} parent=1 // pred_fallthru
      _
    // Predicated region
    $region50: #{tpu_custom_call.1} parent=1 // pred_check
      _
    $region51: #{tpu_custom_call.1} parent=1 // pred_check_branch
      %2866 = sbr.rel (0) target = $region53
    $region52: #{tpu_custom_call.1} parent=1 // pred_region
      %2867 = dma.done [#allocation9], 32
    $region53: #{tpu_custom_call.1} parent=1 // pred_fallthru
      _
    %2868 = vsyncpa [#allocation3], 1
    %2869 = vsyncpa [#allocation6], 1
    %2870 = vsyncpa [#allocation4], 1
    %2871 = vsyncpa [#allocation9], 1

</llo_original>
